<compile_context>
chip_gen: v6e
topology: v6e:2x2x1
jax: 0.10.0
libtpu: 0.0.40
codegen_flags: <defaults>
</compile_context>

<pallas_src>
import functools

import jax
import jax.numpy as jnp
from jax.experimental import pallas as pl
from jax.experimental.pallas import tpu as pltpu


# ----------------------------- in-kernel helpers ---------------------------

def _ln(x, g, b, eps=1e-5):
    """LayerNorm over the last (lane) axis; x f32, g/b (1, W) f32."""
    mu = jnp.mean(x, axis=-1, keepdims=True)
    var = jnp.mean(jnp.square(x - mu), axis=-1, keepdims=True)
    return (x - mu) * jax.lax.rsqrt(var + eps) * g + b


def _block(x, ln1g, ln1b, wqkv, bqkv, wo, bo, ln2g, ln2b, w1, b1, w2, b2,
           amask, *, width):
    """Pre-LN transformer block on the flattened [B*S, W] residual stream."""
    f32, bf16 = jnp.float32, jnp.bfloat16

    # ---- attention: ln1 -> fused QKV -> block-diag softmax(QK^T)V -> out proj
    h = _ln(x, ln1g[...], ln1b[...])
    qkv = jnp.dot(h.astype(bf16), wqkv[...],
                  preferred_element_type=f32) + bqkv[...]          # [BS, 3W]
    q = qkv[:, :width]                 # 1/sqrt(W) scale pre-folded into wqkv
    k = qkv[:, width:2 * width]
    v = qkv[:, 2 * width:]
    # All (image, token) row pairs in ONE MXU pass; cross-batch pairs get the
    # additive -1e30 mask so the softmax is exactly per-image/per-sequence.
    s = jax.lax.dot_general(q.astype(bf16), k.astype(bf16),
                            (((1,), (1,)), ((), ())),
                            preferred_element_type=f32)            # [BS, BS]
    s = s + amask[...]
    s = s - jnp.max(s, axis=-1, keepdims=True)
    p = jnp.exp(s)
    p = p / jnp.sum(p, axis=-1, keepdims=True)     # exact divide (torch parity)
    a = jnp.dot(p.astype(bf16), v.astype(bf16),
                preferred_element_type=f32)                        # [BS, W]
    a = jnp.dot(a.astype(bf16), wo[...], preferred_element_type=f32) + bo[...]
    x = x + a

    # ---- MLP: ln2 -> gelu MLP -> residual
    h = _ln(x, ln2g[...], ln2b[...])
    m = jnp.dot(h.astype(bf16), w1[...], preferred_element_type=f32) + b1[...]
    # TODO(synk): PyTorch nn.GELU defaults to exact erf; tanh approx kept for
    # guaranteed Mosaic lowering (OpenCLIP QuickGELU variants differ anyway).
    m = jax.nn.gelu(m, approximate=True)
    m = jnp.dot(m.astype(bf16), w2[...], preferred_element_type=f32) + b2[...]
    return x + m


def _head(pooled, g, b, w, *, normalize):
    """LayerNorm -> (no-bias) projection -> optional L2 normalize (all f32 acc)."""
    f = jnp.dot(_ln(pooled, g, b).astype(jnp.bfloat16), w,
                preferred_element_type=jnp.float32)                # [B, E]
    if normalize:   # F.normalize: x / max(||x||, 1e-12)
        inv = jax.lax.rsqrt(
            jnp.maximum(jnp.sum(f * f, axis=-1, keepdims=True), 1e-24))
        f = f * inv
    return f


# ----------------------------- Pallas kernels ------------------------------

def _image_tower_kernel(xp_ref, wemb_ref, prefix_ref, rep_ref,
                        lnpre_g_ref, lnpre_b_ref,
                        ln1g, ln1b, wqkv, bqkv, wo, bo,
                        ln2g, ln2b, w1, b1, w2, b2,
                        lnpost_g, lnpost_b, proj_ref, pool_ref, amask_ref,
                        o_ref, *, width, normalize):
    f32 = jnp.float32
    # stem: patch-embed matmul + (cls|pos) prefix + ln_pre, on all B*S rows
    x = jnp.dot(xp_ref[...], wemb_ref[...], preferred_element_type=f32)
    # replicate the (S, W) prefix across the batch with an exact one-hot matmul
    x = x + jnp.dot(rep_ref[...], prefix_ref[...], preferred_element_type=f32)
    x = _ln(x, lnpre_g_ref[...], lnpre_b_ref[...])
    # fused transformer block (flattened batch rows)
    x = _block(x, ln1g, ln1b, wqkv, bqkv, wo, bo, ln2g, ln2b,
               w1, b1, w2, b2, amask_ref, width=width)
    # CLS pooling (one-hot rows), ln_post, projection, L2 normalize
    pooled = jnp.dot(pool_ref[...], x, preferred_element_type=f32)
    o_ref[...] = _head(pooled, lnpost_g[...], lnpost_b[...], proj_ref[...],
                       normalize=normalize).astype(o_ref.dtype)


def _text_tower_kernel(x_ref,
                       ln1g, ln1b, wqkv, bqkv, wo, bo,
                       ln2g, ln2b, w1, b1, w2, b2,
                       lnf_g, lnf_b, proj_ref, pool_ref, amask_ref,
                       o_ref, *, width, normalize):
    f32 = jnp.float32
    x = x_ref[...].astype(f32)
    x = _block(x, ln1g, ln1b, wqkv, bqkv, wo, bo, ln2g, ln2b,
               w1, b1, w2, b2, amask_ref, width=width)
    # EOT pooling (one-hot rows), ln_final, projection, L2 normalize
    # (LayerNorm is per-row, so pooling first == original ln-then-pool order)
    pooled = jnp.dot(pool_ref[...], x, preferred_element_type=f32)
    o_ref[...] = _head(pooled, lnf_g[...], lnf_b[...], proj_ref[...],
                       normalize=normalize).astype(o_ref.dtype)


def _fused_tower_call(kernel_fn, operands, out_rows, out_cols):
    """grid=(1,), everything whole-resident in VMEM (tiny shapes)."""
    full = lambda a: pl.BlockSpec(a.shape, lambda i: (0, 0))
    return pl.pallas_call(
        kernel_fn,
        grid=(1,),
        in_specs=[full(a) for a in operands],
        out_specs=pl.BlockSpec((out_rows, out_cols), lambda i: (0, 0)),
        out_shape=jax.ShapeDtypeStruct((out_rows, out_cols), jnp.bfloat16),
        compiler_params=pltpu.CompilerParams(
            dimension_semantics=("arbitrary",)),
    )(*operands)


def pallas_image_tower(xp, model, pool, amask, rep, *, normalize):
    blk = model.v_block
    W = model.conv1_w.shape[1]
    E = model.v_proj.shape[1]
    B = pool.shape[0]
    operands = [xp, model.conv1_w, model.v_prefix, rep,
                model.v_ln_pre_g, model.v_ln_pre_b,
                blk["ln1_g"], blk["ln1_b"], blk["wqkv"], blk["bqkv"],
                blk["wo"], blk["bo"], blk["ln2_g"], blk["ln2_b"],
                blk["w1"], blk["b1"], blk["w2"], blk["b2"],
                model.v_ln_post_g, model.v_ln_post_b, model.v_proj,
                pool, amask]
    kernel = functools.partial(_image_tower_kernel, width=W, normalize=normalize)
    return _fused_tower_call(kernel, operands, B, E)


def pallas_text_tower(x, model, pool, amask, *, normalize):
    blk = model.t_block
    W = model.t_proj.shape[0]
    E = model.t_proj.shape[1]
    B = pool.shape[0]
    operands = [x,
                blk["ln1_g"], blk["ln1_b"], blk["wqkv"], blk["bqkv"],
                blk["wo"], blk["bo"], blk["ln2_g"], blk["ln2_b"],
                blk["w1"], blk["b1"], blk["w2"], blk["b2"],
                model.t_ln_final_g, model.t_ln_final_b, model.t_proj,
                pool, amask]
    kernel = functools.partial(_text_tower_kernel, width=W, normalize=normalize)
    return _fused_tower_call(kernel, operands, B, E)


# --------------------------- synthetic inner CLIP --------------------------

def _init_block(key, width, mlp_ratio=4):
    keys = jax.random.split(key, 6)
    hidden = width * mlp_ratio
    scale = float(width) ** -0.5   # single-head attention scale

    def lin(k, fi, fo):
        return jax.random.normal(k, (fi, fo), jnp.float32) * 0.02

    # Fold 1/sqrt(W) into the Q columns (weight + bias) so the kernel never
    # multiplies the [BS, BS] score tile by a scalar.
    wq = lin(keys[0], width, width) * scale
    wk = lin(keys[1], width, width)
    wv = lin(keys[2], width, width)
    return {
        "ln1_g": jnp.ones((1, width), jnp.float32),
        "ln1_b": jnp.zeros((1, width), jnp.float32),
        # q|k|v folded into one lane-dense [W, 3W] bf16 weight (single MXU pass)
        "wqkv": jnp.concatenate([wq, wk, wv], axis=1).astype(jnp.bfloat16),
        "bqkv": jnp.zeros((1, 3 * width), jnp.float32),   # (Q bias ×scale too)
        "wo": lin(keys[3], width, width).astype(jnp.bfloat16),
        "bo": jnp.zeros((1, width), jnp.float32),
        "ln2_g": jnp.ones((1, width), jnp.float32),
        "ln2_b": jnp.zeros((1, width), jnp.float32),
        "w1": lin(keys[4], width, hidden).astype(jnp.bfloat16),
        "b1": jnp.zeros((1, hidden), jnp.float32),
        "w2": lin(keys[5], hidden, width).astype(jnp.bfloat16),
        "b2": jnp.zeros((1, width), jnp.float32),
    }


def _block_diag_mask(batch, seq):
    """[B*S, B*S] additive mask: 0 within an image/sequence, -1e30 across."""
    ids = jnp.repeat(jnp.arange(batch), seq)
    return jnp.where(ids[:, None] == ids[None, :], 0.0, -1e30).astype(jnp.float32)


class MiniCLIP:
    """Synthetic minimal OpenCLIP-style dual encoder (deterministic init).

    Feature widths are 128 so every Pallas out_spec is lane-dense; matmul
    weights are stored bf16, LN/bias parameters f32.
    """

    def __init__(self, key, image_size=16, patch_size=8, vision_width=128,
                 vocab_size=64, context_length=8, text_width=128, embed_dim=128):
        self.patch_size = patch_size
        n_patches = (image_size // patch_size) ** 2
        patch_dim = 3 * patch_size * patch_size
        keys = jax.random.split(key, 9)

        # Vision tower (ViT: conv patch-embed == patchify + no-bias matmul).
        self.conv1_w = (jax.random.normal(keys[0], (patch_dim, vision_width))
                        * 0.02).astype(jnp.bfloat16)
        cls = jax.random.normal(keys[1], (vision_width,)) * 0.02
        v_pos = jax.random.normal(keys[2], (n_patches + 1, vision_width)) * 0.02
        # cls token folded into the row-0 positional offset; the fused kernel
        # adds this (S, W) table (row 0's patch slot is zero-padded).
        self.v_prefix = v_pos.at[0, :].add(cls).astype(jnp.float32)
        self.v_ln_pre_g = jnp.ones((1, vision_width), jnp.float32)
        self.v_ln_pre_b = jnp.zeros((1, vision_width), jnp.float32)
        self.v_block = _init_block(keys[3], vision_width)
        self.v_ln_post_g = jnp.ones((1, vision_width), jnp.float32)
        self.v_ln_post_b = jnp.zeros((1, vision_width), jnp.float32)
        self.v_proj = (jax.random.normal(keys[4], (vision_width, embed_dim))
                       * vision_width ** -0.5).astype(jnp.bfloat16)

        # Text tower.
        self.tok_emb = jax.random.normal(keys[5], (vocab_size, text_width)) * 0.02
        self.t_pos = jax.random.normal(keys[6], (context_length, text_width)) * 0.01
        self.t_block = _init_block(keys[7], text_width)
        self.t_ln_final_g = jnp.ones((1, text_width), jnp.float32)
        self.t_ln_final_b = jnp.zeros((1, text_width), jnp.float32)
        self.t_proj = (jax.random.normal(keys[8], (text_width, embed_dim))
                       * text_width ** -0.5).astype(jnp.bfloat16)

        self.logit_scale = jnp.log(1.0 / 0.07)

    def encode_image(self, image, normalize=False):
        # image: [B, C, H, W] NCHW
        B, C, H, W = image.shape
        P = self.patch_size
        nh, nw = H // P, W // P
        # NCHW -> [B, num_patches, C*P*P] patchify (pure layout, kept in JAX)
        x = image.reshape(B, C, nh, P, nw, P).transpose(0, 2, 4, 1, 3, 5)
        x = x.reshape(B, nh * nw, C * P * P)
        x = jnp.pad(x, ((0, 0), (1, 0), (0, 0)))      # row 0 reserved for CLS
        S, Wd = self.v_prefix.shape
        xp = x.reshape(B * S, -1).astype(jnp.bfloat16)
        # tiny host-built constants (exact one-hot selections, f32)
        rep = jax.nn.one_hot(jnp.arange(B * S) % S, S, dtype=jnp.float32)
        pool = jax.nn.one_hot(jnp.arange(B) * S, B * S, dtype=jnp.float32)
        amask = _block_diag_mask(B, S)
        # single fused Pallas call: stem + block + pool + head
        return pallas_image_tower(xp, self, pool, amask, rep,
                                  normalize=normalize)

    def encode_text(self, text, normalize=False):
        # text: [B, S] int32 token ids
        B, S = text.shape
        # TODO(synk): token-embedding gather stays in plain JAX (no Pallas win
        # for a [64, 128] table lookup at this size).
        x = jnp.take(self.tok_emb, text, axis=0) + self.t_pos[None]
        x = x.reshape(B * S, -1).astype(jnp.float32)
        eot = jnp.argmax(text, axis=-1)                          # EOT positions
        pool = jax.nn.one_hot(jnp.arange(B) * S + eot, B * S, dtype=jnp.float32)
        amask = _block_diag_mask(B, S)
        # single fused Pallas call: block + EOT pool + head
        return pallas_text_tower(x, self, pool, amask, normalize=normalize)

    def __call__(self, image, text):
        image_features = self.encode_image(image, normalize=True)
        text_features = self.encode_text(text, normalize=True)
        return image_features, text_features, jnp.exp(self.logit_scale)


# ------------------------------ the wrapper --------------------------------

class OpenClipWrapper:
    """JAX/Pallas port of the PyTorch OpenClipWrapper (manages input dtypes)."""

    def __init__(self, inner_model, device: str):
        self.inner_model = inner_model
        self.device = device
        # torch: float32 on CPU, else bf16 if supported (TPU supports bf16).
        self.dtype = jnp.float32 if device == "cpu" else jnp.bfloat16

    def encode_image(self, image):
        if self.device == "cpu":
            return self.inner_model.encode_image(image)
        # autocast-equivalent: bf16 activations / matmul operands; Pallas
        # kernels still accumulate + reduce in f32.
        return self.inner_model.encode_image(image.astype(self.dtype))

    def encode_text(self, text):
        if self.device == "cpu":
            return self.inner_model.encode_text(text)
        return self.inner_model.encode_text(text)   # int tokens: autocast no-op

    def forward(self, *args, **kwargs):
        # Matches PyTorch wrapper exactly: plain delegation.
        return self.inner_model(*args, **kwargs)

    __call__ = forward


# --------------------------------- main -------------------------------------

if __name__ == "__main__":
    key = jax.random.PRNGKey(0)
    kp, ki, kt = jax.random.split(key, 3)

    model = MiniCLIP(kp)
    wrapper = OpenClipWrapper(model, device="tpu")

    image = jax.random.normal(ki, (2, 3, 16, 16), jnp.float32)        # NCHW
    text = jax.random.randint(kt, (2, 8), 1, 64, dtype=jnp.int32)

    forward = jax.jit(lambda im, tx: wrapper(im, tx))
    img_f, txt_f, logit_scale = forward(image, text)
    jax.block_until_ready((img_f, txt_f, logit_scale))

    assert img_f.shape == (2, 128) and txt_f.shape == (2, 128)
    assert bool(jnp.all(jnp.isfinite(img_f.astype(jnp.float32))))
    assert bool(jnp.all(jnp.isfinite(txt_f.astype(jnp.float32))))
    print("KERNEL_OK")
</pallas_src>

<mosaic_0001>
module attributes {stable_mosaic.version = 11 : i64} {
  func.func @_image_tower_kernel(%arg0: i32, %arg1: memref<10x192xbf16, #tpu.memory_space<vmem>>, %arg2: memref<192x128xbf16, #tpu.memory_space<vmem>>, %arg3: memref<5x128xf32, #tpu.memory_space<vmem>>, %arg4: memref<10x5xf32, #tpu.memory_space<vmem>>, %arg5: memref<1x128xf32, #tpu.memory_space<vmem>>, %arg6: memref<1x128xf32, #tpu.memory_space<vmem>>, %arg7: memref<1x128xf32, #tpu.memory_space<vmem>>, %arg8: memref<1x128xf32, #tpu.memory_space<vmem>>, %arg9: memref<128x384xbf16, #tpu.memory_space<vmem>>, %arg10: memref<1x384xf32, #tpu.memory_space<vmem>>, %arg11: memref<128x128xbf16, #tpu.memory_space<vmem>>, %arg12: memref<1x128xf32, #tpu.memory_space<vmem>>, %arg13: memref<1x128xf32, #tpu.memory_space<vmem>>, %arg14: memref<1x128xf32, #tpu.memory_space<vmem>>, %arg15: memref<128x512xbf16, #tpu.memory_space<vmem>>, %arg16: memref<1x512xf32, #tpu.memory_space<vmem>>, %arg17: memref<512x128xbf16, #tpu.memory_space<vmem>>, %arg18: memref<1x128xf32, #tpu.memory_space<vmem>>, %arg19: memref<1x128xf32, #tpu.memory_space<vmem>>, %arg20: memref<1x128xf32, #tpu.memory_space<vmem>>, %arg21: memref<128x128xbf16, #tpu.memory_space<vmem>>, %arg22: memref<2x10xf32, #tpu.memory_space<vmem>>, %arg23: memref<10x10xf32, #tpu.memory_space<vmem>>, %arg24: memref<2x128xbf16, #tpu.memory_space<vmem>>) attributes {dimension_semantics = [#tpu.dimension_semantics<arbitrary>], iteration_bounds = array<i64: 1>, scalar_prefetch = 0 : i64, scratch_operands = 0 : i64, tpu.core_type = #tpu.core_type<tc>, window_params = [{pipeline_mode = #tpu.pipeline_mode<synchronous>, transform_indices = @transform_0, window_bounds = array<i64: 10, 192>}, {pipeline_mode = #tpu.pipeline_mode<synchronous>, transform_indices = @transform_1, window_bounds = array<i64: 192, 128>}, {pipeline_mode = #tpu.pipeline_mode<synchronous>, transform_indices = @transform_2, window_bounds = array<i64: 5, 128>}, {pipeline_mode = #tpu.pipeline_mode<synchronous>, transform_indices = @transform_3, window_bounds = array<i64: 10, 5>}, {pipeline_mode = #tpu.pipeline_mode<synchronous>, transform_indices = @transform_4, window_bounds = array<i64: 1, 128>}, {pipeline_mode = #tpu.pipeline_mode<synchronous>, transform_indices = @transform_5, window_bounds = array<i64: 1, 128>}, {pipeline_mode = #tpu.pipeline_mode<synchronous>, transform_indices = @transform_6, window_bounds = array<i64: 1, 128>}, {pipeline_mode = #tpu.pipeline_mode<synchronous>, transform_indices = @transform_7, window_bounds = array<i64: 1, 128>}, {pipeline_mode = #tpu.pipeline_mode<synchronous>, transform_indices = @transform_8, window_bounds = array<i64: 128, 384>}, {pipeline_mode = #tpu.pipeline_mode<synchronous>, transform_indices = @transform_9, window_bounds = array<i64: 1, 384>}, {pipeline_mode = #tpu.pipeline_mode<synchronous>, transform_indices = @transform_10, window_bounds = array<i64: 128, 128>}, {pipeline_mode = #tpu.pipeline_mode<synchronous>, transform_indices = @transform_11, window_bounds = array<i64: 1, 128>}, {pipeline_mode = #tpu.pipeline_mode<synchronous>, transform_indices = @transform_12, window_bounds = array<i64: 1, 128>}, {pipeline_mode = #tpu.pipeline_mode<synchronous>, transform_indices = @transform_13, window_bounds = array<i64: 1, 128>}, {pipeline_mode = #tpu.pipeline_mode<synchronous>, transform_indices = @transform_14, window_bounds = array<i64: 128, 512>}, {pipeline_mode = #tpu.pipeline_mode<synchronous>, transform_indices = @transform_15, window_bounds = array<i64: 1, 512>}, {pipeline_mode = #tpu.pipeline_mode<synchronous>, transform_indices = @transform_16, window_bounds = array<i64: 512, 128>}, {pipeline_mode = #tpu.pipeline_mode<synchronous>, transform_indices = @transform_17, window_bounds = array<i64: 1, 128>}, {pipeline_mode = #tpu.pipeline_mode<synchronous>, transform_indices = @transform_18, window_bounds = array<i64: 1, 128>}, {pipeline_mode = #tpu.pipeline_mode<synchronous>, transform_indices = @transform_19, window_bounds = array<i64: 1, 128>}, {pipeline_mode = #tpu.pipeline_mode<synchronous>, transform_indices = @transform_20, window_bounds = array<i64: 128, 128>}, {pipeline_mode = #tpu.pipeline_mode<synchronous>, transform_indices = @transform_21, window_bounds = array<i64: 2, 10>}, {pipeline_mode = #tpu.pipeline_mode<synchronous>, transform_indices = @transform_22, window_bounds = array<i64: 10, 10>}, {pipeline_mode = #tpu.pipeline_mode<synchronous>, transform_indices = @transform_23, window_bounds = array<i64: 2, 128>}]} {
    %c0 = arith.constant 0 : index
    %c0_0 = arith.constant 0 : index
    %0 = vector.load %arg1[%c0, %c0_0] : memref<10x192xbf16, #tpu.memory_space<vmem>>, vector<10x192xbf16>
    %c0_1 = arith.constant 0 : index
    %c0_2 = arith.constant 0 : index
    %1 = vector.load %arg2[%c0_1, %c0_2] : memref<192x128xbf16, #tpu.memory_space<vmem>>, vector<192x128xbf16>
    %cst = arith.constant dense<0.000000e+00> : vector<10x128xf32>
    %2 = tpu.matmul %0, %1, %cst {dimension_numbers = #tpu.dot_dimension_numbers<[1], [0], [0], [1], [0, 0, 1, 1], [], []>} : vector<10x192xbf16>, vector<192x128xbf16>, vector<10x128xf32> -> vector<10x128xf32>
    %c0_3 = arith.constant 0 : index
    %c0_4 = arith.constant 0 : index
    %3 = vector.load %arg4[%c0_3, %c0_4] : memref<10x5xf32, #tpu.memory_space<vmem>>, vector<10x5xf32>
    %c0_5 = arith.constant 0 : index
    %c0_6 = arith.constant 0 : index
    %4 = vector.load %arg3[%c0_5, %c0_6] : memref<5x128xf32, #tpu.memory_space<vmem>>, vector<5x128xf32>
    %cst_7 = arith.constant dense<0.000000e+00> : vector<10x128xf32>
    %5 = tpu.matmul %3, %4, %cst_7 {dimension_numbers = #tpu.dot_dimension_numbers<[1], [0], [0], [1], [0, 0, 1, 1], [], []>} : vector<10x5xf32>, vector<5x128xf32>, vector<10x128xf32> -> vector<10x128xf32>
    %6 = arith.addf %2, %5 : vector<10x128xf32>
    %c0_8 = arith.constant 0 : index
    %c0_9 = arith.constant 0 : index
    %7 = vector.load %arg5[%c0_8, %c0_9] : memref<1x128xf32, #tpu.memory_space<vmem>>, vector<1x128xf32>
    %c0_10 = arith.constant 0 : index
    %c0_11 = arith.constant 0 : index
    %8 = vector.load %arg6[%c0_10, %c0_11] : memref<1x128xf32, #tpu.memory_space<vmem>>, vector<1x128xf32>
    %cst_12 = arith.constant dense<0.000000e+00> : vector<10xf32>
    %9 = vector.multi_reduction <add>, %6, %cst_12 [1] : vector<10x128xf32> to vector<10xf32>
    %10 = vector.shape_cast %9 : vector<10xf32> to vector<10x1xf32>
    %cst_13 = arith.constant 1.280000e+02 : f32
    %11 = vector.broadcast %cst_13 : f32 to vector<10x1xf32>
    %12 = arith.divf %10, %11 : vector<10x1xf32>
    %13 = vector.broadcast %12 : vector<10x1xf32> to vector<10x128xf32>
    %14 = arith.subf %6, %13 : vector<10x128xf32>
    %15 = arith.mulf %14, %14 : vector<10x128xf32>
    %cst_14 = arith.constant dense<0.000000e+00> : vector<10xf32>
    %16 = vector.multi_reduction <add>, %15, %cst_14 [1] : vector<10x128xf32> to vector<10xf32>
    %17 = vector.shape_cast %16 : vector<10xf32> to vector<10x1xf32>
    %cst_15 = arith.constant 1.280000e+02 : f32
    %18 = vector.broadcast %cst_15 : f32 to vector<10x1xf32>
    %19 = arith.divf %17, %18 : vector<10x1xf32>
    %20 = vector.broadcast %12 : vector<10x1xf32> to vector<10x128xf32>
    %21 = arith.subf %6, %20 : vector<10x128xf32>
    %cst_16 = arith.constant 9.99999974E-6 : f32
    %22 = vector.broadcast %cst_16 : f32 to vector<10x1xf32>
    %23 = arith.addf %19, %22 : vector<10x1xf32>
    %24 = math.rsqrt %23 : vector<10x1xf32>
    %25 = vector.broadcast %24 : vector<10x1xf32> to vector<10x128xf32>
    %26 = arith.mulf %21, %25 : vector<10x128xf32>
    %27 = vector.broadcast %7 : vector<1x128xf32> to vector<10x128xf32>
    %28 = arith.mulf %26, %27 : vector<10x128xf32>
    %29 = vector.broadcast %8 : vector<1x128xf32> to vector<10x128xf32>
    %30 = arith.addf %28, %29 : vector<10x128xf32>
    %c0_17 = arith.constant 0 : index
    %c0_18 = arith.constant 0 : index
    %31 = vector.load %arg7[%c0_17, %c0_18] : memref<1x128xf32, #tpu.memory_space<vmem>>, vector<1x128xf32>
    %c0_19 = arith.constant 0 : index
    %c0_20 = arith.constant 0 : index
    %32 = vector.load %arg8[%c0_19, %c0_20] : memref<1x128xf32, #tpu.memory_space<vmem>>, vector<1x128xf32>
    %cst_21 = arith.constant dense<0.000000e+00> : vector<10xf32>
    %33 = vector.multi_reduction <add>, %30, %cst_21 [1] : vector<10x128xf32> to vector<10xf32>
    %34 = vector.shape_cast %33 : vector<10xf32> to vector<10x1xf32>
    %cst_22 = arith.constant 1.280000e+02 : f32
    %35 = vector.broadcast %cst_22 : f32 to vector<10x1xf32>
    %36 = arith.divf %34, %35 : vector<10x1xf32>
    %37 = vector.broadcast %36 : vector<10x1xf32> to vector<10x128xf32>
    %38 = arith.subf %30, %37 : vector<10x128xf32>
    %39 = arith.mulf %38, %38 : vector<10x128xf32>
    %cst_23 = arith.constant dense<0.000000e+00> : vector<10xf32>
    %40 = vector.multi_reduction <add>, %39, %cst_23 [1] : vector<10x128xf32> to vector<10xf32>
    %41 = vector.shape_cast %40 : vector<10xf32> to vector<10x1xf32>
    %cst_24 = arith.constant 1.280000e+02 : f32
    %42 = vector.broadcast %cst_24 : f32 to vector<10x1xf32>
    %43 = arith.divf %41, %42 : vector<10x1xf32>
    %44 = vector.broadcast %36 : vector<10x1xf32> to vector<10x128xf32>
    %45 = arith.subf %30, %44 : vector<10x128xf32>
    %cst_25 = arith.constant 9.99999974E-6 : f32
    %46 = vector.broadcast %cst_25 : f32 to vector<10x1xf32>
    %47 = arith.addf %43, %46 : vector<10x1xf32>
    %48 = math.rsqrt %47 : vector<10x1xf32>
    %49 = vector.broadcast %48 : vector<10x1xf32> to vector<10x128xf32>
    %50 = arith.mulf %45, %49 : vector<10x128xf32>
    %51 = vector.broadcast %31 : vector<1x128xf32> to vector<10x128xf32>
    %52 = arith.mulf %50, %51 : vector<10x128xf32>
    %53 = vector.broadcast %32 : vector<1x128xf32> to vector<10x128xf32>
    %54 = arith.addf %52, %53 : vector<10x128xf32>
    %55 = arith.truncf %54 : vector<10x128xf32> to vector<10x128xbf16>
    %c0_26 = arith.constant 0 : index
    %c0_27 = arith.constant 0 : index
    %56 = vector.load %arg9[%c0_26, %c0_27] : memref<128x384xbf16, #tpu.memory_space<vmem>>, vector<128x384xbf16>
    %cst_28 = arith.constant dense<0.000000e+00> : vector<10x384xf32>
    %57 = tpu.matmul %55, %56, %cst_28 {dimension_numbers = #tpu.dot_dimension_numbers<[1], [0], [0], [1], [0, 0, 1, 1], [], []>} : vector<10x128xbf16>, vector<128x384xbf16>, vector<10x384xf32> -> vector<10x384xf32>
    %c0_29 = arith.constant 0 : index
    %c0_30 = arith.constant 0 : index
    %58 = vector.load %arg10[%c0_29, %c0_30] : memref<1x384xf32, #tpu.memory_space<vmem>>, vector<1x384xf32>
    %59 = vector.broadcast %58 : vector<1x384xf32> to vector<10x384xf32>
    %60 = arith.addf %57, %59 : vector<10x384xf32>
    %61 = vector.extract_strided_slice %60 {offsets = [0, 0], sizes = [10, 128], strides = [1, 1]} : vector<10x384xf32> to vector<10x128xf32>
    %62 = vector.extract_strided_slice %60 {offsets = [0, 128], sizes = [10, 128], strides = [1, 1]} : vector<10x384xf32> to vector<10x128xf32>
    %63 = vector.extract_strided_slice %60 {offsets = [0, 256], sizes = [10, 128], strides = [1, 1]} : vector<10x384xf32> to vector<10x128xf32>
    %64 = arith.truncf %61 : vector<10x128xf32> to vector<10x128xbf16>
    %65 = arith.truncf %62 : vector<10x128xf32> to vector<10x128xbf16>
    %cst_31 = arith.constant dense<0.000000e+00> : vector<10x10xf32>
    %66 = tpu.matmul %64, %65, %cst_31 {dimension_numbers = #tpu.dot_dimension_numbers<[1], [1], [0], [0], [0, 0, 1, 0], [], []>} : vector<10x128xbf16>, vector<10x128xbf16>, vector<10x10xf32> -> vector<10x10xf32>
    %c0_32 = arith.constant 0 : index
    %c0_33 = arith.constant 0 : index
    %67 = vector.load %arg23[%c0_32, %c0_33] : memref<10x10xf32, #tpu.memory_space<vmem>>, vector<10x10xf32>
    %68 = arith.addf %66, %67 : vector<10x10xf32>
    %cst_34 = arith.constant dense<0xFF800000> : vector<10xf32>
    %69 = vector.multi_reduction <maximumf>, %68, %cst_34 [1] : vector<10x10xf32> to vector<10xf32>
    %70 = vector.shape_cast %69 : vector<10xf32> to vector<10x1xf32>
    %71 = vector.broadcast %70 : vector<10x1xf32> to vector<10x10xf32>
    %72 = arith.subf %68, %71 : vector<10x10xf32>
    %73 = math.exp %72 : vector<10x10xf32>
    %cst_35 = arith.constant dense<0.000000e+00> : vector<10xf32>
    %74 = vector.multi_reduction <add>, %73, %cst_35 [1] : vector<10x10xf32> to vector<10xf32>
    %75 = vector.shape_cast %74 : vector<10xf32> to vector<10x1xf32>
    %76 = vector.broadcast %75 : vector<10x1xf32> to vector<10x10xf32>
    %77 = arith.divf %73, %76 : vector<10x10xf32>
    %78 = arith.truncf %77 : vector<10x10xf32> to vector<10x10xbf16>
    %79 = arith.truncf %63 : vector<10x128xf32> to vector<10x128xbf16>
    %cst_36 = arith.constant dense<0.000000e+00> : vector<10x128xf32>
    %80 = tpu.matmul %78, %79, %cst_36 {dimension_numbers = #tpu.dot_dimension_numbers<[1], [0], [0], [1], [0, 0, 1, 1], [], []>} : vector<10x10xbf16>, vector<10x128xbf16>, vector<10x128xf32> -> vector<10x128xf32>
    %81 = arith.truncf %80 : vector<10x128xf32> to vector<10x128xbf16>
    %c0_37 = arith.constant 0 : index
    %c0_38 = arith.constant 0 : index
    %82 = vector.load %arg11[%c0_37, %c0_38] : memref<128x128xbf16, #tpu.memory_space<vmem>>, vector<128x128xbf16>
    %cst_39 = arith.constant dense<0.000000e+00> : vector<10x128xf32>
    %83 = tpu.matmul %81, %82, %cst_39 {dimension_numbers = #tpu.dot_dimension_numbers<[1], [0], [0], [1], [0, 0, 1, 1], [], []>} : vector<10x128xbf16>, vector<128x128xbf16>, vector<10x128xf32> -> vector<10x128xf32>
    %c0_40 = arith.constant 0 : index
    %c0_41 = arith.constant 0 : index
    %84 = vector.load %arg12[%c0_40, %c0_41] : memref<1x128xf32, #tpu.memory_space<vmem>>, vector<1x128xf32>
    %85 = vector.broadcast %84 : vector<1x128xf32> to vector<10x128xf32>
    %86 = arith.addf %83, %85 : vector<10x128xf32>
    %87 = arith.addf %30, %86 : vector<10x128xf32>
    %c0_42 = arith.constant 0 : index
    %c0_43 = arith.constant 0 : index
    %88 = vector.load %arg13[%c0_42, %c0_43] : memref<1x128xf32, #tpu.memory_space<vmem>>, vector<1x128xf32>
    %c0_44 = arith.constant 0 : index
    %c0_45 = arith.constant 0 : index
    %89 = vector.load %arg14[%c0_44, %c0_45] : memref<1x128xf32, #tpu.memory_space<vmem>>, vector<1x128xf32>
    %cst_46 = arith.constant dense<0.000000e+00> : vector<10xf32>
    %90 = vector.multi_reduction <add>, %87, %cst_46 [1] : vector<10x128xf32> to vector<10xf32>
    %91 = vector.shape_cast %90 : vector<10xf32> to vector<10x1xf32>
    %cst_47 = arith.constant 1.280000e+02 : f32
    %92 = vector.broadcast %cst_47 : f32 to vector<10x1xf32>
    %93 = arith.divf %91, %92 : vector<10x1xf32>
    %94 = vector.broadcast %93 : vector<10x1xf32> to vector<10x128xf32>
    %95 = arith.subf %87, %94 : vector<10x128xf32>
    %96 = arith.mulf %95, %95 : vector<10x128xf32>
    %cst_48 = arith.constant dense<0.000000e+00> : vector<10xf32>
    %97 = vector.multi_reduction <add>, %96, %cst_48 [1] : vector<10x128xf32> to vector<10xf32>
    %98 = vector.shape_cast %97 : vector<10xf32> to vector<10x1xf32>
    %cst_49 = arith.constant 1.280000e+02 : f32
    %99 = vector.broadcast %cst_49 : f32 to vector<10x1xf32>
    %100 = arith.divf %98, %99 : vector<10x1xf32>
    %101 = vector.broadcast %93 : vector<10x1xf32> to vector<10x128xf32>
    %102 = arith.subf %87, %101 : vector<10x128xf32>
    %cst_50 = arith.constant 9.99999974E-6 : f32
    %103 = vector.broadcast %cst_50 : f32 to vector<10x1xf32>
    %104 = arith.addf %100, %103 : vector<10x1xf32>
    %105 = math.rsqrt %104 : vector<10x1xf32>
    %106 = vector.broadcast %105 : vector<10x1xf32> to vector<10x128xf32>
    %107 = arith.mulf %102, %106 : vector<10x128xf32>
    %108 = vector.broadcast %88 : vector<1x128xf32> to vector<10x128xf32>
    %109 = arith.mulf %107, %108 : vector<10x128xf32>
    %110 = vector.broadcast %89 : vector<1x128xf32> to vector<10x128xf32>
    %111 = arith.addf %109, %110 : vector<10x128xf32>
    %112 = arith.truncf %111 : vector<10x128xf32> to vector<10x128xbf16>
    %c0_51 = arith.constant 0 : index
    %c0_52 = arith.constant 0 : index
    %113 = vector.load %arg15[%c0_51, %c0_52] : memref<128x512xbf16, #tpu.memory_space<vmem>>, vector<128x512xbf16>
    %cst_53 = arith.constant dense<0.000000e+00> : vector<10x512xf32>
    %114 = tpu.matmul %112, %113, %cst_53 {dimension_numbers = #tpu.dot_dimension_numbers<[1], [0], [0], [1], [0, 0, 1, 1], [], []>} : vector<10x128xbf16>, vector<128x512xbf16>, vector<10x512xf32> -> vector<10x512xf32>
    %c0_54 = arith.constant 0 : index
    %c0_55 = arith.constant 0 : index
    %115 = vector.load %arg16[%c0_54, %c0_55] : memref<1x512xf32, #tpu.memory_space<vmem>>, vector<1x512xf32>
    %116 = vector.broadcast %115 : vector<1x512xf32> to vector<10x512xf32>
    %117 = arith.addf %114, %116 : vector<10x512xf32>
    %118 = arith.mulf %117, %117 : vector<10x512xf32>
    %119 = arith.mulf %117, %118 : vector<10x512xf32>
    %cst_56 = arith.constant 4.471500e-02 : f32
    %120 = vector.broadcast %cst_56 : f32 to vector<10x512xf32>
    %121 = arith.mulf %120, %119 : vector<10x512xf32>
    %122 = arith.addf %117, %121 : vector<10x512xf32>
    %cst_57 = arith.constant 0.797884583 : f32
    %123 = vector.broadcast %cst_57 : f32 to vector<10x512xf32>
    %124 = arith.mulf %123, %122 : vector<10x512xf32>
    %125 = math.tanh %124 : vector<10x512xf32>
    %cst_58 = arith.constant 1.000000e+00 : f32
    %126 = vector.broadcast %cst_58 : f32 to vector<10x512xf32>
    %127 = arith.addf %126, %125 : vector<10x512xf32>
    %cst_59 = arith.constant 5.000000e-01 : f32
    %128 = vector.broadcast %cst_59 : f32 to vector<10x512xf32>
    %129 = arith.mulf %128, %127 : vector<10x512xf32>
    %130 = arith.mulf %117, %129 : vector<10x512xf32>
    %131 = arith.truncf %130 : vector<10x512xf32> to vector<10x512xbf16>
    %c0_60 = arith.constant 0 : index
    %c0_61 = arith.constant 0 : index
    %132 = vector.load %arg17[%c0_60, %c0_61] : memref<512x128xbf16, #tpu.memory_space<vmem>>, vector<512x128xbf16>
    %cst_62 = arith.constant dense<0.000000e+00> : vector<10x128xf32>
    %133 = tpu.matmul %131, %132, %cst_62 {dimension_numbers = #tpu.dot_dimension_numbers<[1], [0], [0], [1], [0, 0, 1, 1], [], []>} : vector<10x512xbf16>, vector<512x128xbf16>, vector<10x128xf32> -> vector<10x128xf32>
    %c0_63 = arith.constant 0 : index
    %c0_64 = arith.constant 0 : index
    %134 = vector.load %arg18[%c0_63, %c0_64] : memref<1x128xf32, #tpu.memory_space<vmem>>, vector<1x128xf32>
    %135 = vector.broadcast %134 : vector<1x128xf32> to vector<10x128xf32>
    %136 = arith.addf %133, %135 : vector<10x128xf32>
    %137 = arith.addf %87, %136 : vector<10x128xf32>
    %c0_65 = arith.constant 0 : index
    %c0_66 = arith.constant 0 : index
    %138 = vector.load %arg22[%c0_65, %c0_66] : memref<2x10xf32, #tpu.memory_space<vmem>>, vector<2x10xf32>
    %cst_67 = arith.constant dense<0.000000e+00> : vector<2x128xf32>
    %139 = tpu.matmul %138, %137, %cst_67 {dimension_numbers = #tpu.dot_dimension_numbers<[1], [0], [0], [1], [0, 0, 1, 1], [], []>} : vector<2x10xf32>, vector<10x128xf32>, vector<2x128xf32> -> vector<2x128xf32>
    %c0_68 = arith.constant 0 : index
    %c0_69 = arith.constant 0 : index
    %140 = vector.load %arg19[%c0_68, %c0_69] : memref<1x128xf32, #tpu.memory_space<vmem>>, vector<1x128xf32>
    %c0_70 = arith.constant 0 : index
    %c0_71 = arith.constant 0 : index
    %141 = vector.load %arg20[%c0_70, %c0_71] : memref<1x128xf32, #tpu.memory_space<vmem>>, vector<1x128xf32>
    %c0_72 = arith.constant 0 : index
    %c0_73 = arith.constant 0 : index
    %142 = vector.load %arg21[%c0_72, %c0_73] : memref<128x128xbf16, #tpu.memory_space<vmem>>, vector<128x128xbf16>
    %cst_74 = arith.constant dense<0.000000e+00> : vector<2xf32>
    %143 = vector.multi_reduction <add>, %139, %cst_74 [1] : vector<2x128xf32> to vector<2xf32>
    %144 = vector.shape_cast %143 : vector<2xf32> to vector<2x1xf32>
    %cst_75 = arith.constant 1.280000e+02 : f32
    %145 = vector.broadcast %cst_75 : f32 to vector<2x1xf32>
    %146 = arith.divf %144, %145 : vector<2x1xf32>
    %147 = vector.broadcast %146 : vector<2x1xf32> to vector<2x128xf32>
    %148 = arith.subf %139, %147 : vector<2x128xf32>
    %149 = arith.mulf %148, %148 : vector<2x128xf32>
    %cst_76 = arith.constant dense<0.000000e+00> : vector<2xf32>
    %150 = vector.multi_reduction <add>, %149, %cst_76 [1] : vector<2x128xf32> to vector<2xf32>
    %151 = vector.shape_cast %150 : vector<2xf32> to vector<2x1xf32>
    %cst_77 = arith.constant 1.280000e+02 : f32
    %152 = vector.broadcast %cst_77 : f32 to vector<2x1xf32>
    %153 = arith.divf %151, %152 : vector<2x1xf32>
    %154 = vector.broadcast %146 : vector<2x1xf32> to vector<2x128xf32>
    %155 = arith.subf %139, %154 : vector<2x128xf32>
    %cst_78 = arith.constant 9.99999974E-6 : f32
    %156 = vector.broadcast %cst_78 : f32 to vector<2x1xf32>
    %157 = arith.addf %153, %156 : vector<2x1xf32>
    %158 = math.rsqrt %157 : vector<2x1xf32>
    %159 = vector.broadcast %158 : vector<2x1xf32> to vector<2x128xf32>
    %160 = arith.mulf %155, %159 : vector<2x128xf32>
    %161 = vector.broadcast %140 : vector<1x128xf32> to vector<2x128xf32>
    %162 = arith.mulf %160, %161 : vector<2x128xf32>
    %163 = vector.broadcast %141 : vector<1x128xf32> to vector<2x128xf32>
    %164 = arith.addf %162, %163 : vector<2x128xf32>
    %165 = arith.truncf %164 : vector<2x128xf32> to vector<2x128xbf16>
    %cst_79 = arith.constant dense<0.000000e+00> : vector<2x128xf32>
    %166 = tpu.matmul %165, %142, %cst_79 {dimension_numbers = #tpu.dot_dimension_numbers<[1], [0], [0], [1], [0, 0, 1, 1], [], []>} : vector<2x128xbf16>, vector<128x128xbf16>, vector<2x128xf32> -> vector<2x128xf32>
    %167 = arith.mulf %166, %166 : vector<2x128xf32>
    %cst_80 = arith.constant dense<0.000000e+00> : vector<2xf32>
    %168 = vector.multi_reduction <add>, %167, %cst_80 [1] : vector<2x128xf32> to vector<2xf32>
    %169 = vector.shape_cast %168 : vector<2xf32> to vector<2x1xf32>
    %cst_81 = arith.constant 1.000000e-24 : f32
    %170 = vector.broadcast %cst_81 : f32 to vector<2x1xf32>
    %171 = arith.maximumf %169, %170 : vector<2x1xf32>
    %172 = math.rsqrt %171 : vector<2x1xf32>
    %173 = vector.broadcast %172 : vector<2x1xf32> to vector<2x128xf32>
    %174 = arith.mulf %166, %173 : vector<2x128xf32>
    %175 = arith.truncf %174 : vector<2x128xf32> to vector<2x128xbf16>
    %c0_82 = arith.constant 0 : index
    %c0_83 = arith.constant 0 : index
    %176 = vector.load %arg24[%c0_82, %c0_83] : memref<2x128xbf16, #tpu.memory_space<vmem>>, vector<2x128xbf16>
    tpu.vector_store %arg24[%c0_82, %c0_83], %175 {strides = array<i32>} : memref<2x128xbf16, #tpu.memory_space<vmem>>, vector<2x128xbf16>,
    return
  }
  func.func @transform_0(%arg0: i32) -> (i32, i32) {
    %c0_i32 = arith.constant 0 : i32
    %c0_i32_0 = arith.constant 0 : i32
    %c0_i32_1 = arith.constant 0 : i32
    return %c0_i32, %c0_i32_0 : i32, i32
  }
  func.func @transform_1(%arg0: i32) -> (i32, i32) {
    %c0_i32 = arith.constant 0 : i32
    %c0_i32_0 = arith.constant 0 : i32
    %c0_i32_1 = arith.constant 0 : i32
    return %c0_i32, %c0_i32_0 : i32, i32
  }
  func.func @transform_2(%arg0: i32) -> (i32, i32) {
    %c0_i32 = arith.constant 0 : i32
    %c0_i32_0 = arith.constant 0 : i32
    %c0_i32_1 = arith.constant 0 : i32
    return %c0_i32, %c0_i32_0 : i32, i32
  }
  func.func @transform_3(%arg0: i32) -> (i32, i32) {
    %c0_i32 = arith.constant 0 : i32
    %c0_i32_0 = arith.constant 0 : i32
    %c0_i32_1 = arith.constant 0 : i32
    return %c0_i32, %c0_i32_0 : i32, i32
  }
  func.func @transform_4(%arg0: i32) -> (i32, i32) {
    %c0_i32 = arith.constant 0 : i32
    %c0_i32_0 = arith.constant 0 : i32
    %c0_i32_1 = arith.constant 0 : i32
    return %c0_i32, %c0_i32_0 : i32, i32
  }
  func.func @transform_5(%arg0: i32) -> (i32, i32) {
    %c0_i32 = arith.constant 0 : i32
    %c0_i32_0 = arith.constant 0 : i32
    %c0_i32_1 = arith.constant 0 : i32
    return %c0_i32, %c0_i32_0 : i32, i32
  }
  func.func @transform_6(%arg0: i32) -> (i32, i32) {
    %c0_i32 = arith.constant 0 : i32
    %c0_i32_0 = arith.constant 0 : i32
    %c0_i32_1 = arith.constant 0 : i32
    return %c0_i32, %c0_i32_0 : i32, i32
  }
  func.func @transform_7(%arg0: i32) -> (i32, i32) {
    %c0_i32 = arith.constant 0 : i32
    %c0_i32_0 = arith.constant 0 : i32
    %c0_i32_1 = arith.constant 0 : i32
    return %c0_i32, %c0_i32_0 : i32, i32
  }
  func.func @transform_8(%arg0: i32) -> (i32, i32) {
    %c0_i32 = arith.constant 0 : i32
    %c0_i32_0 = arith.constant 0 : i32
    %c0_i32_1 = arith.constant 0 : i32
    return %c0_i32, %c0_i32_0 : i32, i32
  }
  func.func @transform_9(%arg0: i32) -> (i32, i32) {
    %c0_i32 = arith.constant 0 : i32
    %c0_i32_0 = arith.constant 0 : i32
    %c0_i32_1 = arith.constant 0 : i32
    return %c0_i32, %c0_i32_0 : i32, i32
  }
  func.func @transform_10(%arg0: i32) -> (i32, i32) {
    %c0_i32 = arith.constant 0 : i32
    %c0_i32_0 = arith.constant 0 : i32
    %c0_i32_1 = arith.constant 0 : i32
    return %c0_i32, %c0_i32_0 : i32, i32
  }
  func.func @transform_11(%arg0: i32) -> (i32, i32) {
    %c0_i32 = arith.constant 0 : i32
    %c0_i32_0 = arith.constant 0 : i32
    %c0_i32_1 = arith.constant 0 : i32
    return %c0_i32, %c0_i32_0 : i32, i32
  }
  func.func @transform_12(%arg0: i32) -> (i32, i32) {
    %c0_i32 = arith.constant 0 : i32
    %c0_i32_0 = arith.constant 0 : i32
    %c0_i32_1 = arith.constant 0 : i32
    return %c0_i32, %c0_i32_0 : i32, i32
  }
  func.func @transform_13(%arg0: i32) -> (i32, i32) {
    %c0_i32 = arith.constant 0 : i32
    %c0_i32_0 = arith.constant 0 : i32
    %c0_i32_1 = arith.constant 0 : i32
    return %c0_i32, %c0_i32_0 : i32, i32
  }
  func.func @transform_14(%arg0: i32) -> (i32, i32) {
    %c0_i32 = arith.constant 0 : i32
    %c0_i32_0 = arith.constant 0 : i32
    %c0_i32_1 = arith.constant 0 : i32
    return %c0_i32, %c0_i32_0 : i32, i32
  }
  func.func @transform_15(%arg0: i32) -> (i32, i32) {
    %c0_i32 = arith.constant 0 : i32
    %c0_i32_0 = arith.constant 0 : i32
    %c0_i32_1 = arith.constant 0 : i32
    return %c0_i32, %c0_i32_0 : i32, i32
  }
  func.func @transform_16(%arg0: i32) -> (i32, i32) {
    %c0_i32 = arith.constant 0 : i32
    %c0_i32_0 = arith.constant 0 : i32
    %c0_i32_1 = arith.constant 0 : i32
    return %c0_i32, %c0_i32_0 : i32, i32
  }
  func.func @transform_17(%arg0: i32) -> (i32, i32) {
    %c0_i32 = arith.constant 0 : i32
    %c0_i32_0 = arith.constant 0 : i32
    %c0_i32_1 = arith.constant 0 : i32
    return %c0_i32, %c0_i32_0 : i32, i32
  }
  func.func @transform_18(%arg0: i32) -> (i32, i32) {
    %c0_i32 = arith.constant 0 : i32
    %c0_i32_0 = arith.constant 0 : i32
    %c0_i32_1 = arith.constant 0 : i32
    return %c0_i32, %c0_i32_0 : i32, i32
  }
  func.func @transform_19(%arg0: i32) -> (i32, i32) {
    %c0_i32 = arith.constant 0 : i32
    %c0_i32_0 = arith.constant 0 : i32
    %c0_i32_1 = arith.constant 0 : i32
    return %c0_i32, %c0_i32_0 : i32, i32
  }
  func.func @transform_20(%arg0: i32) -> (i32, i32) {
    %c0_i32 = arith.constant 0 : i32
    %c0_i32_0 = arith.constant 0 : i32
    %c0_i32_1 = arith.constant 0 : i32
    return %c0_i32, %c0_i32_0 : i32, i32
  }
  func.func @transform_21(%arg0: i32) -> (i32, i32) {
    %c0_i32 = arith.constant 0 : i32
    %c0_i32_0 = arith.constant 0 : i32
    %c0_i32_1 = arith.constant 0 : i32
    return %c0_i32, %c0_i32_0 : i32, i32
  }
  func.func @transform_22(%arg0: i32) -> (i32, i32) {
    %c0_i32 = arith.constant 0 : i32
    %c0_i32_0 = arith.constant 0 : i32
    %c0_i32_1 = arith.constant 0 : i32
    return %c0_i32, %c0_i32_0 : i32, i32
  }
  func.func @transform_23(%arg0: i32) -> (i32, i32) {
    %c0_i32 = arith.constant 0 : i32
    %c0_i32_0 = arith.constant 0 : i32
    %c0_i32_1 = arith.constant 0 : i32
    return %c0_i32, %c0_i32_0 : i32, i32
  }
}

module attributes {stable_mosaic.version = 11 : i64} {
  func.func @_text_tower_kernel(%arg0: i32, %arg1: memref<16x128xf32, #tpu.memory_space<vmem>>, %arg2: memref<1x128xf32, #tpu.memory_space<vmem>>, %arg3: memref<1x128xf32, #tpu.memory_space<vmem>>, %arg4: memref<128x384xbf16, #tpu.memory_space<vmem>>, %arg5: memref<1x384xf32, #tpu.memory_space<vmem>>, %arg6: memref<128x128xbf16, #tpu.memory_space<vmem>>, %arg7: memref<1x128xf32, #tpu.memory_space<vmem>>, %arg8: memref<1x128xf32, #tpu.memory_space<vmem>>, %arg9: memref<1x128xf32, #tpu.memory_space<vmem>>, %arg10: memref<128x512xbf16, #tpu.memory_space<vmem>>, %arg11: memref<1x512xf32, #tpu.memory_space<vmem>>, %arg12: memref<512x128xbf16, #tpu.memory_space<vmem>>, %arg13: memref<1x128xf32, #tpu.memory_space<vmem>>, %arg14: memref<1x128xf32, #tpu.memory_space<vmem>>, %arg15: memref<1x128xf32, #tpu.memory_space<vmem>>, %arg16: memref<128x128xbf16, #tpu.memory_space<vmem>>, %arg17: memref<2x16xf32, #tpu.memory_space<vmem>>, %arg18: memref<16x16xf32, #tpu.memory_space<vmem>>, %arg19: memref<2x128xbf16, #tpu.memory_space<vmem>>) attributes {dimension_semantics = [#tpu.dimension_semantics<arbitrary>], iteration_bounds = array<i64: 1>, scalar_prefetch = 0 : i64, scratch_operands = 0 : i64, tpu.core_type = #tpu.core_type<tc>, window_params = [{pipeline_mode = #tpu.pipeline_mode<synchronous>, transform_indices = @transform_0, window_bounds = array<i64: 16, 128>}, {pipeline_mode = #tpu.pipeline_mode<synchronous>, transform_indices = @transform_1, window_bounds = array<i64: 1, 128>}, {pipeline_mode = #tpu.pipeline_mode<synchronous>, transform_indices = @transform_2, window_bounds = array<i64: 1, 128>}, {pipeline_mode = #tpu.pipeline_mode<synchronous>, transform_indices = @transform_3, window_bounds = array<i64: 128, 384>}, {pipeline_mode = #tpu.pipeline_mode<synchronous>, transform_indices = @transform_4, window_bounds = array<i64: 1, 384>}, {pipeline_mode = #tpu.pipeline_mode<synchronous>, transform_indices = @transform_5, window_bounds = array<i64: 128, 128>}, {pipeline_mode = #tpu.pipeline_mode<synchronous>, transform_indices = @transform_6, window_bounds = array<i64: 1, 128>}, {pipeline_mode = #tpu.pipeline_mode<synchronous>, transform_indices = @transform_7, window_bounds = array<i64: 1, 128>}, {pipeline_mode = #tpu.pipeline_mode<synchronous>, transform_indices = @transform_8, window_bounds = array<i64: 1, 128>}, {pipeline_mode = #tpu.pipeline_mode<synchronous>, transform_indices = @transform_9, window_bounds = array<i64: 128, 512>}, {pipeline_mode = #tpu.pipeline_mode<synchronous>, transform_indices = @transform_10, window_bounds = array<i64: 1, 512>}, {pipeline_mode = #tpu.pipeline_mode<synchronous>, transform_indices = @transform_11, window_bounds = array<i64: 512, 128>}, {pipeline_mode = #tpu.pipeline_mode<synchronous>, transform_indices = @transform_12, window_bounds = array<i64: 1, 128>}, {pipeline_mode = #tpu.pipeline_mode<synchronous>, transform_indices = @transform_13, window_bounds = array<i64: 1, 128>}, {pipeline_mode = #tpu.pipeline_mode<synchronous>, transform_indices = @transform_14, window_bounds = array<i64: 1, 128>}, {pipeline_mode = #tpu.pipeline_mode<synchronous>, transform_indices = @transform_15, window_bounds = array<i64: 128, 128>}, {pipeline_mode = #tpu.pipeline_mode<synchronous>, transform_indices = @transform_16, window_bounds = array<i64: 2, 16>}, {pipeline_mode = #tpu.pipeline_mode<synchronous>, transform_indices = @transform_17, window_bounds = array<i64: 16, 16>}, {pipeline_mode = #tpu.pipeline_mode<synchronous>, transform_indices = @transform_18, window_bounds = array<i64: 2, 128>}]} {
    %c0 = arith.constant 0 : index
    %c0_0 = arith.constant 0 : index
    %0 = vector.load %arg1[%c0, %c0_0] : memref<16x128xf32, #tpu.memory_space<vmem>>, vector<16x128xf32>
    %c0_1 = arith.constant 0 : index
    %c0_2 = arith.constant 0 : index
    %1 = vector.load %arg2[%c0_1, %c0_2] : memref<1x128xf32, #tpu.memory_space<vmem>>, vector<1x128xf32>
    %c0_3 = arith.constant 0 : index
    %c0_4 = arith.constant 0 : index
    %2 = vector.load %arg3[%c0_3, %c0_4] : memref<1x128xf32, #tpu.memory_space<vmem>>, vector<1x128xf32>
    %cst = arith.constant dense<0.000000e+00> : vector<16xf32>
    %3 = vector.multi_reduction <add>, %0, %cst [1] : vector<16x128xf32> to vector<16xf32>
    %4 = vector.shape_cast %3 : vector<16xf32> to vector<16x1xf32>
    %cst_5 = arith.constant 1.280000e+02 : f32
    %5 = vector.broadcast %cst_5 : f32 to vector<16x1xf32>
    %6 = arith.divf %4, %5 : vector<16x1xf32>
    %7 = vector.broadcast %6 : vector<16x1xf32> to vector<16x128xf32>
    %8 = arith.subf %0, %7 : vector<16x128xf32>
    %9 = arith.mulf %8, %8 : vector<16x128xf32>
    %cst_6 = arith.constant dense<0.000000e+00> : vector<16xf32>
    %10 = vector.multi_reduction <add>, %9, %cst_6 [1] : vector<16x128xf32> to vector<16xf32>
    %11 = vector.shape_cast %10 : vector<16xf32> to vector<16x1xf32>
    %cst_7 = arith.constant 1.280000e+02 : f32
    %12 = vector.broadcast %cst_7 : f32 to vector<16x1xf32>
    %13 = arith.divf %11, %12 : vector<16x1xf32>
    %14 = vector.broadcast %6 : vector<16x1xf32> to vector<16x128xf32>
    %15 = arith.subf %0, %14 : vector<16x128xf32>
    %cst_8 = arith.constant 9.99999974E-6 : f32
    %16 = vector.broadcast %cst_8 : f32 to vector<16x1xf32>
    %17 = arith.addf %13, %16 : vector<16x1xf32>
    %18 = math.rsqrt %17 : vector<16x1xf32>
    %19 = vector.broadcast %18 : vector<16x1xf32> to vector<16x128xf32>
    %20 = arith.mulf %15, %19 : vector<16x128xf32>
    %21 = vector.broadcast %1 : vector<1x128xf32> to vector<16x128xf32>
    %22 = arith.mulf %20, %21 : vector<16x128xf32>
    %23 = vector.broadcast %2 : vector<1x128xf32> to vector<16x128xf32>
    %24 = arith.addf %22, %23 : vector<16x128xf32>
    %25 = arith.truncf %24 : vector<16x128xf32> to vector<16x128xbf16>
    %c0_9 = arith.constant 0 : index
    %c0_10 = arith.constant 0 : index
    %26 = vector.load %arg4[%c0_9, %c0_10] : memref<128x384xbf16, #tpu.memory_space<vmem>>, vector<128x384xbf16>
    %cst_11 = arith.constant dense<0.000000e+00> : vector<16x384xf32>
    %27 = tpu.matmul %25, %26, %cst_11 {dimension_numbers = #tpu.dot_dimension_numbers<[1], [0], [0], [1], [0, 0, 1, 1], [], []>} : vector<16x128xbf16>, vector<128x384xbf16>, vector<16x384xf32> -> vector<16x384xf32>
    %c0_12 = arith.constant 0 : index
    %c0_13 = arith.constant 0 : index
    %28 = vector.load %arg5[%c0_12, %c0_13] : memref<1x384xf32, #tpu.memory_space<vmem>>, vector<1x384xf32>
    %29 = vector.broadcast %28 : vector<1x384xf32> to vector<16x384xf32>
    %30 = arith.addf %27, %29 : vector<16x384xf32>
    %31 = vector.extract_strided_slice %30 {offsets = [0, 0], sizes = [16, 128], strides = [1, 1]} : vector<16x384xf32> to vector<16x128xf32>
    %32 = vector.extract_strided_slice %30 {offsets = [0, 128], sizes = [16, 128], strides = [1, 1]} : vector<16x384xf32> to vector<16x128xf32>
    %33 = vector.extract_strided_slice %30 {offsets = [0, 256], sizes = [16, 128], strides = [1, 1]} : vector<16x384xf32> to vector<16x128xf32>
    %34 = arith.truncf %31 : vector<16x128xf32> to vector<16x128xbf16>
    %35 = arith.truncf %32 : vector<16x128xf32> to vector<16x128xbf16>
    %cst_14 = arith.constant dense<0.000000e+00> : vector<16x16xf32>
    %36 = tpu.matmul %34, %35, %cst_14 {dimension_numbers = #tpu.dot_dimension_numbers<[1], [1], [0], [0], [0, 0, 1, 0], [], []>} : vector<16x128xbf16>, vector<16x128xbf16>, vector<16x16xf32> -> vector<16x16xf32>
    %c0_15 = arith.constant 0 : index
    %c0_16 = arith.constant 0 : index
    %37 = vector.load %arg18[%c0_15, %c0_16] : memref<16x16xf32, #tpu.memory_space<vmem>>, vector<16x16xf32>
    %38 = arith.addf %36, %37 : vector<16x16xf32>
    %cst_17 = arith.constant dense<0xFF800000> : vector<16xf32>
    %39 = vector.multi_reduction <maximumf>, %38, %cst_17 [1] : vector<16x16xf32> to vector<16xf32>
    %40 = vector.shape_cast %39 : vector<16xf32> to vector<16x1xf32>
    %41 = vector.broadcast %40 : vector<16x1xf32> to vector<16x16xf32>
    %42 = arith.subf %38, %41 : vector<16x16xf32>
    %43 = math.exp %42 : vector<16x16xf32>
    %cst_18 = arith.constant dense<0.000000e+00> : vector<16xf32>
    %44 = vector.multi_reduction <add>, %43, %cst_18 [1] : vector<16x16xf32> to vector<16xf32>
    %45 = vector.shape_cast %44 : vector<16xf32> to vector<16x1xf32>
    %46 = vector.broadcast %45 : vector<16x1xf32> to vector<16x16xf32>
    %47 = arith.divf %43, %46 : vector<16x16xf32>
    %48 = arith.truncf %47 : vector<16x16xf32> to vector<16x16xbf16>
    %49 = arith.truncf %33 : vector<16x128xf32> to vector<16x128xbf16>
    %cst_19 = arith.constant dense<0.000000e+00> : vector<16x128xf32>
    %50 = tpu.matmul %48, %49, %cst_19 {dimension_numbers = #tpu.dot_dimension_numbers<[1], [0], [0], [1], [0, 0, 1, 1], [], []>} : vector<16x16xbf16>, vector<16x128xbf16>, vector<16x128xf32> -> vector<16x128xf32>
    %51 = arith.truncf %50 : vector<16x128xf32> to vector<16x128xbf16>
    %c0_20 = arith.constant 0 : index
    %c0_21 = arith.constant 0 : index
    %52 = vector.load %arg6[%c0_20, %c0_21] : memref<128x128xbf16, #tpu.memory_space<vmem>>, vector<128x128xbf16>
    %cst_22 = arith.constant dense<0.000000e+00> : vector<16x128xf32>
    %53 = tpu.matmul %51, %52, %cst_22 {dimension_numbers = #tpu.dot_dimension_numbers<[1], [0], [0], [1], [0, 0, 1, 1], [], []>} : vector<16x128xbf16>, vector<128x128xbf16>, vector<16x128xf32> -> vector<16x128xf32>
    %c0_23 = arith.constant 0 : index
    %c0_24 = arith.constant 0 : index
    %54 = vector.load %arg7[%c0_23, %c0_24] : memref<1x128xf32, #tpu.memory_space<vmem>>, vector<1x128xf32>
    %55 = vector.broadcast %54 : vector<1x128xf32> to vector<16x128xf32>
    %56 = arith.addf %53, %55 : vector<16x128xf32>
    %57 = arith.addf %0, %56 : vector<16x128xf32>
    %c0_25 = arith.constant 0 : index
    %c0_26 = arith.constant 0 : index
    %58 = vector.load %arg8[%c0_25, %c0_26] : memref<1x128xf32, #tpu.memory_space<vmem>>, vector<1x128xf32>
    %c0_27 = arith.constant 0 : index
    %c0_28 = arith.constant 0 : index
    %59 = vector.load %arg9[%c0_27, %c0_28] : memref<1x128xf32, #tpu.memory_space<vmem>>, vector<1x128xf32>
    %cst_29 = arith.constant dense<0.000000e+00> : vector<16xf32>
    %60 = vector.multi_reduction <add>, %57, %cst_29 [1] : vector<16x128xf32> to vector<16xf32>
    %61 = vector.shape_cast %60 : vector<16xf32> to vector<16x1xf32>
    %cst_30 = arith.constant 1.280000e+02 : f32
    %62 = vector.broadcast %cst_30 : f32 to vector<16x1xf32>
    %63 = arith.divf %61, %62 : vector<16x1xf32>
    %64 = vector.broadcast %63 : vector<16x1xf32> to vector<16x128xf32>
    %65 = arith.subf %57, %64 : vector<16x128xf32>
    %66 = arith.mulf %65, %65 : vector<16x128xf32>
    %cst_31 = arith.constant dense<0.000000e+00> : vector<16xf32>
    %67 = vector.multi_reduction <add>, %66, %cst_31 [1] : vector<16x128xf32> to vector<16xf32>
    %68 = vector.shape_cast %67 : vector<16xf32> to vector<16x1xf32>
    %cst_32 = arith.constant 1.280000e+02 : f32
    %69 = vector.broadcast %cst_32 : f32 to vector<16x1xf32>
    %70 = arith.divf %68, %69 : vector<16x1xf32>
    %71 = vector.broadcast %63 : vector<16x1xf32> to vector<16x128xf32>
    %72 = arith.subf %57, %71 : vector<16x128xf32>
    %cst_33 = arith.constant 9.99999974E-6 : f32
    %73 = vector.broadcast %cst_33 : f32 to vector<16x1xf32>
    %74 = arith.addf %70, %73 : vector<16x1xf32>
    %75 = math.rsqrt %74 : vector<16x1xf32>
    %76 = vector.broadcast %75 : vector<16x1xf32> to vector<16x128xf32>
    %77 = arith.mulf %72, %76 : vector<16x128xf32>
    %78 = vector.broadcast %58 : vector<1x128xf32> to vector<16x128xf32>
    %79 = arith.mulf %77, %78 : vector<16x128xf32>
    %80 = vector.broadcast %59 : vector<1x128xf32> to vector<16x128xf32>
    %81 = arith.addf %79, %80 : vector<16x128xf32>
    %82 = arith.truncf %81 : vector<16x128xf32> to vector<16x128xbf16>
    %c0_34 = arith.constant 0 : index
    %c0_35 = arith.constant 0 : index
    %83 = vector.load %arg10[%c0_34, %c0_35] : memref<128x512xbf16, #tpu.memory_space<vmem>>, vector<128x512xbf16>
    %cst_36 = arith.constant dense<0.000000e+00> : vector<16x512xf32>
    %84 = tpu.matmul %82, %83, %cst_36 {dimension_numbers = #tpu.dot_dimension_numbers<[1], [0], [0], [1], [0, 0, 1, 1], [], []>} : vector<16x128xbf16>, vector<128x512xbf16>, vector<16x512xf32> -> vector<16x512xf32>
    %c0_37 = arith.constant 0 : index
    %c0_38 = arith.constant 0 : index
    %85 = vector.load %arg11[%c0_37, %c0_38] : memref<1x512xf32, #tpu.memory_space<vmem>>, vector<1x512xf32>
    %86 = vector.broadcast %85 : vector<1x512xf32> to vector<16x512xf32>
    %87 = arith.addf %84, %86 : vector<16x512xf32>
    %88 = arith.mulf %87, %87 : vector<16x512xf32>
    %89 = arith.mulf %87, %88 : vector<16x512xf32>
    %cst_39 = arith.constant 4.471500e-02 : f32
    %90 = vector.broadcast %cst_39 : f32 to vector<16x512xf32>
    %91 = arith.mulf %90, %89 : vector<16x512xf32>
    %92 = arith.addf %87, %91 : vector<16x512xf32>
    %cst_40 = arith.constant 0.797884583 : f32
    %93 = vector.broadcast %cst_40 : f32 to vector<16x512xf32>
    %94 = arith.mulf %93, %92 : vector<16x512xf32>
    %95 = math.tanh %94 : vector<16x512xf32>
    %cst_41 = arith.constant 1.000000e+00 : f32
    %96 = vector.broadcast %cst_41 : f32 to vector<16x512xf32>
    %97 = arith.addf %96, %95 : vector<16x512xf32>
    %cst_42 = arith.constant 5.000000e-01 : f32
    %98 = vector.broadcast %cst_42 : f32 to vector<16x512xf32>
    %99 = arith.mulf %98, %97 : vector<16x512xf32>
    %100 = arith.mulf %87, %99 : vector<16x512xf32>
    %101 = arith.truncf %100 : vector<16x512xf32> to vector<16x512xbf16>
    %c0_43 = arith.constant 0 : index
    %c0_44 = arith.constant 0 : index
    %102 = vector.load %arg12[%c0_43, %c0_44] : memref<512x128xbf16, #tpu.memory_space<vmem>>, vector<512x128xbf16>
    %cst_45 = arith.constant dense<0.000000e+00> : vector<16x128xf32>
    %103 = tpu.matmul %101, %102, %cst_45 {dimension_numbers = #tpu.dot_dimension_numbers<[1], [0], [0], [1], [0, 0, 1, 1], [], []>} : vector<16x512xbf16>, vector<512x128xbf16>, vector<16x128xf32> -> vector<16x128xf32>
    %c0_46 = arith.constant 0 : index
    %c0_47 = arith.constant 0 : index
    %104 = vector.load %arg13[%c0_46, %c0_47] : memref<1x128xf32, #tpu.memory_space<vmem>>, vector<1x128xf32>
    %105 = vector.broadcast %104 : vector<1x128xf32> to vector<16x128xf32>
    %106 = arith.addf %103, %105 : vector<16x128xf32>
    %107 = arith.addf %57, %106 : vector<16x128xf32>
    %c0_48 = arith.constant 0 : index
    %c0_49 = arith.constant 0 : index
    %108 = vector.load %arg17[%c0_48, %c0_49] : memref<2x16xf32, #tpu.memory_space<vmem>>, vector<2x16xf32>
    %cst_50 = arith.constant dense<0.000000e+00> : vector<2x128xf32>
    %109 = tpu.matmul %108, %107, %cst_50 {dimension_numbers = #tpu.dot_dimension_numbers<[1], [0], [0], [1], [0, 0, 1, 1], [], []>} : vector<2x16xf32>, vector<16x128xf32>, vector<2x128xf32> -> vector<2x128xf32>
    %c0_51 = arith.constant 0 : index
    %c0_52 = arith.constant 0 : index
    %110 = vector.load %arg14[%c0_51, %c0_52] : memref<1x128xf32, #tpu.memory_space<vmem>>, vector<1x128xf32>
    %c0_53 = arith.constant 0 : index
    %c0_54 = arith.constant 0 : index
    %111 = vector.load %arg15[%c0_53, %c0_54] : memref<1x128xf32, #tpu.memory_space<vmem>>, vector<1x128xf32>
    %c0_55 = arith.constant 0 : index
    %c0_56 = arith.constant 0 : index
    %112 = vector.load %arg16[%c0_55, %c0_56] : memref<128x128xbf16, #tpu.memory_space<vmem>>, vector<128x128xbf16>
    %cst_57 = arith.constant dense<0.000000e+00> : vector<2xf32>
    %113 = vector.multi_reduction <add>, %109, %cst_57 [1] : vector<2x128xf32> to vector<2xf32>
    %114 = vector.shape_cast %113 : vector<2xf32> to vector<2x1xf32>
    %cst_58 = arith.constant 1.280000e+02 : f32
    %115 = vector.broadcast %cst_58 : f32 to vector<2x1xf32>
    %116 = arith.divf %114, %115 : vector<2x1xf32>
    %117 = vector.broadcast %116 : vector<2x1xf32> to vector<2x128xf32>
    %118 = arith.subf %109, %117 : vector<2x128xf32>
    %119 = arith.mulf %118, %118 : vector<2x128xf32>
    %cst_59 = arith.constant dense<0.000000e+00> : vector<2xf32>
    %120 = vector.multi_reduction <add>, %119, %cst_59 [1] : vector<2x128xf32> to vector<2xf32>
    %121 = vector.shape_cast %120 : vector<2xf32> to vector<2x1xf32>
    %cst_60 = arith.constant 1.280000e+02 : f32
    %122 = vector.broadcast %cst_60 : f32 to vector<2x1xf32>
    %123 = arith.divf %121, %122 : vector<2x1xf32>
    %124 = vector.broadcast %116 : vector<2x1xf32> to vector<2x128xf32>
    %125 = arith.subf %109, %124 : vector<2x128xf32>
    %cst_61 = arith.constant 9.99999974E-6 : f32
    %126 = vector.broadcast %cst_61 : f32 to vector<2x1xf32>
    %127 = arith.addf %123, %126 : vector<2x1xf32>
    %128 = math.rsqrt %127 : vector<2x1xf32>
    %129 = vector.broadcast %128 : vector<2x1xf32> to vector<2x128xf32>
    %130 = arith.mulf %125, %129 : vector<2x128xf32>
    %131 = vector.broadcast %110 : vector<1x128xf32> to vector<2x128xf32>
    %132 = arith.mulf %130, %131 : vector<2x128xf32>
    %133 = vector.broadcast %111 : vector<1x128xf32> to vector<2x128xf32>
    %134 = arith.addf %132, %133 : vector<2x128xf32>
    %135 = arith.truncf %134 : vector<2x128xf32> to vector<2x128xbf16>
    %cst_62 = arith.constant dense<0.000000e+00> : vector<2x128xf32>
    %136 = tpu.matmul %135, %112, %cst_62 {dimension_numbers = #tpu.dot_dimension_numbers<[1], [0], [0], [1], [0, 0, 1, 1], [], []>} : vector<2x128xbf16>, vector<128x128xbf16>, vector<2x128xf32> -> vector<2x128xf32>
    %137 = arith.mulf %136, %136 : vector<2x128xf32>
    %cst_63 = arith.constant dense<0.000000e+00> : vector<2xf32>
    %138 = vector.multi_reduction <add>, %137, %cst_63 [1] : vector<2x128xf32> to vector<2xf32>
    %139 = vector.shape_cast %138 : vector<2xf32> to vector<2x1xf32>
    %cst_64 = arith.constant 1.000000e-24 : f32
    %140 = vector.broadcast %cst_64 : f32 to vector<2x1xf32>
    %141 = arith.maximumf %139, %140 : vector<2x1xf32>
    %142 = math.rsqrt %141 : vector<2x1xf32>
    %143 = vector.broadcast %142 : vector<2x1xf32> to vector<2x128xf32>
    %144 = arith.mulf %136, %143 : vector<2x128xf32>
    %145 = arith.truncf %144 : vector<2x128xf32> to vector<2x128xbf16>
    %c0_65 = arith.constant 0 : index
    %c0_66 = arith.constant 0 : index
    %146 = vector.load %arg19[%c0_65, %c0_66] : memref<2x128xbf16, #tpu.memory_space<vmem>>, vector<2x128xbf16>
    tpu.vector_store %arg19[%c0_65, %c0_66], %145 {strides = array<i32>} : memref<2x128xbf16, #tpu.memory_space<vmem>>, vector<2x128xbf16>,
    return
  }
  func.func @transform_0(%arg0: i32) -> (i32, i32) {
    %c0_i32 = arith.constant 0 : i32
    %c0_i32_0 = arith.constant 0 : i32
    %c0_i32_1 = arith.constant 0 : i32
    return %c0_i32, %c0_i32_0 : i32, i32
  }
  func.func @transform_1(%arg0: i32) -> (i32, i32) {
    %c0_i32 = arith.constant 0 : i32
    %c0_i32_0 = arith.constant 0 : i32
    %c0_i32_1 = arith.constant 0 : i32
    return %c0_i32, %c0_i32_0 : i32, i32
  }
  func.func @transform_2(%arg0: i32) -> (i32, i32) {
    %c0_i32 = arith.constant 0 : i32
    %c0_i32_0 = arith.constant 0 : i32
    %c0_i32_1 = arith.constant 0 : i32
    return %c0_i32, %c0_i32_0 : i32, i32
  }
  func.func @transform_3(%arg0: i32) -> (i32, i32) {
    %c0_i32 = arith.constant 0 : i32
    %c0_i32_0 = arith.constant 0 : i32
    %c0_i32_1 = arith.constant 0 : i32
    return %c0_i32, %c0_i32_0 : i32, i32
  }
  func.func @transform_4(%arg0: i32) -> (i32, i32) {
    %c0_i32 = arith.constant 0 : i32
    %c0_i32_0 = arith.constant 0 : i32
    %c0_i32_1 = arith.constant 0 : i32
    return %c0_i32, %c0_i32_0 : i32, i32
  }
  func.func @transform_5(%arg0: i32) -> (i32, i32) {
    %c0_i32 = arith.constant 0 : i32
    %c0_i32_0 = arith.constant 0 : i32
    %c0_i32_1 = arith.constant 0 : i32
    return %c0_i32, %c0_i32_0 : i32, i32
  }
  func.func @transform_6(%arg0: i32) -> (i32, i32) {
    %c0_i32 = arith.constant 0 : i32
    %c0_i32_0 = arith.constant 0 : i32
    %c0_i32_1 = arith.constant 0 : i32
    return %c0_i32, %c0_i32_0 : i32, i32
  }
  func.func @transform_7(%arg0: i32) -> (i32, i32) {
    %c0_i32 = arith.constant 0 : i32
    %c0_i32_0 = arith.constant 0 : i32
    %c0_i32_1 = arith.constant 0 : i32
    return %c0_i32, %c0_i32_0 : i32, i32
  }
  func.func @transform_8(%arg0: i32) -> (i32, i32) {
    %c0_i32 = arith.constant 0 : i32
    %c0_i32_0 = arith.constant 0 : i32
    %c0_i32_1 = arith.constant 0 : i32
    return %c0_i32, %c0_i32_0 : i32, i32
  }
  func.func @transform_9(%arg0: i32) -> (i32, i32) {
    %c0_i32 = arith.constant 0 : i32
    %c0_i32_0 = arith.constant 0 : i32
    %c0_i32_1 = arith.constant 0 : i32
    return %c0_i32, %c0_i32_0 : i32, i32
  }
  func.func @transform_10(%arg0: i32) -> (i32, i32) {
    %c0_i32 = arith.constant 0 : i32
    %c0_i32_0 = arith.constant 0 : i32
    %c0_i32_1 = arith.constant 0 : i32
    return %c0_i32, %c0_i32_0 : i32, i32
  }
  func.func @transform_11(%arg0: i32) -> (i32, i32) {
    %c0_i32 = arith.constant 0 : i32
    %c0_i32_0 = arith.constant 0 : i32
    %c0_i32_1 = arith.constant 0 : i32
    return %c0_i32, %c0_i32_0 : i32, i32
  }
  func.func @transform_12(%arg0: i32) -> (i32, i32) {
    %c0_i32 = arith.constant 0 : i32
    %c0_i32_0 = arith.constant 0 : i32
    %c0_i32_1 = arith.constant 0 : i32
    return %c0_i32, %c0_i32_0 : i32, i32
  }
  func.func @transform_13(%arg0: i32) -> (i32, i32) {
    %c0_i32 = arith.constant 0 : i32
    %c0_i32_0 = arith.constant 0 : i32
    %c0_i32_1 = arith.constant 0 : i32
    return %c0_i32, %c0_i32_0 : i32, i32
  }
  func.func @transform_14(%arg0: i32) -> (i32, i32) {
    %c0_i32 = arith.constant 0 : i32
    %c0_i32_0 = arith.constant 0 : i32
    %c0_i32_1 = arith.constant 0 : i32
    return %c0_i32, %c0_i32_0 : i32, i32
  }
  func.func @transform_15(%arg0: i32) -> (i32, i32) {
    %c0_i32 = arith.constant 0 : i32
    %c0_i32_0 = arith.constant 0 : i32
    %c0_i32_1 = arith.constant 0 : i32
    return %c0_i32, %c0_i32_0 : i32, i32
  }
  func.func @transform_16(%arg0: i32) -> (i32, i32) {
    %c0_i32 = arith.constant 0 : i32
    %c0_i32_0 = arith.constant 0 : i32
    %c0_i32_1 = arith.constant 0 : i32
    return %c0_i32, %c0_i32_0 : i32, i32
  }
  func.func @transform_17(%arg0: i32) -> (i32, i32) {
    %c0_i32 = arith.constant 0 : i32
    %c0_i32_0 = arith.constant 0 : i32
    %c0_i32_1 = arith.constant 0 : i32
    return %c0_i32, %c0_i32_0 : i32, i32
  }
  func.func @transform_18(%arg0: i32) -> (i32, i32) {
    %c0_i32 = arith.constant 0 : i32
    %c0_i32_0 = arith.constant 0 : i32
    %c0_i32_1 = arith.constant 0 : i32
    return %c0_i32, %c0_i32_0 : i32, i32
  }
}

</mosaic_0001>

<llo_original>
// kernel: eq.61
$region0: #{eq.61}
  %s0 = inlined_call_operand.vmem [shape: s32[2,5], index: 0, kind: input, shape index: {}]
  %s1 = inlined_call_operand.vmem [shape: s32[10], index: 1, kind: output, shape index: {}]
  $region1: #{eq.61} parent=0
    #allocation0 [shape = 'u8[4096]{0}', space=vmem, size = 0x1000, scoped, tag = 'scoped mem for output reshape']
    #allocation1 [shape = 'u8[4096]{0}', space=vmem, size = 0x1000, scoped, tag = 'scoped mem for input reshape']
    %s3 = sshll.u32 1, 2
    %s4 = ssub.s32 %s3, 1
    %v5 = vld [vmem:[%s0] sm:%s4]
    %6 = vst [vmem:[#allocation1] sm:%s4] %v5
    %v7 = vld [vmem:[#allocation1] sm:$0x1]
    %vm8 = vcmask 39936
    %9 = vst.msk [vmem:[#allocation0] sm:$0x1] %vm8, %v7
    %s10 = scalar_lea.vmem [#allocation1], 1
    %v11 = vld [vmem:[%s10] sm:$0x1]
    %12 = vrot.lane.b32.xlu0 %v11, 5
    %v13 = vpop.permute.xlu0 %12
    %vm14 = vcmask 80936
    %15 = vst.msk [vmem:[#allocation0] sm:$0x1] %vm14, %v13
    %s17 = sshll.u32 1, 1
    %s18 = ssub.s32 %s17, 1
    %v20 = vld [vmem:[#allocation0] sm:%s18]
    %s21 = sshll.u32 1, 1
    %s22 = ssub.s32 %s21, 1
    %23 = vst [vmem:[%s1] sm:%s22] %v20

// kernel: _lambda_.3
$region0: #{_lambda_.3}
  #allocation0 [shape = 'u32[]', space=smem, size = 0x4, offset = 0x4, fixed_abs, tag = 'smem constant byte address 0x4 - core index']
  #allocation1 [shape = 'u32[144,128]{1,0:T(1,128)}', space=vmem, size = 0x12000, scoped, tag = 'internal scratch']
  %s0 = inlined_call_operand.vmem [shape: f32[16,128], index: 0, kind: input, shape index: {}]
  %s1 = inlined_call_operand.vmem [shape: f32[1,128], index: 1, kind: input, shape index: {}, may-alias: {1,7,13}]
  %s2 = inlined_call_operand.vmem [shape: f32[1,128], index: 2, kind: input, shape index: {}, may-alias: {2,6,8,12,14}]
  %s3 = inlined_call_operand.vmem [shape: bf16[128,384], index: 3, kind: input, shape index: {}]
  %s4 = inlined_call_operand.vmem [shape: f32[1,384], index: 4, kind: input, shape index: {}]
  %s5 = inlined_call_operand.vmem [shape: bf16[128,128], index: 5, kind: input, shape index: {}]
  %s6 = inlined_call_operand.vmem [shape: f32[1,128], index: 6, kind: input, shape index: {}, may-alias: {2,6,8,12,14}]
  %s7 = inlined_call_operand.vmem [shape: f32[1,128], index: 7, kind: input, shape index: {}, may-alias: {1,7,13}]
  %s8 = inlined_call_operand.vmem [shape: f32[1,128], index: 8, kind: input, shape index: {}, may-alias: {2,6,8,12,14}]
  %s9 = inlined_call_operand.vmem [shape: bf16[128,512], index: 9, kind: input, shape index: {}]
  %s10 = inlined_call_operand.vmem [shape: f32[1,512], index: 10, kind: input, shape index: {}]
  %s11 = inlined_call_operand.vmem [shape: bf16[512,128], index: 11, kind: input, shape index: {}]
  %s12 = inlined_call_operand.vmem [shape: f32[1,128], index: 12, kind: input, shape index: {}, may-alias: {2,6,8,12,14}]
  %s13 = inlined_call_operand.vmem [shape: f32[1,128], index: 13, kind: input, shape index: {}, may-alias: {1,7,13}]
  %s14 = inlined_call_operand.vmem [shape: f32[1,128], index: 14, kind: input, shape index: {}, may-alias: {2,6,8,12,14}]
  %s15 = inlined_call_operand.vmem [shape: bf16[128,128], index: 15, kind: input, shape index: {}]
  %s16 = inlined_call_operand.vmem [shape: f32[2,16], index: 16, kind: input, shape index: {}]
  %s17 = inlined_call_operand.vmem [shape: f32[16,16], index: 17, kind: input, shape index: {}]
  %s18 = inlined_call_operand.hbm [shape: bf16[2,128], index: 18, kind: output, shape index: {}]
  %s19 = sld [smem:[#allocation0]]
  $region82: #{_lambda_.3} parent=0
    _
  %s21 = ssub.s32 1, %s19
  %s22 = scalar_select 0, %s21, %s19
  $region1: #{_lambda_.3} parent=0
    #allocation2 [shape = 'u8[512]{0}', space=vmem, size = 0x400, scoped, tag = 'output window, operand 0, single buffered']
    #allocation3 [shape = 's32[1]{0}', space=sflag, size = 0x4, scoped, tag = 'scoped memory for _lambda_.3']
    %23 = vsyncpa [#allocation3], 0
    // Predicated region
    $region2: #{_lambda_.3} parent=1 // pred_check
      _
    $region3: #{_lambda_.3} parent=1 // pred_check_branch
      %25 = sbr.rel (0) target = $region5
    $region4: #{_lambda_.3} parent=1 // pred_region
      _
    $region5: #{_lambda_.3} parent=1 // pred_fallthru
      _
    // Predicated region
    $region6: #{_lambda_.3} parent=1 // pred_check
      _
    $region7: #{_lambda_.3} parent=1 // pred_check_branch
      %27 = sbr.rel (0) target = $region9
    $region8: #{_lambda_.3} parent=1 // pred_region
      _
    $region9: #{_lambda_.3} parent=1 // pred_fallthru
      _
    // Predicated region
    $region10: #{_lambda_.3} parent=1 // pred_check
      _
    $region11: #{_lambda_.3} parent=1 // pred_check_branch
      %29 = sbr.rel (0) target = $region13
    $region12: #{_lambda_.3} parent=1 // pred_region
      _
    $region13: #{_lambda_.3} parent=1 // pred_fallthru
      _
    // Predicated region
    $region14: #{_lambda_.3} parent=1 // pred_check
      _
    $region15: #{_lambda_.3} parent=1 // pred_check_branch
      %31 = sbr.rel (0) target = $region17
    $region16: #{_lambda_.3} parent=1 // pred_region
      _
    $region17: #{_lambda_.3} parent=1 // pred_fallthru
      _
    // Predicated region
    $region18: #{_lambda_.3} parent=1 // pred_check
      _
    $region19: #{_lambda_.3} parent=1 // pred_check_branch
      %33 = sbr.rel (0) target = $region21
    $region20: #{_lambda_.3} parent=1 // pred_region
      _
    $region21: #{_lambda_.3} parent=1 // pred_fallthru
      _
    // Predicated region
    $region22: #{_lambda_.3} parent=1 // pred_check
      _
    $region23: #{_lambda_.3} parent=1 // pred_check_branch
      %35 = sbr.rel (0) target = $region25
    $region24: #{_lambda_.3} parent=1 // pred_region
      _
    $region25: #{_lambda_.3} parent=1 // pred_fallthru
      _
    // Predicated region
    $region26: #{_lambda_.3} parent=1 // pred_check
      _
    $region27: #{_lambda_.3} parent=1 // pred_check_branch
      %37 = sbr.rel (0) target = $region29
    $region28: #{_lambda_.3} parent=1 // pred_region
      _
    $region29: #{_lambda_.3} parent=1 // pred_fallthru
      _
    // Predicated region
    $region30: #{_lambda_.3} parent=1 // pred_check
      _
    $region31: #{_lambda_.3} parent=1 // pred_check_branch
      %39 = sbr.rel (0) target = $region33
    $region32: #{_lambda_.3} parent=1 // pred_region
      _
    $region33: #{_lambda_.3} parent=1 // pred_fallthru
      _
    // Predicated region
    $region34: #{_lambda_.3} parent=1 // pred_check
      _
    $region35: #{_lambda_.3} parent=1 // pred_check_branch
      %41 = sbr.rel (0) target = $region37
    $region36: #{_lambda_.3} parent=1 // pred_region
      _
    $region37: #{_lambda_.3} parent=1 // pred_fallthru
      _
    // Predicated region
    $region38: #{_lambda_.3} parent=1 // pred_check
      _
    $region39: #{_lambda_.3} parent=1 // pred_check_branch
      %43 = sbr.rel (0) target = $region41
    $region40: #{_lambda_.3} parent=1 // pred_region
      _
    $region41: #{_lambda_.3} parent=1 // pred_fallthru
      _
    // Predicated region
    $region42: #{_lambda_.3} parent=1 // pred_check
      _
    $region43: #{_lambda_.3} parent=1 // pred_check_branch
      %45 = sbr.rel (0) target = $region45
    $region44: #{_lambda_.3} parent=1 // pred_region
      _
    $region45: #{_lambda_.3} parent=1 // pred_fallthru
      _
    // Predicated region
    $region46: #{_lambda_.3} parent=1 // pred_check
      _
    $region47: #{_lambda_.3} parent=1 // pred_check_branch
      %47 = sbr.rel (0) target = $region49
    $region48: #{_lambda_.3} parent=1 // pred_region
      _
    $region49: #{_lambda_.3} parent=1 // pred_fallthru
      _
    // Predicated region
    $region50: #{_lambda_.3} parent=1 // pred_check
      _
    $region51: #{_lambda_.3} parent=1 // pred_check_branch
      %49 = sbr.rel (0) target = $region53
    $region52: #{_lambda_.3} parent=1 // pred_region
      _
    $region53: #{_lambda_.3} parent=1 // pred_fallthru
      _
    // Predicated region
    $region54: #{_lambda_.3} parent=1 // pred_check
      _
    $region55: #{_lambda_.3} parent=1 // pred_check_branch
      %51 = sbr.rel (0) target = $region57
    $region56: #{_lambda_.3} parent=1 // pred_region
      _
    $region57: #{_lambda_.3} parent=1 // pred_fallthru
      _
    // Predicated region
    $region58: #{_lambda_.3} parent=1 // pred_check
      _
    $region59: #{_lambda_.3} parent=1 // pred_check_branch
      %53 = sbr.rel (0) target = $region61
    $region60: #{_lambda_.3} parent=1 // pred_region
      _
    $region61: #{_lambda_.3} parent=1 // pred_fallthru
      _
    // Predicated region
    $region62: #{_lambda_.3} parent=1 // pred_check
      _
    $region63: #{_lambda_.3} parent=1 // pred_check_branch
      %55 = sbr.rel (0) target = $region65
    $region64: #{_lambda_.3} parent=1 // pred_region
      _
    $region65: #{_lambda_.3} parent=1 // pred_fallthru
      _
    // Predicated region
    $region66: #{_lambda_.3} parent=1 // pred_check
      _
    $region67: #{_lambda_.3} parent=1 // pred_check_branch
      %57 = sbr.rel (0) target = $region69
    $region68: #{_lambda_.3} parent=1 // pred_region
      _
    $region69: #{_lambda_.3} parent=1 // pred_fallthru
      _
    // Predicated region
    $region70: #{_lambda_.3} parent=1 // pred_check
      _
    $region71: #{_lambda_.3} parent=1 // pred_check_branch
      %59 = sbr.rel (0) target = $region73
    $region72: #{_lambda_.3} parent=1 // pred_region
      _
    $region73: #{_lambda_.3} parent=1 // pred_fallthru
      _
    %v61 = vld [vmem:[%s0] sm:$0xff]
    %v62 = vld [vmem:[%s0 + $0x8] sm:$0xff]
    %v63 = vld [vmem:[%s1] sm:$0x1]
    %v64 = vld [vmem:[%s2] sm:$0x1]
    %65 = vadd.xlane.f32.xlu0 %v61
    %v66 = vpop.xlane.xlu0 %65
    %67 = vadd.xlane.f32.xlu0 %v62
    %v68 = vpop.xlane.xlu0 %67
    %v69 = vrcp.pop 128.0
    %v70 = vmul.f32 %v66, %v69
    %v71 = vmul.f32 %v68, %v69
    %v72 = vsub.f32 %v61, %v70
    %v73 = vsub.f32 %v62, %v71
    %v74 = vmul.f32 %v72, %v72
    %v75 = vmul.f32 %v73, %v73
    %76 = vadd.xlane.f32.xlu0 %v74
    %v77 = vpop.xlane.xlu0 %76
    %78 = vadd.xlane.f32.xlu0 %v75
    %v79 = vpop.xlane.xlu0 %78
    %v80 = vmul.f32 %v77, %v69
    %v81 = vmul.f32 %v79, %v69
    %v82 = vadd.f32 %v80, 1e-05
    %v83 = vadd.f32 %v81, 1e-05
    %v84 = vrsqrt.pop %v82
    %v85 = vrsqrt.pop %v83
    %v86 = vmul.f32 %v72, %v84
    %v87 = vmul.f32 %v73, %v85
    %v89 = vlaneseq
    %v90 = vshrl.u32 %v89, 7
    %v91 = vsub.s32 0, %v90
    %v92 = vrot.slane %v63, %v91
    %v94 = vmul.f32 %v86, %v92
    %v95 = vmul.f32 %v87, %v92
    %v97 = vlaneseq
    %v98 = vshrl.u32 %v97, 7
    %v99 = vsub.s32 0, %v98
    %v100 = vrot.slane %v64, %v99
    %v102 = vadd.f32 %v94, %v100
    %v103 = vadd.f32 %v95, %v100
    %v104 = vpack.c.bf16 %v103, %v102
    %v105 = vld [vmem:[%s3] sm:$0xff]
    %v106 = vld [vmem:[%s3 + $0x8] sm:$0xf]
    %v107 = vld [vmem:[%s3 + $0xc] sm:$0xff]
    %v108 = vld [vmem:[%s3 + $0x14] sm:$0xf]
    %v109 = vld [vmem:[%s3 + $0x18] sm:$0xff]
    %v110 = vld [vmem:[%s3 + $0x20] sm:$0xf]
    %v111 = vld [vmem:[%s3 + $0x24] sm:$0xff]
    %v112 = vld [vmem:[%s3 + $0x2c] sm:$0xf]
    %v113 = vld [vmem:[%s3 + $0x30] sm:$0xff]
    %v114 = vld [vmem:[%s3 + $0x38] sm:$0xf]
    %v115 = vld [vmem:[%s3 + $0x3c] sm:$0xff]
    %v116 = vld [vmem:[%s3 + $0x44] sm:$0xf]
    %v117 = vld [vmem:[%s3 + $0x48] sm:$0xff]
    %v118 = vld [vmem:[%s3 + $0x50] sm:$0xf]
    %v119 = vld [vmem:[%s3 + $0x54] sm:$0xff]
    %v120 = vld [vmem:[%s3 + $0x5c] sm:$0xf]
    %v121 = vld [vmem:[%s3 + $0x60] sm:$0xff]
    %v122 = vld [vmem:[%s3 + $0x68] sm:$0xf]
    %v123 = vld [vmem:[%s3 + $0x6c] sm:$0xff]
    %v124 = vld [vmem:[%s3 + $0x74] sm:$0xf]
    %v125 = vld [vmem:[%s3 + $0x78] sm:$0xff]
    %v126 = vld [vmem:[%s3 + $0x80] sm:$0xf]
    %v127 = vld [vmem:[%s3 + $0x84] sm:$0xff]
    %v128 = vld [vmem:[%s3 + $0x8c] sm:$0xf]
    %v129 = vld [vmem:[%s3 + $0x90] sm:$0xff]
    %v130 = vld [vmem:[%s3 + $0x98] sm:$0xf]
    %v131 = vld [vmem:[%s3 + $0x9c] sm:$0xff]
    %v132 = vld [vmem:[%s3 + $0xa4] sm:$0xf]
    %v133 = vld [vmem:[%s3 + $0xa8] sm:$0xff]
    %v134 = vld [vmem:[%s3 + $0xb0] sm:$0xf]
    %v135 = vld [vmem:[%s3 + $0xb4] sm:$0xff]
    %v136 = vld [vmem:[%s3 + $0xbc] sm:$0xf]
    %v137 = vld [vmem:[%s4] sm:$0x7]
    %v139 = vlaneseq
    %v140 = vshrl.u32 %v139, 7
    %v141 = vsub.s32 0, %v140
    %v142 = vrot.slane %v137, %v141
    %v143 = vlaneseq
    %v144 = vshrl.u32 %v143, 7
    %v145 = vsub.s32 1, %v144
    %v146 = vrot.slane %v137, %v145
    %v147 = vlaneseq
    %v148 = vshrl.u32 %v147, 7
    %v149 = vsub.s32 2, %v148
    %v150 = vrot.slane %v137, %v149
    %v186 = vunpack.c.l.b16 %v105
    %v187 = vunpack.c.h.b16 %v105
    %v188 = vunpack.c.l.b16 %v106
    %v189 = vunpack.c.l.b16 %v107
    %v190 = vunpack.c.h.b16 %v107
    %v191 = vunpack.c.l.b16 %v108
    %v192 = vunpack.c.l.b16 %v109
    %v193 = vunpack.c.h.b16 %v109
    %v194 = vunpack.c.l.b16 %v110
    %v195 = vunpack.c.l.b16 %v111
    %v196 = vunpack.c.h.b16 %v111
    %v197 = vunpack.c.l.b16 %v112
    %v198 = vunpack.c.l.b16 %v113
    %v199 = vunpack.c.h.b16 %v113
    %v200 = vunpack.c.l.b16 %v114
    %v201 = vunpack.c.l.b16 %v115
    %v202 = vunpack.c.h.b16 %v115
    %v203 = vunpack.c.l.b16 %v116
    %v204 = vunpack.c.l.b16 %v117
    %v205 = vunpack.c.h.b16 %v117
    %v206 = vunpack.c.l.b16 %v118
    %v207 = vunpack.c.l.b16 %v119
    %v208 = vunpack.c.h.b16 %v119
    %v209 = vunpack.c.l.b16 %v120
    %v210 = vunpack.c.l.b16 %v121
    %v211 = vunpack.c.h.b16 %v121
    %v212 = vunpack.c.l.b16 %v122
    %v213 = vunpack.c.l.b16 %v123
    %v214 = vunpack.c.h.b16 %v123
    %v215 = vunpack.c.l.b16 %v124
    %v216 = vunpack.c.l.b16 %v125
    %v217 = vunpack.c.h.b16 %v125
    %v218 = vunpack.c.l.b16 %v126
    %v219 = vunpack.c.l.b16 %v127
    %v220 = vunpack.c.h.b16 %v127
    %v221 = vunpack.c.l.b16 %v128
    %v222 = vunpack.c.l.b16 %v129
    %v223 = vunpack.c.h.b16 %v129
    %v224 = vunpack.c.l.b16 %v130
    %v225 = vunpack.c.l.b16 %v131
    %v226 = vunpack.c.h.b16 %v131
    %v227 = vunpack.c.l.b16 %v132
    %v228 = vunpack.c.l.b16 %v133
    %v229 = vunpack.c.h.b16 %v133
    %v230 = vunpack.c.l.b16 %v134
    %v231 = vunpack.c.l.b16 %v135
    %v232 = vunpack.c.h.b16 %v135
    %v233 = vunpack.c.l.b16 %v136
    %v234 = vpack.c.b16 %v189, %v186
    %v235 = vpack.c.b16 %v190, %v187
    %v236 = vpack.c.b16 %v191, %v188
    %v237 = vpack.c.b16 %v195, %v192
    %v238 = vpack.c.b16 %v196, %v193
    %v239 = vpack.c.b16 %v197, %v194
    %v240 = vpack.c.b16 %v201, %v198
    %v241 = vpack.c.b16 %v202, %v199
    %v242 = vpack.c.b16 %v203, %v200
    %v243 = vpack.c.b16 %v207, %v204
    %v244 = vpack.c.b16 %v208, %v205
    %v245 = vpack.c.b16 %v209, %v206
    %v246 = vpack.c.b16 %v213, %v210
    %v247 = vpack.c.b16 %v214, %v211
    %v248 = vpack.c.b16 %v215, %v212
    %v249 = vpack.c.b16 %v219, %v216
    %v250 = vpack.c.b16 %v220, %v217
    %v251 = vpack.c.b16 %v221, %v218
    %v252 = vpack.c.b16 %v225, %v222
    %v253 = vpack.c.b16 %v226, %v223
    %v254 = vpack.c.b16 %v227, %v224
    %v255 = vpack.c.b16 %v231, %v228
    %v256 = vpack.c.b16 %v232, %v229
    %v257 = vpack.c.b16 %v233, %v230
    %282 = vmatprep.subr.bf16.mxu0 %v256
    %283 = vmatpush1.bf16.msra.mxu0 %v255
    %284 = vmatprep.subr.bf16.mxu0 %v253
    %285 = vmatpush1.bf16.msra.mxu0 %v252
    %286 = vmatprep.subr.bf16.mxu0 %v250
    %287 = vmatpush1.bf16.msra.mxu0 %v249
    %288 = vmatprep.subr.bf16.mxu0 %v247
    %289 = vmatpush1.bf16.msra.mxu0 %v246
    %290 = vmatprep.subr.bf16.mxu0 %v244
    %291 = vmatpush1.bf16.msra.mxu0 %v243
    %292 = vmatprep.subr.bf16.mxu0 %v241
    %293 = vmatpush1.bf16.msra.mxu0 %v240
    %294 = vmatprep.subr.bf16.mxu0 %v238
    %295 = vmatpush1.bf16.msra.mxu0 %v237
    %296 = vmatprep.subr.bf16.mxu0 %v235
    %297 = vmatpush1.bf16.msra.mxu0 %v234
    %298 = vmatprep.subr.bf16.mxu0 0
    %299 = vmatpush2.bf16.msra.mxu0 0
    %300 = vmatprep.subr.bf16.mxu0 0
    %301 = vmatpush2.bf16.msra.mxu0 0
    %302 = vmatprep.subr.bf16.mxu0 0
    %303 = vmatpush2.bf16.msra.mxu0 0
    %304 = vmatprep.subr.bf16.mxu0 0
    %305 = vmatpush2.bf16.msra.mxu0 0
    %306 = vmatprep.subr.bf16.mxu0 0
    %307 = vmatpush2.bf16.msra.mxu0 0
    %308 = vmatprep.subr.bf16.mxu0 0
    %309 = vmatpush2.bf16.msra.mxu0 0
    %310 = vmatprep.subr.bf16.mxu0 0
    %311 = vmatpush2.bf16.msra.mxu0 0
    %312 = vmatprep.subr.bf16.mxu0 0
    %313 = vmatpush2.bf16.msra.mxu0 0
    %314 = vmatprep.mubr.bf16.mxu0 0
    %315 = vmatmul.mubr.bf16.gmra.mxu0 %v104
    %v316 = vpop.f32.mrf.mxu0
    %v317 = vadd.f32 %v142, %v316
    %v318 = vpop.f32.mrf.mxu0
    %v319 = vadd.f32 %v146, %v318
    %v320 = vpop.f32.mrf.mxu0
    %v321 = vadd.f32 %v142, %v320
    %v322 = vpop.f32.mrf.mxu0
    %v323 = vadd.f32 %v146, %v322
    %324 = vdwg.mxu0
    %325 = vmatprep.subr.bf16.mxu0 0
    %326 = vmatpush1.bf16.msra.mxu0 %v257
    %327 = vmatprep.subr.bf16.mxu0 0
    %328 = vmatpush1.bf16.msra.mxu0 %v254
    %329 = vmatprep.subr.bf16.mxu0 0
    %330 = vmatpush1.bf16.msra.mxu0 %v251
    %331 = vmatprep.subr.bf16.mxu0 0
    %332 = vmatpush1.bf16.msra.mxu0 %v248
    %333 = vmatprep.subr.bf16.mxu0 0
    %334 = vmatpush1.bf16.msra.mxu0 %v245
    %335 = vmatprep.subr.bf16.mxu0 0
    %336 = vmatpush1.bf16.msra.mxu0 %v242
    %337 = vmatprep.subr.bf16.mxu0 0
    %338 = vmatpush1.bf16.msra.mxu0 %v239
    %339 = vmatprep.subr.bf16.mxu0 0
    %340 = vmatpush1.bf16.msra.mxu0 %v236
    %341 = vmatprep.subr.bf16.mxu0 0
    %342 = vmatpush2.bf16.msra.mxu0 0
    %343 = vmatprep.subr.bf16.mxu0 0
    %344 = vmatpush2.bf16.msra.mxu0 0
    %345 = vmatprep.subr.bf16.mxu0 0
    %346 = vmatpush2.bf16.msra.mxu0 0
    %347 = vmatprep.subr.bf16.mxu0 0
    %348 = vmatpush2.bf16.msra.mxu0 0
    %349 = vmatprep.subr.bf16.mxu0 0
    %350 = vmatpush2.bf16.msra.mxu0 0
    %351 = vmatprep.subr.bf16.mxu0 0
    %352 = vmatpush2.bf16.msra.mxu0 0
    %353 = vmatprep.subr.bf16.mxu0 0
    %354 = vmatpush2.bf16.msra.mxu0 0
    %355 = vmatprep.subr.bf16.mxu0 0
    %356 = vmatpush2.bf16.msra.mxu0 0
    %357 = vmatprep.mubr.bf16.mxu0 0
    %358 = vmatmul.mubr.bf16.gmra.mxu0 %v104
    %v359 = vpop.f32.mrf.mxu0
    %v360 = vadd.f32 %v150, %v359
    %v361 = vpop.f32.mrf.mxu0
    %v362 = vpop.f32.mrf.mxu0
    %v363 = vadd.f32 %v150, %v362
    %v364 = vpop.f32.mrf.mxu0
    %365 = vdwg.mxu0
    %v366 = vpack.c.bf16 %v321, %v317
    %v367 = vpack.c.bf16 %v323, %v319
    %v368 = vld [vmem:[%s17] sm:$0xff]
    %v369 = vld [vmem:[%s17 + $0x8] sm:$0xff]
    %370 = vmatprep.subr.bf16.mxu0 0
    %371 = vmatpush1.bf16.xpose.msra.mxu0 0
    %372 = vmatprep.subr.bf16.mxu0 0
    %373 = vmatpush1.bf16.xpose.msra.mxu0 0
    %374 = vmatprep.subr.bf16.mxu0 0
    %375 = vmatpush1.bf16.xpose.msra.mxu0 0
    %376 = vmatprep.subr.bf16.mxu0 0
    %377 = vmatpush1.bf16.xpose.msra.mxu0 0
    %378 = vmatprep.subr.bf16.mxu0 0
    %379 = vmatpush1.bf16.xpose.msra.mxu0 0
    %380 = vmatprep.subr.bf16.mxu0 0
    %381 = vmatpush1.bf16.xpose.msra.mxu0 0
    %382 = vmatprep.subr.bf16.mxu0 0
    %383 = vmatpush1.bf16.xpose.msra.mxu0 0
    %384 = vmatprep.subr.bf16.mxu0 0
    %385 = vmatpush1.bf16.xpose.msra.mxu0 %v367
    %386 = vmatprep.subr.bf16.mxu0 0
    %387 = vmatpush2.bf16.xpose.msra.mxu0 0
    %388 = vmatprep.subr.bf16.mxu0 0
    %389 = vmatpush2.bf16.xpose.msra.mxu0 0
    %390 = vmatprep.subr.bf16.mxu0 0
    %391 = vmatpush2.bf16.xpose.msra.mxu0 0
    %392 = vmatprep.subr.bf16.mxu0 0
    %393 = vmatpush2.bf16.xpose.msra.mxu0 0
    %394 = vmatprep.subr.bf16.mxu0 0
    %395 = vmatpush2.bf16.xpose.msra.mxu0 0
    %396 = vmatprep.subr.bf16.mxu0 0
    %397 = vmatpush2.bf16.xpose.msra.mxu0 0
    %398 = vmatprep.subr.bf16.mxu0 0
    %399 = vmatpush2.bf16.xpose.msra.mxu0 0
    %400 = vmatprep.subr.bf16.mxu0 0
    %401 = vmatpush2.bf16.xpose.msra.mxu0 0
    %402 = vmatprep.mubr.bf16.mxu0 0
    %403 = vmatmul.mubr.bf16.gmra.mxu0 %v366
    %v404 = vpop.f32.mrf.mxu0
    %v405 = vadd.f32 %v368, %v404
    %v406 = vpop.f32.mrf.mxu0
    %v407 = vpop.f32.mrf.mxu0
    %v408 = vadd.f32 %v369, %v407
    %v409 = vpop.f32.mrf.mxu0
    %410 = vdwg.mxu0
    %vm411 = vcmask 130048
    %v412 = vsel %vm411, %v405, -inf
    %413 = vmax.xlane.f32.xlu0 %v412
    %v414 = vpop.xlane.xlu0 %413
    %v415 = vsel %vm411, %v408, -inf
    %416 = vmax.xlane.f32.xlu0 %v415
    %v417 = vpop.xlane.xlu0 %416
    %v418 = vsub.f32 %v405, %v414
    %v419 = vsub.f32 %v408, %v417
    %v420 = vmul.f32 %v418, 1.442695
    %v421 = vpow.pop %v420
    %v422 = vmul.f32 %v419, 1.442695
    %v423 = vpow.pop %v422
    %v424 = vsel %vm411, %v421, 0.0
    %425 = vadd.xlane.f32.xlu0 %v424
    %v426 = vpop.xlane.xlu0 %425
    %v427 = vsel %vm411, %v423, 0.0
    %428 = vadd.xlane.f32.xlu0 %v427
    %v429 = vpop.xlane.xlu0 %428
    %v430 = vrcp.pop %v426
    %v431 = vmul.f32 %v421, %v430
    %v432 = vrcp.pop %v429
    %v433 = vmul.f32 %v423, %v432
    %v434 = vpack.c.bf16 %v433, %v431
    %v435 = vpack.c.bf16 %v363, %v360
    %v437 = vsel %vm411, %v434, 0
    %439 = vmatprep.subr.bf16.mxu0 0
    %440 = vmatpush1.bf16.msra.mxu0 0
    %441 = vmatprep.subr.bf16.mxu0 0
    %442 = vmatpush1.bf16.msra.mxu0 0
    %443 = vmatprep.subr.bf16.mxu0 0
    %444 = vmatpush1.bf16.msra.mxu0 0
    %445 = vmatprep.subr.bf16.mxu0 0
    %446 = vmatpush1.bf16.msra.mxu0 0
    %447 = vmatprep.subr.bf16.mxu0 0
    %448 = vmatpush1.bf16.msra.mxu0 0
    %449 = vmatprep.subr.bf16.mxu0 0
    %450 = vmatpush1.bf16.msra.mxu0 0
    %451 = vmatprep.subr.bf16.mxu0 0
    %452 = vmatpush1.bf16.msra.mxu0 0
    %453 = vmatprep.subr.bf16.mxu0 0
    %454 = vmatpush1.bf16.msra.mxu0 %v435
    %455 = vmatprep.subr.bf16.mxu0 0
    %456 = vmatpush2.bf16.msra.mxu0 0
    %457 = vmatprep.subr.bf16.mxu0 0
    %458 = vmatpush2.bf16.msra.mxu0 0
    %459 = vmatprep.subr.bf16.mxu0 0
    %460 = vmatpush2.bf16.msra.mxu0 0
    %461 = vmatprep.subr.bf16.mxu0 0
    %462 = vmatpush2.bf16.msra.mxu0 0
    %463 = vmatprep.subr.bf16.mxu0 0
    %464 = vmatpush2.bf16.msra.mxu0 0
    %465 = vmatprep.subr.bf16.mxu0 0
    %466 = vmatpush2.bf16.msra.mxu0 0
    %467 = vmatprep.subr.bf16.mxu0 0
    %468 = vmatpush2.bf16.msra.mxu0 0
    %469 = vmatprep.subr.bf16.mxu0 0
    %470 = vmatpush2.bf16.msra.mxu0 0
    %471 = vmatprep.mubr.bf16.mxu0 0
    %472 = vmatmul.mubr.bf16.gmra.mxu0 %v437
    %v473 = vpop.f32.mrf.mxu0
    %v474 = vadd.f32 0.0, %v473
    %v475 = vpop.f32.mrf.mxu0
    %v476 = vpop.f32.mrf.mxu0
    %v477 = vadd.f32 0.0, %v476
    %v478 = vpop.f32.mrf.mxu0
    %479 = vdwg.mxu0
    %v480 = vpack.c.bf16 %v477, %v474
    %v481 = vld [vmem:[%s5] sm:$0xf]
    %v482 = vld [vmem:[%s5 + $0x4] sm:$0xf]
    %v483 = vld [vmem:[%s5 + $0x8] sm:$0xf]
    %v484 = vld [vmem:[%s5 + $0xc] sm:$0xf]
    %v485 = vld [vmem:[%s5 + $0x10] sm:$0xf]
    %v486 = vld [vmem:[%s5 + $0x14] sm:$0xf]
    %v487 = vld [vmem:[%s5 + $0x18] sm:$0xf]
    %v488 = vld [vmem:[%s5 + $0x1c] sm:$0xf]
    %v489 = vld [vmem:[%s5 + $0x20] sm:$0xf]
    %v490 = vld [vmem:[%s5 + $0x24] sm:$0xf]
    %v491 = vld [vmem:[%s5 + $0x28] sm:$0xf]
    %v492 = vld [vmem:[%s5 + $0x2c] sm:$0xf]
    %v493 = vld [vmem:[%s5 + $0x30] sm:$0xf]
    %v494 = vld [vmem:[%s5 + $0x34] sm:$0xf]
    %v495 = vld [vmem:[%s5 + $0x38] sm:$0xf]
    %v496 = vld [vmem:[%s5 + $0x3c] sm:$0xf]
    %v497 = vld [vmem:[%s6] sm:$0x1]
    %v499 = vlaneseq
    %v500 = vshrl.u32 %v499, 7
    %v501 = vsub.s32 0, %v500
    %v502 = vrot.slane %v497, %v501
    %v520 = vunpack.c.l.b16 %v481
    %v521 = vunpack.c.l.b16 %v482
    %v522 = vunpack.c.l.b16 %v483
    %v523 = vunpack.c.l.b16 %v484
    %v524 = vunpack.c.l.b16 %v485
    %v525 = vunpack.c.l.b16 %v486
    %v526 = vunpack.c.l.b16 %v487
    %v527 = vunpack.c.l.b16 %v488
    %v528 = vunpack.c.l.b16 %v489
    %v529 = vunpack.c.l.b16 %v490
    %v530 = vunpack.c.l.b16 %v491
    %v531 = vunpack.c.l.b16 %v492
    %v532 = vunpack.c.l.b16 %v493
    %v533 = vunpack.c.l.b16 %v494
    %v534 = vunpack.c.l.b16 %v495
    %v535 = vunpack.c.l.b16 %v496
    %v536 = vpack.c.b16 %v521, %v520
    %v537 = vpack.c.b16 %v523, %v522
    %v538 = vpack.c.b16 %v525, %v524
    %v539 = vpack.c.b16 %v527, %v526
    %v540 = vpack.c.b16 %v529, %v528
    %v541 = vpack.c.b16 %v531, %v530
    %v542 = vpack.c.b16 %v533, %v532
    %v543 = vpack.c.b16 %v535, %v534
    %552 = vmatprep.subr.bf16.mxu0 0
    %553 = vmatpush1.bf16.msra.mxu0 %v543
    %554 = vmatprep.subr.bf16.mxu0 0
    %555 = vmatpush1.bf16.msra.mxu0 %v542
    %556 = vmatprep.subr.bf16.mxu0 0
    %557 = vmatpush1.bf16.msra.mxu0 %v541
    %558 = vmatprep.subr.bf16.mxu0 0
    %559 = vmatpush1.bf16.msra.mxu0 %v540
    %560 = vmatprep.subr.bf16.mxu0 0
    %561 = vmatpush1.bf16.msra.mxu0 %v539
    %562 = vmatprep.subr.bf16.mxu0 0
    %563 = vmatpush1.bf16.msra.mxu0 %v538
    %564 = vmatprep.subr.bf16.mxu0 0
    %565 = vmatpush1.bf16.msra.mxu0 %v537
    %566 = vmatprep.subr.bf16.mxu0 0
    %567 = vmatpush1.bf16.msra.mxu0 %v536
    %568 = vmatprep.subr.bf16.mxu0 0
    %569 = vmatpush2.bf16.msra.mxu0 0
    %570 = vmatprep.subr.bf16.mxu0 0
    %571 = vmatpush2.bf16.msra.mxu0 0
    %572 = vmatprep.subr.bf16.mxu0 0
    %573 = vmatpush2.bf16.msra.mxu0 0
    %574 = vmatprep.subr.bf16.mxu0 0
    %575 = vmatpush2.bf16.msra.mxu0 0
    %576 = vmatprep.subr.bf16.mxu0 0
    %577 = vmatpush2.bf16.msra.mxu0 0
    %578 = vmatprep.subr.bf16.mxu0 0
    %579 = vmatpush2.bf16.msra.mxu0 0
    %580 = vmatprep.subr.bf16.mxu0 0
    %581 = vmatpush2.bf16.msra.mxu0 0
    %582 = vmatprep.subr.bf16.mxu0 0
    %583 = vmatpush2.bf16.msra.mxu0 0
    %584 = vmatprep.mubr.bf16.mxu0 0
    %585 = vmatmul.mubr.bf16.gmra.mxu0 %v480
    %v586 = vpop.f32.mrf.mxu0
    %v587 = vadd.f32 %v502, %v586
    %v588 = vpop.f32.mrf.mxu0
    %v589 = vpop.f32.mrf.mxu0
    %v590 = vadd.f32 %v502, %v589
    %v591 = vpop.f32.mrf.mxu0
    %592 = vdwg.mxu0
    %v593 = vadd.f32 %v61, %v587
    %v594 = vadd.f32 %v62, %v590
    %v595 = vld [vmem:[%s7] sm:$0x1]
    %v596 = vld [vmem:[%s8] sm:$0x1]
    %597 = vadd.xlane.f32.xlu0 %v593
    %v598 = vpop.xlane.xlu0 %597
    %599 = vadd.xlane.f32.xlu0 %v594
    %v600 = vpop.xlane.xlu0 %599
    %v601 = vmul.f32 %v598, %v69
    %v602 = vmul.f32 %v600, %v69
    %v603 = vsub.f32 %v593, %v601
    %v604 = vsub.f32 %v594, %v602
    %v605 = vmul.f32 %v603, %v603
    %v606 = vmul.f32 %v604, %v604
    %607 = vadd.xlane.f32.xlu0 %v605
    %v608 = vpop.xlane.xlu0 %607
    %609 = vadd.xlane.f32.xlu0 %v606
    %v610 = vpop.xlane.xlu0 %609
    %v611 = vmul.f32 %v608, %v69
    %v612 = vmul.f32 %v610, %v69
    %v613 = vadd.f32 %v611, 1e-05
    %v614 = vadd.f32 %v612, 1e-05
    %v615 = vrsqrt.pop %v613
    %v616 = vrsqrt.pop %v614
    %v617 = vmul.f32 %v603, %v615
    %v618 = vmul.f32 %v604, %v616
    %v620 = vlaneseq
    %v621 = vshrl.u32 %v620, 7
    %v622 = vsub.s32 0, %v621
    %v623 = vrot.slane %v595, %v622
    %v625 = vmul.f32 %v617, %v623
    %v626 = vmul.f32 %v618, %v623
    %v628 = vlaneseq
    %v629 = vshrl.u32 %v628, 7
    %v630 = vsub.s32 0, %v629
    %v631 = vrot.slane %v596, %v630
    %v633 = vadd.f32 %v625, %v631
    %v634 = vadd.f32 %v626, %v631
    %v635 = vpack.c.bf16 %v634, %v633
    %v636 = vld [vmem:[%s9] sm:$0xff]
    %v637 = vld [vmem:[%s9 + $0x8] sm:$0xff]
    %v638 = vld [vmem:[%s9 + $0x10] sm:$0xff]
    %v639 = vld [vmem:[%s9 + $0x18] sm:$0xff]
    %v640 = vld [vmem:[%s9 + $0x20] sm:$0xff]
    %v641 = vld [vmem:[%s9 + $0x28] sm:$0xff]
    %v642 = vld [vmem:[%s9 + $0x30] sm:$0xff]
    %v643 = vld [vmem:[%s9 + $0x38] sm:$0xff]
    %v644 = vld [vmem:[%s9 + $0x40] sm:$0xff]
    %v645 = vld [vmem:[%s9 + $0x48] sm:$0xff]
    %v646 = vld [vmem:[%s9 + $0x50] sm:$0xff]
    %v647 = vld [vmem:[%s9 + $0x58] sm:$0xff]
    %v648 = vld [vmem:[%s9 + $0x60] sm:$0xff]
    %v649 = vld [vmem:[%s9 + $0x68] sm:$0xff]
    %v650 = vld [vmem:[%s9 + $0x70] sm:$0xff]
    %v651 = vld [vmem:[%s9 + $0x78] sm:$0xff]
    %v652 = vld [vmem:[%s9 + $0x80] sm:$0xff]
    %v653 = vld [vmem:[%s9 + $0x88] sm:$0xff]
    %v654 = vld [vmem:[%s9 + $0x90] sm:$0xff]
    %v655 = vld [vmem:[%s9 + $0x98] sm:$0xff]
    %v656 = vld [vmem:[%s9 + $0xa0] sm:$0xff]
    %v657 = vld [vmem:[%s9 + $0xa8] sm:$0xff]
    %v658 = vld [vmem:[%s9 + $0xb0] sm:$0xff]
    %v659 = vld [vmem:[%s9 + $0xb8] sm:$0xff]
    %v660 = vld [vmem:[%s9 + $0xc0] sm:$0xff]
    %v661 = vld [vmem:[%s9 + $0xc8] sm:$0xff]
    %v662 = vld [vmem:[%s9 + $0xd0] sm:$0xff]
    %v663 = vld [vmem:[%s9 + $0xd8] sm:$0xff]
    %v664 = vld [vmem:[%s9 + $0xe0] sm:$0xff]
    %v665 = vld [vmem:[%s9 + $0xe8] sm:$0xff]
    %v666 = vld [vmem:[%s9 + $0xf0] sm:$0xff]
    %v667 = vld [vmem:[%s9 + $0xf8] sm:$0xff]
    %v668 = vld [vmem:[%s10] sm:$0xf]
    %v670 = vlaneseq
    %v671 = vshrl.u32 %v670, 7
    %v672 = vsub.s32 0, %v671
    %v673 = vrot.slane %v668, %v672
    %v674 = vlaneseq
    %v675 = vshrl.u32 %v674, 7
    %v676 = vsub.s32 1, %v675
    %v677 = vrot.slane %v668, %v676
    %v678 = vlaneseq
    %v679 = vshrl.u32 %v678, 7
    %v680 = vsub.s32 2, %v679
    %v681 = vrot.slane %v668, %v680
    %v682 = vlaneseq
    %v683 = vshrl.u32 %v682, 7
    %v684 = vsub.s32 3, %v683
    %v685 = vrot.slane %v668, %v684
    %v722 = vunpack.c.l.b16 %v636
    %v723 = vunpack.c.h.b16 %v636
    %v724 = vunpack.c.l.b16 %v637
    %v725 = vunpack.c.h.b16 %v637
    %v726 = vunpack.c.l.b16 %v638
    %v727 = vunpack.c.h.b16 %v638
    %v728 = vunpack.c.l.b16 %v639
    %v729 = vunpack.c.h.b16 %v639
    %v730 = vunpack.c.l.b16 %v640
    %v731 = vunpack.c.h.b16 %v640
    %v732 = vunpack.c.l.b16 %v641
    %v733 = vunpack.c.h.b16 %v641
    %v734 = vunpack.c.l.b16 %v642
    %v735 = vunpack.c.h.b16 %v642
    %v736 = vunpack.c.l.b16 %v643
    %v737 = vunpack.c.h.b16 %v643
    %v738 = vunpack.c.l.b16 %v644
    %v739 = vunpack.c.h.b16 %v644
    %v740 = vunpack.c.l.b16 %v645
    %v741 = vunpack.c.h.b16 %v645
    %v742 = vunpack.c.l.b16 %v646
    %v743 = vunpack.c.h.b16 %v646
    %v744 = vunpack.c.l.b16 %v647
    %v745 = vunpack.c.h.b16 %v647
    %v746 = vunpack.c.l.b16 %v648
    %v747 = vunpack.c.h.b16 %v648
    %v748 = vunpack.c.l.b16 %v649
    %v749 = vunpack.c.h.b16 %v649
    %v750 = vunpack.c.l.b16 %v650
    %v751 = vunpack.c.h.b16 %v650
    %v752 = vunpack.c.l.b16 %v651
    %v753 = vunpack.c.h.b16 %v651
    %v754 = vunpack.c.l.b16 %v652
    %v755 = vunpack.c.h.b16 %v652
    %v756 = vunpack.c.l.b16 %v653
    %v757 = vunpack.c.h.b16 %v653
    %v758 = vunpack.c.l.b16 %v654
    %v759 = vunpack.c.h.b16 %v654
    %v760 = vunpack.c.l.b16 %v655
    %v761 = vunpack.c.h.b16 %v655
    %v762 = vunpack.c.l.b16 %v656
    %v763 = vunpack.c.h.b16 %v656
    %v764 = vunpack.c.l.b16 %v657
    %v765 = vunpack.c.h.b16 %v657
    %v766 = vunpack.c.l.b16 %v658
    %v767 = vunpack.c.h.b16 %v658
    %v768 = vunpack.c.l.b16 %v659
    %v769 = vunpack.c.h.b16 %v659
    %v770 = vunpack.c.l.b16 %v660
    %v771 = vunpack.c.h.b16 %v660
    %v772 = vunpack.c.l.b16 %v661
    %v773 = vunpack.c.h.b16 %v661
    %v774 = vunpack.c.l.b16 %v662
    %v775 = vunpack.c.h.b16 %v662
    %v776 = vunpack.c.l.b16 %v663
    %v777 = vunpack.c.h.b16 %v663
    %v778 = vunpack.c.l.b16 %v664
    %v779 = vunpack.c.h.b16 %v664
    %v780 = vunpack.c.l.b16 %v665
    %v781 = vunpack.c.h.b16 %v665
    %v782 = vunpack.c.l.b16 %v666
    %v783 = vunpack.c.h.b16 %v666
    %v784 = vunpack.c.l.b16 %v667
    %v785 = vunpack.c.h.b16 %v667
    %v786 = vpack.c.b16 %v726, %v722
    %v787 = vpack.c.b16 %v727, %v723
    %v788 = vpack.c.b16 %v728, %v724
    %v789 = vpack.c.b16 %v729, %v725
    %v790 = vpack.c.b16 %v734, %v730
    %v791 = vpack.c.b16 %v735, %v731
    %v792 = vpack.c.b16 %v736, %v732
    %v793 = vpack.c.b16 %v737, %v733
    %v794 = vpack.c.b16 %v742, %v738
    %v795 = vpack.c.b16 %v743, %v739
    %v796 = vpack.c.b16 %v744, %v740
    %v797 = vpack.c.b16 %v745, %v741
    %v798 = vpack.c.b16 %v750, %v746
    %v799 = vpack.c.b16 %v751, %v747
    %v800 = vpack.c.b16 %v752, %v748
    %v801 = vpack.c.b16 %v753, %v749
    %v802 = vpack.c.b16 %v758, %v754
    %v803 = vpack.c.b16 %v759, %v755
    %v804 = vpack.c.b16 %v760, %v756
    %v805 = vpack.c.b16 %v761, %v757
    %v806 = vpack.c.b16 %v766, %v762
    %v807 = vpack.c.b16 %v767, %v763
    %v808 = vpack.c.b16 %v768, %v764
    %v809 = vpack.c.b16 %v769, %v765
    %v810 = vpack.c.b16 %v774, %v770
    %v811 = vpack.c.b16 %v775, %v771
    %v812 = vpack.c.b16 %v776, %v772
    %v813 = vpack.c.b16 %v777, %v773
    %v814 = vpack.c.b16 %v782, %v778
    %v815 = vpack.c.b16 %v783, %v779
    %v816 = vpack.c.b16 %v784, %v780
    %v817 = vpack.c.b16 %v785, %v781
    %850 = vmatprep.subr.bf16.mxu0 %v815
    %851 = vmatpush1.bf16.msra.mxu0 %v814
    %852 = vmatprep.subr.bf16.mxu0 %v811
    %853 = vmatpush1.bf16.msra.mxu0 %v810
    %854 = vmatprep.subr.bf16.mxu0 %v807
    %855 = vmatpush1.bf16.msra.mxu0 %v806
    %856 = vmatprep.subr.bf16.mxu0 %v803
    %857 = vmatpush1.bf16.msra.mxu0 %v802
    %858 = vmatprep.subr.bf16.mxu0 %v799
    %859 = vmatpush1.bf16.msra.mxu0 %v798
    %860 = vmatprep.subr.bf16.mxu0 %v795
    %861 = vmatpush1.bf16.msra.mxu0 %v794
    %862 = vmatprep.subr.bf16.mxu0 %v791
    %863 = vmatpush1.bf16.msra.mxu0 %v790
    %864 = vmatprep.subr.bf16.mxu0 %v787
    %865 = vmatpush1.bf16.msra.mxu0 %v786
    %866 = vmatprep.subr.bf16.mxu0 0
    %867 = vmatpush2.bf16.msra.mxu0 0
    %868 = vmatprep.subr.bf16.mxu0 0
    %869 = vmatpush2.bf16.msra.mxu0 0
    %870 = vmatprep.subr.bf16.mxu0 0
    %871 = vmatpush2.bf16.msra.mxu0 0
    %872 = vmatprep.subr.bf16.mxu0 0
    %873 = vmatpush2.bf16.msra.mxu0 0
    %874 = vmatprep.subr.bf16.mxu0 0
    %875 = vmatpush2.bf16.msra.mxu0 0
    %876 = vmatprep.subr.bf16.mxu0 0
    %877 = vmatpush2.bf16.msra.mxu0 0
    %878 = vmatprep.subr.bf16.mxu0 0
    %879 = vmatpush2.bf16.msra.mxu0 0
    %880 = vmatprep.subr.bf16.mxu0 0
    %881 = vmatpush2.bf16.msra.mxu0 0
    %882 = vmatprep.mubr.bf16.mxu0 0
    %883 = vmatmul.mubr.bf16.gmra.mxu0 %v635
    %v884 = vpop.f32.mrf.mxu0
    %v885 = vadd.f32 %v673, %v884
    %v886 = vpop.f32.mrf.mxu0
    %v887 = vadd.f32 %v677, %v886
    %v888 = vpop.f32.mrf.mxu0
    %v889 = vadd.f32 %v673, %v888
    %v890 = vpop.f32.mrf.mxu0
    %v891 = vadd.f32 %v677, %v890
    %892 = vdwg.mxu0
    %893 = vmatprep.subr.bf16.mxu0 %v817
    %894 = vmatpush1.bf16.msra.mxu0 %v816
    %895 = vmatprep.subr.bf16.mxu0 %v813
    %896 = vmatpush1.bf16.msra.mxu0 %v812
    %897 = vmatprep.subr.bf16.mxu0 %v809
    %898 = vmatpush1.bf16.msra.mxu0 %v808
    %899 = vmatprep.subr.bf16.mxu0 %v805
    %900 = vmatpush1.bf16.msra.mxu0 %v804
    %901 = vmatprep.subr.bf16.mxu0 %v801
    %902 = vmatpush1.bf16.msra.mxu0 %v800
    %903 = vmatprep.subr.bf16.mxu0 %v797
    %904 = vmatpush1.bf16.msra.mxu0 %v796
    %905 = vmatprep.subr.bf16.mxu0 %v793
    %906 = vmatpush1.bf16.msra.mxu0 %v792
    %907 = vmatprep.subr.bf16.mxu0 %v789
    %908 = vmatpush1.bf16.msra.mxu0 %v788
    %909 = vmatprep.subr.bf16.mxu0 0
    %910 = vmatpush2.bf16.msra.mxu0 0
    %911 = vmatprep.subr.bf16.mxu0 0
    %912 = vmatpush2.bf16.msra.mxu0 0
    %913 = vmatprep.subr.bf16.mxu0 0
    %914 = vmatpush2.bf16.msra.mxu0 0
    %915 = vmatprep.subr.bf16.mxu0 0
    %916 = vmatpush2.bf16.msra.mxu0 0
    %917 = vmatprep.subr.bf16.mxu0 0
    %918 = vmatpush2.bf16.msra.mxu0 0
    %919 = vmatprep.subr.bf16.mxu0 0
    %920 = vmatpush2.bf16.msra.mxu0 0
    %921 = vmatprep.subr.bf16.mxu0 0
    %922 = vmatpush2.bf16.msra.mxu0 0
    %923 = vmatprep.subr.bf16.mxu0 0
    %924 = vmatpush2.bf16.msra.mxu0 0
    %925 = vmatprep.mubr.bf16.mxu0 0
    %926 = vmatmul.mubr.bf16.gmra.mxu0 %v635
    %v927 = vpop.f32.mrf.mxu0
    %v928 = vadd.f32 %v681, %v927
    %v929 = vpop.f32.mrf.mxu0
    %v930 = vadd.f32 %v685, %v929
    %v931 = vpop.f32.mrf.mxu0
    %v932 = vadd.f32 %v681, %v931
    %v933 = vpop.f32.mrf.mxu0
    %v934 = vadd.f32 %v685, %v933
    %935 = vdwg.mxu0
    %v936 = vmul.f32 %v885, %v885
    %v937 = vmul.f32 %v887, %v887
    %v938 = vmul.f32 %v928, %v928
    %v939 = vmul.f32 %v930, %v930
    %v940 = vmul.f32 %v889, %v889
    %v941 = vmul.f32 %v891, %v891
    %v942 = vmul.f32 %v932, %v932
    %v943 = vmul.f32 %v934, %v934
    %v944 = vmul.f32 %v885, %v936
    %v945 = vmul.f32 %v887, %v937
    %v946 = vmul.f32 %v928, %v938
    %v947 = vmul.f32 %v930, %v939
    %v948 = vmul.f32 %v889, %v940
    %v949 = vmul.f32 %v891, %v941
    %v950 = vmul.f32 %v932, %v942
    %v951 = vmul.f32 %v934, %v943
    %v952 = vmul.f32 %v944, 0.044715
    %v953 = vmul.f32 %v945, 0.044715
    %v954 = vmul.f32 %v946, 0.044715
    %v955 = vmul.f32 %v947, 0.044715
    %v956 = vmul.f32 %v948, 0.044715
    %v957 = vmul.f32 %v949, 0.044715
    %v958 = vmul.f32 %v950, 0.044715
    %v959 = vmul.f32 %v951, 0.044715
    %v960 = vadd.f32 %v885, %v952
    %v961 = vadd.f32 %v887, %v953
    %v962 = vadd.f32 %v928, %v954
    %v963 = vadd.f32 %v930, %v955
    %v964 = vadd.f32 %v889, %v956
    %v965 = vadd.f32 %v891, %v957
    %v966 = vadd.f32 %v932, %v958
    %v967 = vadd.f32 %v934, %v959
    %v968 = vmul.f32 %v960, 0.7978846
    %v969 = vmul.f32 %v961, 0.7978846
    %v970 = vmul.f32 %v962, 0.7978846
    %v971 = vmul.f32 %v963, 0.7978846
    %v972 = vmul.f32 %v964, 0.7978846
    %v973 = vmul.f32 %v965, 0.7978846
    %v974 = vmul.f32 %v966, 0.7978846
    %v975 = vmul.f32 %v967, 0.7978846
    %v976 = vtanh.pop %v968
    %v977 = vtanh.pop %v969
    %v978 = vtanh.pop %v970
    %v979 = vtanh.pop %v971
    %v980 = vtanh.pop %v972
    %v981 = vtanh.pop %v973
    %v982 = vtanh.pop %v974
    %v983 = vtanh.pop %v975
    %v984 = vadd.f32 %v976, 1.0
    %v985 = vadd.f32 %v977, 1.0
    %v986 = vadd.f32 %v978, 1.0
    %v987 = vadd.f32 %v979, 1.0
    %v988 = vadd.f32 %v980, 1.0
    %v989 = vadd.f32 %v981, 1.0
    %v990 = vadd.f32 %v982, 1.0
    %v991 = vadd.f32 %v983, 1.0
    %v992 = vmul.f32 %v984, 0.5
    %v993 = vmul.f32 %v985, 0.5
    %v994 = vmul.f32 %v986, 0.5
    %v995 = vmul.f32 %v987, 0.5
    %v996 = vmul.f32 %v988, 0.5
    %v997 = vmul.f32 %v989, 0.5
    %v998 = vmul.f32 %v990, 0.5
    %v999 = vmul.f32 %v991, 0.5
    %v1000 = vmul.f32 %v885, %v992
    %v1001 = vmul.f32 %v887, %v993
    %v1002 = vmul.f32 %v928, %v994
    %v1003 = vmul.f32 %v930, %v995
    %v1004 = vmul.f32 %v889, %v996
    %v1005 = vmul.f32 %v891, %v997
    %v1006 = vmul.f32 %v932, %v998
    %v1007 = vmul.f32 %v934, %v999
    %v1008 = vpack.c.bf16 %v1004, %v1000
    %v1009 = vpack.c.bf16 %v1005, %v1001
    %v1010 = vpack.c.bf16 %v1006, %v1002
    %v1011 = vpack.c.bf16 %v1007, %v1003
    %v1012 = vld [vmem:[%s11] sm:$0xf]
    %v1013 = vld [vmem:[%s11 + $0x4] sm:$0xf]
    %v1014 = vld [vmem:[%s11 + $0x8] sm:$0xf]
    %v1015 = vld [vmem:[%s11 + $0xc] sm:$0xf]
    %v1016 = vld [vmem:[%s11 + $0x10] sm:$0xf]
    %v1017 = vld [vmem:[%s11 + $0x14] sm:$0xf]
    %v1018 = vld [vmem:[%s11 + $0x18] sm:$0xf]
    %v1019 = vld [vmem:[%s11 + $0x1c] sm:$0xf]
    %v1020 = vld [vmem:[%s11 + $0x20] sm:$0xf]
    %v1021 = vld [vmem:[%s11 + $0x24] sm:$0xf]
    %v1022 = vld [vmem:[%s11 + $0x28] sm:$0xf]
    %v1023 = vld [vmem:[%s11 + $0x2c] sm:$0xf]
    %v1024 = vld [vmem:[%s11 + $0x30] sm:$0xf]
    %v1025 = vld [vmem:[%s11 + $0x34] sm:$0xf]
    %v1026 = vld [vmem:[%s11 + $0x38] sm:$0xf]
    %v1027 = vld [vmem:[%s11 + $0x3c] sm:$0xf]
    %v1028 = vld [vmem:[%s11 + $0x40] sm:$0xf]
    %v1029 = vld [vmem:[%s11 + $0x44] sm:$0xf]
    %v1030 = vld [vmem:[%s11 + $0x48] sm:$0xf]
    %v1031 = vld [vmem:[%s11 + $0x4c] sm:$0xf]
    %v1032 = vld [vmem:[%s11 + $0x50] sm:$0xf]
    %v1033 = vld [vmem:[%s11 + $0x54] sm:$0xf]
    %v1034 = vld [vmem:[%s11 + $0x58] sm:$0xf]
    %v1035 = vld [vmem:[%s11 + $0x5c] sm:$0xf]
    %v1036 = vld [vmem:[%s11 + $0x60] sm:$0xf]
    %v1037 = vld [vmem:[%s11 + $0x64] sm:$0xf]
    %v1038 = vld [vmem:[%s11 + $0x68] sm:$0xf]
    %v1039 = vld [vmem:[%s11 + $0x6c] sm:$0xf]
    %v1040 = vld [vmem:[%s11 + $0x70] sm:$0xf]
    %v1041 = vld [vmem:[%s11 + $0x74] sm:$0xf]
    %v1042 = vld [vmem:[%s11 + $0x78] sm:$0xf]
    %v1043 = vld [vmem:[%s11 + $0x7c] sm:$0xf]
    %v1044 = vld [vmem:[%s11 + $0x80] sm:$0xf]
    %v1045 = vld [vmem:[%s11 + $0x84] sm:$0xf]
    %v1046 = vld [vmem:[%s11 + $0x88] sm:$0xf]
    %v1047 = vld [vmem:[%s11 + $0x8c] sm:$0xf]
    %v1048 = vld [vmem:[%s11 + $0x90] sm:$0xf]
    %v1049 = vld [vmem:[%s11 + $0x94] sm:$0xf]
    %v1050 = vld [vmem:[%s11 + $0x98] sm:$0xf]
    %v1051 = vld [vmem:[%s11 + $0x9c] sm:$0xf]
    %v1052 = vld [vmem:[%s11 + $0xa0] sm:$0xf]
    %v1053 = vld [vmem:[%s11 + $0xa4] sm:$0xf]
    %v1054 = vld [vmem:[%s11 + $0xa8] sm:$0xf]
    %v1055 = vld [vmem:[%s11 + $0xac] sm:$0xf]
    %v1056 = vld [vmem:[%s11 + $0xb0] sm:$0xf]
    %v1057 = vld [vmem:[%s11 + $0xb4] sm:$0xf]
    %v1058 = vld [vmem:[%s11 + $0xb8] sm:$0xf]
    %v1059 = vld [vmem:[%s11 + $0xbc] sm:$0xf]
    %v1060 = vld [vmem:[%s11 + $0xc0] sm:$0xf]
    %v1061 = vld [vmem:[%s11 + $0xc4] sm:$0xf]
    %v1062 = vld [vmem:[%s11 + $0xc8] sm:$0xf]
    %v1063 = vld [vmem:[%s11 + $0xcc] sm:$0xf]
    %v1064 = vld [vmem:[%s11 + $0xd0] sm:$0xf]
    %v1065 = vld [vmem:[%s11 + $0xd4] sm:$0xf]
    %v1066 = vld [vmem:[%s11 + $0xd8] sm:$0xf]
    %v1067 = vld [vmem:[%s11 + $0xdc] sm:$0xf]
    %v1068 = vld [vmem:[%s11 + $0xe0] sm:$0xf]
    %v1069 = vld [vmem:[%s11 + $0xe4] sm:$0xf]
    %v1070 = vld [vmem:[%s11 + $0xe8] sm:$0xf]
    %v1071 = vld [vmem:[%s11 + $0xec] sm:$0xf]
    %v1072 = vld [vmem:[%s11 + $0xf0] sm:$0xf]
    %v1073 = vld [vmem:[%s11 + $0xf4] sm:$0xf]
    %v1074 = vld [vmem:[%s11 + $0xf8] sm:$0xf]
    %v1075 = vld [vmem:[%s11 + $0xfc] sm:$0xf]
    %v1076 = vld [vmem:[%s12] sm:$0x1]
    %v1078 = vlaneseq
    %v1079 = vshrl.u32 %v1078, 7
    %v1080 = vsub.s32 0, %v1079
    %v1081 = vrot.slane %v1076, %v1080
    %v1147 = vunpack.c.l.b16 %v1012
    %v1148 = vunpack.c.l.b16 %v1013
    %v1149 = vunpack.c.l.b16 %v1014
    %v1150 = vunpack.c.l.b16 %v1015
    %v1151 = vunpack.c.l.b16 %v1016
    %v1152 = vunpack.c.l.b16 %v1017
    %v1153 = vunpack.c.l.b16 %v1018
    %v1154 = vunpack.c.l.b16 %v1019
    %v1155 = vunpack.c.l.b16 %v1020
    %v1156 = vunpack.c.l.b16 %v1021
    %v1157 = vunpack.c.l.b16 %v1022
    %v1158 = vunpack.c.l.b16 %v1023
    %v1159 = vunpack.c.l.b16 %v1024
    %v1160 = vunpack.c.l.b16 %v1025
    %v1161 = vunpack.c.l.b16 %v1026
    %v1162 = vunpack.c.l.b16 %v1027
    %v1163 = vunpack.c.l.b16 %v1028
    %v1164 = vunpack.c.l.b16 %v1029
    %v1165 = vunpack.c.l.b16 %v1030
    %v1166 = vunpack.c.l.b16 %v1031
    %v1167 = vunpack.c.l.b16 %v1032
    %v1168 = vunpack.c.l.b16 %v1033
    %v1169 = vunpack.c.l.b16 %v1034
    %v1170 = vunpack.c.l.b16 %v1035
    %v1171 = vunpack.c.l.b16 %v1036
    %v1172 = vunpack.c.l.b16 %v1037
    %v1173 = vunpack.c.l.b16 %v1038
    %v1174 = vunpack.c.l.b16 %v1039
    %v1175 = vunpack.c.l.b16 %v1040
    %v1176 = vunpack.c.l.b16 %v1041
    %v1177 = vunpack.c.l.b16 %v1042
    %v1178 = vunpack.c.l.b16 %v1043
    %v1179 = vunpack.c.l.b16 %v1044
    %v1180 = vunpack.c.l.b16 %v1045
    %v1181 = vunpack.c.l.b16 %v1046
    %v1182 = vunpack.c.l.b16 %v1047
    %v1183 = vunpack.c.l.b16 %v1048
    %v1184 = vunpack.c.l.b16 %v1049
    %v1185 = vunpack.c.l.b16 %v1050
    %v1186 = vunpack.c.l.b16 %v1051
    %v1187 = vunpack.c.l.b16 %v1052
    %v1188 = vunpack.c.l.b16 %v1053
    %v1189 = vunpack.c.l.b16 %v1054
    %v1190 = vunpack.c.l.b16 %v1055
    %v1191 = vunpack.c.l.b16 %v1056
    %v1192 = vunpack.c.l.b16 %v1057
    %v1193 = vunpack.c.l.b16 %v1058
    %v1194 = vunpack.c.l.b16 %v1059
    %v1195 = vunpack.c.l.b16 %v1060
    %v1196 = vunpack.c.l.b16 %v1061
    %v1197 = vunpack.c.l.b16 %v1062
    %v1198 = vunpack.c.l.b16 %v1063
    %v1199 = vunpack.c.l.b16 %v1064
    %v1200 = vunpack.c.l.b16 %v1065
    %v1201 = vunpack.c.l.b16 %v1066
    %v1202 = vunpack.c.l.b16 %v1067
    %v1203 = vunpack.c.l.b16 %v1068
    %v1204 = vunpack.c.l.b16 %v1069
    %v1205 = vunpack.c.l.b16 %v1070
    %v1206 = vunpack.c.l.b16 %v1071
    %v1207 = vunpack.c.l.b16 %v1072
    %v1208 = vunpack.c.l.b16 %v1073
    %v1209 = vunpack.c.l.b16 %v1074
    %v1210 = vunpack.c.l.b16 %v1075
    %v1211 = vpack.c.b16 %v1148, %v1147
    %v1212 = vpack.c.b16 %v1150, %v1149
    %v1213 = vpack.c.b16 %v1152, %v1151
    %v1214 = vpack.c.b16 %v1154, %v1153
    %v1215 = vpack.c.b16 %v1156, %v1155
    %v1216 = vpack.c.b16 %v1158, %v1157
    %v1217 = vpack.c.b16 %v1160, %v1159
    %v1218 = vpack.c.b16 %v1162, %v1161
    %v1219 = vpack.c.b16 %v1164, %v1163
    %v1220 = vpack.c.b16 %v1166, %v1165
    %v1221 = vpack.c.b16 %v1168, %v1167
    %v1222 = vpack.c.b16 %v1170, %v1169
    %v1223 = vpack.c.b16 %v1172, %v1171
    %v1224 = vpack.c.b16 %v1174, %v1173
    %v1225 = vpack.c.b16 %v1176, %v1175
    %v1226 = vpack.c.b16 %v1178, %v1177
    %v1227 = vpack.c.b16 %v1180, %v1179
    %v1228 = vpack.c.b16 %v1182, %v1181
    %v1229 = vpack.c.b16 %v1184, %v1183
    %v1230 = vpack.c.b16 %v1186, %v1185
    %v1231 = vpack.c.b16 %v1188, %v1187
    %v1232 = vpack.c.b16 %v1190, %v1189
    %v1233 = vpack.c.b16 %v1192, %v1191
    %v1234 = vpack.c.b16 %v1194, %v1193
    %v1235 = vpack.c.b16 %v1196, %v1195
    %v1236 = vpack.c.b16 %v1198, %v1197
    %v1237 = vpack.c.b16 %v1200, %v1199
    %v1238 = vpack.c.b16 %v1202, %v1201
    %v1239 = vpack.c.b16 %v1204, %v1203
    %v1240 = vpack.c.b16 %v1206, %v1205
    %v1241 = vpack.c.b16 %v1208, %v1207
    %v1242 = vpack.c.b16 %v1210, %v1209
    %1275 = vmatprep.subr.bf16.mxu0 0
    %1276 = vmatpush1.bf16.msra.mxu0 %v1218
    %1277 = vmatprep.subr.bf16.mxu0 0
    %1278 = vmatpush1.bf16.msra.mxu0 %v1217
    %1279 = vmatprep.subr.bf16.mxu0 0
    %1280 = vmatpush1.bf16.msra.mxu0 %v1216
    %1281 = vmatprep.subr.bf16.mxu0 0
    %1282 = vmatpush1.bf16.msra.mxu0 %v1215
    %1283 = vmatprep.subr.bf16.mxu0 0
    %1284 = vmatpush1.bf16.msra.mxu0 %v1214
    %1285 = vmatprep.subr.bf16.mxu0 0
    %1286 = vmatpush1.bf16.msra.mxu0 %v1213
    %1287 = vmatprep.subr.bf16.mxu0 0
    %1288 = vmatpush1.bf16.msra.mxu0 %v1212
    %1289 = vmatprep.subr.bf16.mxu0 0
    %1290 = vmatpush1.bf16.msra.mxu0 %v1211
    %1291 = vmatprep.subr.bf16.mxu0 0
    %1292 = vmatpush2.bf16.msra.mxu0 %v1226
    %1293 = vmatprep.subr.bf16.mxu0 0
    %1294 = vmatpush2.bf16.msra.mxu0 %v1225
    %1295 = vmatprep.subr.bf16.mxu0 0
    %1296 = vmatpush2.bf16.msra.mxu0 %v1224
    %1297 = vmatprep.subr.bf16.mxu0 0
    %1298 = vmatpush2.bf16.msra.mxu0 %v1223
    %1299 = vmatprep.subr.bf16.mxu0 0
    %1300 = vmatpush2.bf16.msra.mxu0 %v1222
    %1301 = vmatprep.subr.bf16.mxu0 0
    %1302 = vmatpush2.bf16.msra.mxu0 %v1221
    %1303 = vmatprep.subr.bf16.mxu0 0
    %1304 = vmatpush2.bf16.msra.mxu0 %v1220
    %1305 = vmatprep.subr.bf16.mxu0 0
    %1306 = vmatpush2.bf16.msra.mxu0 %v1219
    %1307 = vmatprep.mubr.bf16.mxu0 %v1009
    %1308 = vmatmul.mubr.bf16.gmra.mxu0 %v1008
    %v1309 = vpop.f32.mrf.mxu0
    %v1310 = vadd.f32 %v1081, %v1309
    %v1311 = vpop.f32.mrf.mxu0
    %v1312 = vpop.f32.mrf.mxu0
    %v1313 = vadd.f32 %v1081, %v1312
    %v1314 = vpop.f32.mrf.mxu0
    %1315 = vdwg.mxu0
    %1316 = vmatprep.subr.bf16.mxu0 0
    %1317 = vmatpush1.bf16.msra.mxu0 %v1234
    %1318 = vmatprep.subr.bf16.mxu0 0
    %1319 = vmatpush1.bf16.msra.mxu0 %v1233
    %1320 = vmatprep.subr.bf16.mxu0 0
    %1321 = vmatpush1.bf16.msra.mxu0 %v1232
    %1322 = vmatprep.subr.bf16.mxu0 0
    %1323 = vmatpush1.bf16.msra.mxu0 %v1231
    %1324 = vmatprep.subr.bf16.mxu0 0
    %1325 = vmatpush1.bf16.msra.mxu0 %v1230
    %1326 = vmatprep.subr.bf16.mxu0 0
    %1327 = vmatpush1.bf16.msra.mxu0 %v1229
    %1328 = vmatprep.subr.bf16.mxu0 0
    %1329 = vmatpush1.bf16.msra.mxu0 %v1228
    %1330 = vmatprep.subr.bf16.mxu0 0
    %1331 = vmatpush1.bf16.msra.mxu0 %v1227
    %1332 = vmatprep.subr.bf16.mxu0 0
    %1333 = vmatpush2.bf16.msra.mxu0 %v1242
    %1334 = vmatprep.subr.bf16.mxu0 0
    %1335 = vmatpush2.bf16.msra.mxu0 %v1241
    %1336 = vmatprep.subr.bf16.mxu0 0
    %1337 = vmatpush2.bf16.msra.mxu0 %v1240
    %1338 = vmatprep.subr.bf16.mxu0 0
    %1339 = vmatpush2.bf16.msra.mxu0 %v1239
    %1340 = vmatprep.subr.bf16.mxu0 0
    %1341 = vmatpush2.bf16.msra.mxu0 %v1238
    %1342 = vmatprep.subr.bf16.mxu0 0
    %1343 = vmatpush2.bf16.msra.mxu0 %v1237
    %1344 = vmatprep.subr.bf16.mxu0 0
    %1345 = vmatpush2.bf16.msra.mxu0 %v1236
    %1346 = vmatprep.subr.bf16.mxu0 0
    %1347 = vmatpush2.bf16.msra.mxu0 %v1235
    %1348 = vmatprep.mubr.bf16.mxu0 %v1011
    %1349 = vmatmul.mubr.bf16.gmra.mxu0 %v1010
    %v1350 = vpop.f32.mrf.mxu0
    %v1351 = vadd.f32 %v1310, %v1350
    %v1352 = vpop.f32.mrf.mxu0
    %v1353 = vpop.f32.mrf.mxu0
    %v1354 = vadd.f32 %v1313, %v1353
    %v1355 = vpop.f32.mrf.mxu0
    %1356 = vdwg.mxu0
    %v1357 = vadd.f32 %v593, %v1351
    %v1358 = vadd.f32 %v594, %v1354
    %v1359 = vld [vmem:[%s16] sm:$0x3]
    %v1361 = vsel %vm411, %v1359, 0
    %1363 = vmatprep.subr.mxu0 0.0
    %1364 = vmatpush1.msra.mxu0 0.0
    %1365 = vmatprep.subr.mxu0 0.0
    %1366 = vmatpush1.msra.mxu0 0.0
    %1367 = vmatprep.subr.mxu0 0.0
    %1368 = vmatpush1.msra.mxu0 0.0
    %1369 = vmatprep.subr.mxu0 0.0
    %1370 = vmatpush1.msra.mxu0 0.0
    %1371 = vmatprep.subr.mxu0 0.0
    %1372 = vmatpush1.msra.mxu0 0.0
    %1373 = vmatprep.subr.mxu0 0.0
    %1374 = vmatpush1.msra.mxu0 0.0
    %1375 = vmatprep.subr.mxu0 0.0
    %1376 = vmatpush1.msra.mxu0 0.0
    %1377 = vmatprep.subr.mxu0 0.0
    %1378 = vmatpush1.msra.mxu0 0.0
    %1379 = vmatprep.subr.mxu0 0.0
    %1380 = vmatpush1.msra.mxu0 0.0
    %1381 = vmatprep.subr.mxu0 0.0
    %1382 = vmatpush1.msra.mxu0 0.0
    %1383 = vmatprep.subr.mxu0 0.0
    %1384 = vmatpush1.msra.mxu0 0.0
    %1385 = vmatprep.subr.mxu0 0.0
    %1386 = vmatpush1.msra.mxu0 0.0
    %1387 = vmatprep.subr.mxu0 0.0
    %1388 = vmatpush1.msra.mxu0 0.0
    %1389 = vmatprep.subr.mxu0 0.0
    %1390 = vmatpush1.msra.mxu0 0.0
    %1391 = vmatprep.subr.mxu0 0.0
    %1392 = vmatpush1.msra.mxu0 %v1358
    %1393 = vmatprep.subr.mxu0 0.0
    %1394 = vmatpush1.msra.mxu0 %v1357
    %1395 = vmatprep.subr.mxu0 0.0
    %1396 = vmatpush2.msra.mxu0 0.0
    %1397 = vmatprep.subr.mxu0 0.0
    %1398 = vmatpush2.msra.mxu0 0.0
    %1399 = vmatprep.subr.mxu0 0.0
    %1400 = vmatpush2.msra.mxu0 0.0
    %1401 = vmatprep.subr.mxu0 0.0
    %1402 = vmatpush2.msra.mxu0 0.0
    %1403 = vmatprep.subr.mxu0 0.0
    %1404 = vmatpush2.msra.mxu0 0.0
    %1405 = vmatprep.subr.mxu0 0.0
    %1406 = vmatpush2.msra.mxu0 0.0
    %1407 = vmatprep.subr.mxu0 0.0
    %1408 = vmatpush2.msra.mxu0 0.0
    %1409 = vmatprep.subr.mxu0 0.0
    %1410 = vmatpush2.msra.mxu0 0.0
    %1411 = vmatprep.subr.mxu0 0.0
    %1412 = vmatpush2.msra.mxu0 0.0
    %1413 = vmatprep.subr.mxu0 0.0
    %1414 = vmatpush2.msra.mxu0 0.0
    %1415 = vmatprep.subr.mxu0 0.0
    %1416 = vmatpush2.msra.mxu0 0.0
    %1417 = vmatprep.subr.mxu0 0.0
    %1418 = vmatpush2.msra.mxu0 0.0
    %1419 = vmatprep.subr.mxu0 0.0
    %1420 = vmatpush2.msra.mxu0 0.0
    %1421 = vmatprep.subr.mxu0 0.0
    %1422 = vmatpush2.msra.mxu0 0.0
    %1423 = vmatprep.subr.mxu0 0.0
    %1424 = vmatpush2.msra.mxu0 0.0
    %1425 = vmatprep.subr.mxu0 0.0
    %1426 = vmatpush2.msra.mxu0 0.0
    %1427 = vmatprep.mubr.f32.mxu0 0.0
    %1428 = vmatmul.mubr.f32.gmra.mxu0 %v1361
    %v1429 = vpop.f32.mrf.mxu0
    %v1430 = vadd.f32 0.0, %v1429
    %v1431 = vpop.f32.mrf.mxu0
    %1432 = vdwg.mxu0
    %v1433 = vld [vmem:[%s13] sm:$0x1]
    %v1434 = vld [vmem:[%s14] sm:$0x1]
    %v1435 = vld [vmem:[%s15] sm:$0xf]
    %v1436 = vld [vmem:[%s15 + $0x4] sm:$0xf]
    %v1437 = vld [vmem:[%s15 + $0x8] sm:$0xf]
    %v1438 = vld [vmem:[%s15 + $0xc] sm:$0xf]
    %v1439 = vld [vmem:[%s15 + $0x10] sm:$0xf]
    %v1440 = vld [vmem:[%s15 + $0x14] sm:$0xf]
    %v1441 = vld [vmem:[%s15 + $0x18] sm:$0xf]
    %v1442 = vld [vmem:[%s15 + $0x1c] sm:$0xf]
    %v1443 = vld [vmem:[%s15 + $0x20] sm:$0xf]
    %v1444 = vld [vmem:[%s15 + $0x24] sm:$0xf]
    %v1445 = vld [vmem:[%s15 + $0x28] sm:$0xf]
    %v1446 = vld [vmem:[%s15 + $0x2c] sm:$0xf]
    %v1447 = vld [vmem:[%s15 + $0x30] sm:$0xf]
    %v1448 = vld [vmem:[%s15 + $0x34] sm:$0xf]
    %v1449 = vld [vmem:[%s15 + $0x38] sm:$0xf]
    %v1450 = vld [vmem:[%s15 + $0x3c] sm:$0xf]
    %vm1451 = vcmask 1041408
    %v1452 = vsel %vm1451, %v1430, 0.0
    %1453 = vadd.xlane.f32.xlu0 %v1452
    %v1454 = vpop.xlane.xlu0 %1453
    %v1455 = vmul.f32 %v1454, %v69
    %v1456 = vsub.f32 %v1430, %v1455
    %v1457 = vmul.f32 %v1456, %v1456
    %v1458 = vsel %vm1451, %v1457, 0.0
    %1459 = vadd.xlane.f32.xlu0 %v1458
    %v1460 = vpop.xlane.xlu0 %1459
    %v1461 = vmul.f32 %v1460, %v69
    %v1462 = vadd.f32 %v1461, 1e-05
    %v1463 = vrsqrt.pop %v1462
    %v1464 = vmul.f32 %v1456, %v1463
    %v1466 = vlaneseq
    %v1467 = vshrl.u32 %v1466, 7
    %v1468 = vsub.s32 0, %v1467
    %v1469 = vrot.slane %v1433, %v1468
    %v1471 = vmul.f32 %v1464, %v1469
    %v1473 = vlaneseq
    %v1474 = vshrl.u32 %v1473, 7
    %v1475 = vsub.s32 0, %v1474
    %v1476 = vrot.slane %v1434, %v1475
    %v1478 = vadd.f32 %v1471, %v1476
    %v1479 = vpack.c.bf16 %v1478, %v1478
    %v1496 = vunpack.c.l.b16 %v1435
    %v1497 = vunpack.c.l.b16 %v1436
    %v1498 = vunpack.c.l.b16 %v1437
    %v1499 = vunpack.c.l.b16 %v1438
    %v1500 = vunpack.c.l.b16 %v1439
    %v1501 = vunpack.c.l.b16 %v1440
    %v1502 = vunpack.c.l.b16 %v1441
    %v1503 = vunpack.c.l.b16 %v1442
    %v1504 = vunpack.c.l.b16 %v1443
    %v1505 = vunpack.c.l.b16 %v1444
    %v1506 = vunpack.c.l.b16 %v1445
    %v1507 = vunpack.c.l.b16 %v1446
    %v1508 = vunpack.c.l.b16 %v1447
    %v1509 = vunpack.c.l.b16 %v1448
    %v1510 = vunpack.c.l.b16 %v1449
    %v1511 = vunpack.c.l.b16 %v1450
    %v1512 = vpack.c.b16 %v1497, %v1496
    %v1513 = vpack.c.b16 %v1499, %v1498
    %v1514 = vpack.c.b16 %v1501, %v1500
    %v1515 = vpack.c.b16 %v1503, %v1502
    %v1516 = vpack.c.b16 %v1505, %v1504
    %v1517 = vpack.c.b16 %v1507, %v1506
    %v1518 = vpack.c.b16 %v1509, %v1508
    %v1519 = vpack.c.b16 %v1511, %v1510
    %1528 = vmatprep.subr.bf16.mxu0 0
    %1529 = vmatpush1.bf16.msra.mxu0 %v1519
    %1530 = vmatprep.subr.bf16.mxu0 0
    %1531 = vmatpush1.bf16.msra.mxu0 %v1518
    %1532 = vmatprep.subr.bf16.mxu0 0
    %1533 = vmatpush1.bf16.msra.mxu0 %v1517
    %1534 = vmatprep.subr.bf16.mxu0 0
    %1535 = vmatpush1.bf16.msra.mxu0 %v1516
    %1536 = vmatprep.subr.bf16.mxu0 0
    %1537 = vmatpush1.bf16.msra.mxu0 %v1515
    %1538 = vmatprep.subr.bf16.mxu0 0
    %1539 = vmatpush1.bf16.msra.mxu0 %v1514
    %1540 = vmatprep.subr.bf16.mxu0 0
    %1541 = vmatpush1.bf16.msra.mxu0 %v1513
    %1542 = vmatprep.subr.bf16.mxu0 0
    %1543 = vmatpush1.bf16.msra.mxu0 %v1512
    %1544 = vmatprep.subr.bf16.mxu0 0
    %1545 = vmatpush2.bf16.msra.mxu0 0
    %1546 = vmatprep.subr.bf16.mxu0 0
    %1547 = vmatpush2.bf16.msra.mxu0 0
    %1548 = vmatprep.subr.bf16.mxu0 0
    %1549 = vmatpush2.bf16.msra.mxu0 0
    %1550 = vmatprep.subr.bf16.mxu0 0
    %1551 = vmatpush2.bf16.msra.mxu0 0
    %1552 = vmatprep.subr.bf16.mxu0 0
    %1553 = vmatpush2.bf16.msra.mxu0 0
    %1554 = vmatprep.subr.bf16.mxu0 0
    %1555 = vmatpush2.bf16.msra.mxu0 0
    %1556 = vmatprep.subr.bf16.mxu0 0
    %1557 = vmatpush2.bf16.msra.mxu0 0
    %1558 = vmatprep.subr.bf16.mxu0 0
    %1559 = vmatpush2.bf16.msra.mxu0 0
    %1560 = vmatprep.mubr.bf16.mxu0 0
    %1561 = vmatmul.mubr.bf16.gmra.mxu0 %v1479
    %v1562 = vpop.f32.mrf.mxu0
    %v1563 = vadd.f32 0.0, %v1562
    %v1564 = vpop.f32.mrf.mxu0
    %v1565 = vpop.f32.mrf.mxu0
    %v1566 = vpop.f32.mrf.mxu0
    %1567 = vdwg.mxu0
    %v1568 = vmul.f32 %v1563, %v1563
    %v1569 = vsel %vm1451, %v1568, 0.0
    %1570 = vadd.xlane.f32.xlu0 %v1569
    %v1571 = vpop.xlane.xlu0 %1570
    %v1572 = vmax.f32 %v1571, 1e-24
    %v1573 = vrsqrt.pop %v1572
    %v1574 = vmul.f32 %v1563, %v1573
    %v1575 = vpack.c.bf16 %v1574, %v1574
    %1576 = vst [vmem:[#allocation2] sm:$0x1] %v1575
    // Predicated region
    $region74: #{_lambda_.3} parent=1 // pred_check
      _
    $region75: #{_lambda_.3} parent=1 // pred_check_branch
      %1578 = sbr.rel (0) target = $region77
    $region76: #{_lambda_.3} parent=1 // pred_region
      %s1580 = ssub.s32 16, 16
      %1581 = vsyncadd [#allocation3], %s1580
      %s1583 = sshll.u32 [#allocation2], 4
      %s1584 = int_to_ptr.vmem [resolvable:$true] %s1583
      %1586 = dma.vmem_to_hbm [thread:$0]  %s1584, 16, %s18, [#allocation3]
    $region77: #{_lambda_.3} parent=1 // pred_fallthru
      _
    // Predicated region
    $region78: #{_lambda_.3} parent=1 // pred_check
      _
    $region79: #{_lambda_.3} parent=1 // pred_check_branch
      %1588 = sbr.rel (0) target = $region81
    $region80: #{_lambda_.3} parent=1 // pred_region
      %1589 = dma.done [#allocation3], 16
    $region81: #{_lambda_.3} parent=1 // pred_fallthru
      _
    %1590 = vsyncpa [#allocation3], 1

// kernel: _lambda_.2
$region0: #{_lambda_.2}
  #allocation0 [shape = 'u32[]', space=smem, size = 0x4, offset = 0x4, fixed_abs, tag = 'smem constant byte address 0x4 - core index']
  #allocation1 [shape = 'u32[144,128]{1,0:T(1,128)}', space=vmem, size = 0x12000, scoped, tag = 'internal scratch']
  %s0 = inlined_call_operand.vmem [shape: bf16[10,192], index: 0, kind: input, shape index: {}]
  %s1 = inlined_call_operand.hbm [shape: bf16[192,128], index: 1, kind: input, shape index: {}]
  %s2 = inlined_call_operand.vmem [shape: f32[5,128], index: 2, kind: input, shape index: {}]
  %s3 = inlined_call_operand.vmem [shape: f32[10,5], index: 3, kind: input, shape index: {}]
  %s4 = inlined_call_operand.vmem [shape: f32[1,128], index: 4, kind: input, shape index: {}, may-alias: {4,6,12,18}]
  %s5 = inlined_call_operand.vmem [shape: f32[1,128], index: 5, kind: input, shape index: {}, may-alias: {5,7,11,13,17,19}]
  %s6 = inlined_call_operand.vmem [shape: f32[1,128], index: 6, kind: input, shape index: {}, may-alias: {4,6,12,18}]
  %s7 = inlined_call_operand.vmem [shape: f32[1,128], index: 7, kind: input, shape index: {}, may-alias: {5,7,11,13,17,19}]
  %s8 = inlined_call_operand.vmem [shape: bf16[128,384], index: 8, kind: input, shape index: {}]
  %s9 = inlined_call_operand.vmem [shape: f32[1,384], index: 9, kind: input, shape index: {}]
  %s10 = inlined_call_operand.hbm [shape: bf16[128,128], index: 10, kind: input, shape index: {}]
  %s11 = inlined_call_operand.vmem [shape: f32[1,128], index: 11, kind: input, shape index: {}, may-alias: {5,7,11,13,17,19}]
  %s12 = inlined_call_operand.vmem [shape: f32[1,128], index: 12, kind: input, shape index: {}, may-alias: {4,6,12,18}]
  %s13 = inlined_call_operand.vmem [shape: f32[1,128], index: 13, kind: input, shape index: {}, may-alias: {5,7,11,13,17,19}]
  %s14 = inlined_call_operand.vmem [shape: bf16[128,512], index: 14, kind: input, shape index: {}]
  %s15 = inlined_call_operand.vmem [shape: f32[1,512], index: 15, kind: input, shape index: {}]
  %s16 = inlined_call_operand.vmem [shape: bf16[512,128], index: 16, kind: input, shape index: {}]
  %s17 = inlined_call_operand.vmem [shape: f32[1,128], index: 17, kind: input, shape index: {}, may-alias: {5,7,11,13,17,19}]
  %s18 = inlined_call_operand.vmem [shape: f32[1,128], index: 18, kind: input, shape index: {}, may-alias: {4,6,12,18}]
  %s19 = inlined_call_operand.vmem [shape: f32[1,128], index: 19, kind: input, shape index: {}, may-alias: {5,7,11,13,17,19}]
  %s20 = inlined_call_operand.hbm [shape: bf16[128,128], index: 20, kind: input, shape index: {}]
  %s21 = inlined_call_operand.vmem [shape: f32[2,10], index: 21, kind: input, shape index: {}]
  %s22 = inlined_call_operand.vmem [shape: f32[10,10], index: 22, kind: input, shape index: {}]
  %s23 = inlined_call_operand.hbm [shape: bf16[2,128], index: 23, kind: output, shape index: {}]
  %s24 = sld [smem:[#allocation0]]
  $region114: #{_lambda_.2} parent=0
    _
  %s26 = ssub.s32 1, %s24
  %s27 = scalar_select 0, %s26, %s24
  $region1: #{_lambda_.2} parent=0
    #allocation2 [shape = 'u8[49152]{0}', space=vmem, size = 0xc000, scoped, tag = 'input window, operand 1, single buffered']
    #allocation3 [shape = 's32[1]{0}', space=sflag, size = 0x4, scoped, tag = 'scoped memory for _lambda_.2']
    #allocation4 [shape = 's32[1]{0}', space=sflag, size = 0x4, scoped, tag = 'scoped memory for _lambda_.2']
    #allocation5 [shape = 'u8[32768]{0}', space=vmem, size = 0x8000, scoped, tag = 'input window, operand 10, single buffered']
    #allocation6 [shape = 's32[1]{0}', space=sflag, size = 0x4, scoped, tag = 'scoped memory for _lambda_.2']
    #allocation7 [shape = 'u8[32768]{0}', space=vmem, size = 0x8000, scoped, tag = 'input window, operand 20, single buffered']
    #allocation8 [shape = 'u8[512]{0}', space=vmem, size = 0x400, scoped, tag = 'output window, operand 0, single buffered']
    %28 = vsyncpa [#allocation3], 0
    %29 = vsyncpa [#allocation6], 0
    %30 = vsyncpa [#allocation4], 0
    // Predicated region
    $region2: #{_lambda_.2} parent=1 // pred_check
      _
    $region3: #{_lambda_.2} parent=1 // pred_check_branch
      %32 = sbr.rel (0) target = $region5
    $region4: #{_lambda_.2} parent=1 // pred_region
      _
    $region5: #{_lambda_.2} parent=1 // pred_fallthru
      _
    // Predicated region
    $region6: #{_lambda_.2} parent=1 // pred_check
      _
    $region7: #{_lambda_.2} parent=1 // pred_check_branch
      %34 = sbr.rel (0) target = $region9
    $region8: #{_lambda_.2} parent=1 // pred_region
      %s36 = ssub.s32 1536, 1536
      %37 = vsyncadd [#allocation3], %s36
      %s38 = sshll.u32 [#allocation2], 4
      %s39 = int_to_ptr.vmem [resolvable:$true] %s38
      %44 = dma.hbm_to_vmem [thread:$0]  %s1, 1536, %s39, [#allocation3], 64, 64, 4
    $region9: #{_lambda_.2} parent=1 // pred_fallthru
      _
    // Predicated region
    $region10: #{_lambda_.2} parent=1 // pred_check
      _
    $region11: #{_lambda_.2} parent=1 // pred_check_branch
      %46 = sbr.rel (0) target = $region13
    $region12: #{_lambda_.2} parent=1 // pred_region
      _
    $region13: #{_lambda_.2} parent=1 // pred_fallthru
      _
    // Predicated region
    $region14: #{_lambda_.2} parent=1 // pred_check
      _
    $region15: #{_lambda_.2} parent=1 // pred_check_branch
      %48 = sbr.rel (0) target = $region17
    $region16: #{_lambda_.2} parent=1 // pred_region
      _
    $region17: #{_lambda_.2} parent=1 // pred_fallthru
      _
    // Predicated region
    $region18: #{_lambda_.2} parent=1 // pred_check
      _
    $region19: #{_lambda_.2} parent=1 // pred_check_branch
      %50 = sbr.rel (0) target = $region21
    $region20: #{_lambda_.2} parent=1 // pred_region
      _
    $region21: #{_lambda_.2} parent=1 // pred_fallthru
      _
    // Predicated region
    $region22: #{_lambda_.2} parent=1 // pred_check
      _
    $region23: #{_lambda_.2} parent=1 // pred_check_branch
      %52 = sbr.rel (0) target = $region25
    $region24: #{_lambda_.2} parent=1 // pred_region
      _
    $region25: #{_lambda_.2} parent=1 // pred_fallthru
      _
    // Predicated region
    $region26: #{_lambda_.2} parent=1 // pred_check
      _
    $region27: #{_lambda_.2} parent=1 // pred_check_branch
      %54 = sbr.rel (0) target = $region29
    $region28: #{_lambda_.2} parent=1 // pred_region
      _
    $region29: #{_lambda_.2} parent=1 // pred_fallthru
      _
    // Predicated region
    $region30: #{_lambda_.2} parent=1 // pred_check
      _
    $region31: #{_lambda_.2} parent=1 // pred_check_branch
      %56 = sbr.rel (0) target = $region33
    $region32: #{_lambda_.2} parent=1 // pred_region
      _
    $region33: #{_lambda_.2} parent=1 // pred_fallthru
      _
    // Predicated region
    $region34: #{_lambda_.2} parent=1 // pred_check
      _
    $region35: #{_lambda_.2} parent=1 // pred_check_branch
      %58 = sbr.rel (0) target = $region37
    $region36: #{_lambda_.2} parent=1 // pred_region
      _
    $region37: #{_lambda_.2} parent=1 // pred_fallthru
      _
    // Predicated region
    $region38: #{_lambda_.2} parent=1 // pred_check
      _
    $region39: #{_lambda_.2} parent=1 // pred_check_branch
      %60 = sbr.rel (0) target = $region41
    $region40: #{_lambda_.2} parent=1 // pred_region
      _
    $region41: #{_lambda_.2} parent=1 // pred_fallthru
      _
    // Predicated region
    $region42: #{_lambda_.2} parent=1 // pred_check
      _
    $region43: #{_lambda_.2} parent=1 // pred_check_branch
      %62 = sbr.rel (0) target = $region45
    $region44: #{_lambda_.2} parent=1 // pred_region
      %s64 = ssub.s32 1024, 1024
      %65 = vsyncadd [#allocation6], %s64
      %s66 = sshll.u32 [#allocation5], 4
      %s67 = int_to_ptr.vmem [resolvable:$true] %s66
      %72 = dma.hbm_to_vmem [thread:$0]  %s10, 1024, %s67, [#allocation6], 64, 64, 4
    $region45: #{_lambda_.2} parent=1 // pred_fallthru
      _
    // Predicated region
    $region46: #{_lambda_.2} parent=1 // pred_check
      _
    $region47: #{_lambda_.2} parent=1 // pred_check_branch
      %74 = sbr.rel (0) target = $region49
    $region48: #{_lambda_.2} parent=1 // pred_region
      _
    $region49: #{_lambda_.2} parent=1 // pred_fallthru
      _
    // Predicated region
    $region50: #{_lambda_.2} parent=1 // pred_check
      _
    $region51: #{_lambda_.2} parent=1 // pred_check_branch
      %76 = sbr.rel (0) target = $region53
    $region52: #{_lambda_.2} parent=1 // pred_region
      _
    $region53: #{_lambda_.2} parent=1 // pred_fallthru
      _
    // Predicated region
    $region54: #{_lambda_.2} parent=1 // pred_check
      _
    $region55: #{_lambda_.2} parent=1 // pred_check_branch
      %78 = sbr.rel (0) target = $region57
    $region56: #{_lambda_.2} parent=1 // pred_region
      _
    $region57: #{_lambda_.2} parent=1 // pred_fallthru
      _
    // Predicated region
    $region58: #{_lambda_.2} parent=1 // pred_check
      _
    $region59: #{_lambda_.2} parent=1 // pred_check_branch
      %80 = sbr.rel (0) target = $region61
    $region60: #{_lambda_.2} parent=1 // pred_region
      _
    $region61: #{_lambda_.2} parent=1 // pred_fallthru
      _
    // Predicated region
    $region62: #{_lambda_.2} parent=1 // pred_check
      _
    $region63: #{_lambda_.2} parent=1 // pred_check_branch
      %82 = sbr.rel (0) target = $region65
    $region64: #{_lambda_.2} parent=1 // pred_region
      _
    $region65: #{_lambda_.2} parent=1 // pred_fallthru
      _
    // Predicated region
    $region66: #{_lambda_.2} parent=1 // pred_check
      _
    $region67: #{_lambda_.2} parent=1 // pred_check_branch
      %84 = sbr.rel (0) target = $region69
    $region68: #{_lambda_.2} parent=1 // pred_region
      _
    $region69: #{_lambda_.2} parent=1 // pred_fallthru
      _
    // Predicated region
    $region70: #{_lambda_.2} parent=1 // pred_check
      _
    $region71: #{_lambda_.2} parent=1 // pred_check_branch
      %86 = sbr.rel (0) target = $region73
    $region72: #{_lambda_.2} parent=1 // pred_region
      _
    $region73: #{_lambda_.2} parent=1 // pred_fallthru
      _
    // Predicated region
    $region74: #{_lambda_.2} parent=1 // pred_check
      _
    $region75: #{_lambda_.2} parent=1 // pred_check_branch
      %88 = sbr.rel (0) target = $region77
    $region76: #{_lambda_.2} parent=1 // pred_region
      _
    $region77: #{_lambda_.2} parent=1 // pred_fallthru
      _
    // Predicated region
    $region78: #{_lambda_.2} parent=1 // pred_check
      _
    $region79: #{_lambda_.2} parent=1 // pred_check_branch
      %90 = sbr.rel (0) target = $region81
    $region80: #{_lambda_.2} parent=1 // pred_region
      _
    $region81: #{_lambda_.2} parent=1 // pred_fallthru
      _
    // Predicated region
    $region82: #{_lambda_.2} parent=1 // pred_check
      _
    $region83: #{_lambda_.2} parent=1 // pred_check_branch
      %92 = sbr.rel (0) target = $region85
    $region84: #{_lambda_.2} parent=1 // pred_region
      %s94 = ssub.s32 1024, 1024
      %95 = vsyncadd [#allocation6], %s94
      %s96 = sshll.u32 [#allocation7], 4
      %s97 = int_to_ptr.vmem [resolvable:$true] %s96
      %102 = dma.hbm_to_vmem [thread:$0]  %s20, 1024, %s97, [#allocation6], 64, 64, 4
    $region85: #{_lambda_.2} parent=1 // pred_fallthru
      _
    // Predicated region
    $region86: #{_lambda_.2} parent=1 // pred_check
      _
    $region87: #{_lambda_.2} parent=1 // pred_check_branch
      %104 = sbr.rel (0) target = $region89
    $region88: #{_lambda_.2} parent=1 // pred_region
      _
    $region89: #{_lambda_.2} parent=1 // pred_fallthru
      _
    // Predicated region
    $region90: #{_lambda_.2} parent=1 // pred_check
      _
    $region91: #{_lambda_.2} parent=1 // pred_check_branch
      %106 = sbr.rel (0) target = $region93
    $region92: #{_lambda_.2} parent=1 // pred_region
      _
    $region93: #{_lambda_.2} parent=1 // pred_fallthru
      _
    // Predicated region
    $region94: #{_lambda_.2} parent=1 // pred_check
      _
    $region95: #{_lambda_.2} parent=1 // pred_check_branch
      %108 = sbr.rel (0) target = $region97
    $region96: #{_lambda_.2} parent=1 // pred_region
      %109 = dma.done [#allocation3], 1536
    $region97: #{_lambda_.2} parent=1 // pred_fallthru
      _
    // Predicated region
    $region98: #{_lambda_.2} parent=1 // pred_check
      _
    $region99: #{_lambda_.2} parent=1 // pred_check_branch
      %111 = sbr.rel (0) target = $region101
    $region100: #{_lambda_.2} parent=1 // pred_region
      %112 = dma.done [#allocation6], 1024
    $region101: #{_lambda_.2} parent=1 // pred_fallthru
      _
    // Predicated region
    $region102: #{_lambda_.2} parent=1 // pred_check
      _
    $region103: #{_lambda_.2} parent=1 // pred_check_branch
      %114 = sbr.rel (0) target = $region105
    $region104: #{_lambda_.2} parent=1 // pred_region
      %115 = dma.done [#allocation6], 1024
    $region105: #{_lambda_.2} parent=1 // pred_fallthru
      _
    %v117 = vld [vmem:[%s0] sm:$0xff]
    %v118 = vld [vmem:[%s0 + $0x8] sm:$0x11]
    %v119 = vld [vmem:[#allocation2] sm:$0xf]
    %v120 = vld [vmem:[#allocation2 + $0x4] sm:$0xf]
    %v121 = vld [vmem:[#allocation2 + $0x8] sm:$0xf]
    %v122 = vld [vmem:[#allocation2 + $0xc] sm:$0xf]
    %v123 = vld [vmem:[#allocation2 + $0x10] sm:$0xf]
    %v124 = vld [vmem:[#allocation2 + $0x14] sm:$0xf]
    %v125 = vld [vmem:[#allocation2 + $0x18] sm:$0xf]
    %v126 = vld [vmem:[#allocation2 + $0x1c] sm:$0xf]
    %v127 = vld [vmem:[#allocation2 + $0x20] sm:$0xf]
    %v128 = vld [vmem:[#allocation2 + $0x24] sm:$0xf]
    %v129 = vld [vmem:[#allocation2 + $0x28] sm:$0xf]
    %v130 = vld [vmem:[#allocation2 + $0x2c] sm:$0xf]
    %v131 = vld [vmem:[#allocation2 + $0x30] sm:$0xf]
    %v132 = vld [vmem:[#allocation2 + $0x34] sm:$0xf]
    %v133 = vld [vmem:[#allocation2 + $0x38] sm:$0xf]
    %v134 = vld [vmem:[#allocation2 + $0x3c] sm:$0xf]
    %v135 = vld [vmem:[#allocation2 + $0x40] sm:$0xf]
    %v136 = vld [vmem:[#allocation2 + $0x44] sm:$0xf]
    %v137 = vld [vmem:[#allocation2 + $0x48] sm:$0xf]
    %v138 = vld [vmem:[#allocation2 + $0x4c] sm:$0xf]
    %v139 = vld [vmem:[#allocation2 + $0x50] sm:$0xf]
    %v140 = vld [vmem:[#allocation2 + $0x54] sm:$0xf]
    %v141 = vld [vmem:[#allocation2 + $0x58] sm:$0xf]
    %v142 = vld [vmem:[#allocation2 + $0x5c] sm:$0xf]
    %v143 = vld [vmem:[%s3] sm:$0xff]
    %v144 = vld [vmem:[%s3 + $0x8] sm:$0x3]
    %v145 = vld [vmem:[%s2] sm:$0x1f]
    %vm146 = vcmask 39936
    %v148 = vsel %vm146, %v143, 0
    %v151 = vsel %vm146, %v144, 0
    %vm153 = vcmask 1044480
    %v155 = vsel %vm153, %v145, 0
    %157 = vmatprep.subr.mxu0 0.0
    %158 = vmatpush1.msra.mxu0 0.0
    %159 = vmatprep.subr.mxu0 0.0
    %160 = vmatpush1.msra.mxu0 0.0
    %161 = vmatprep.subr.mxu0 0.0
    %162 = vmatpush1.msra.mxu0 0.0
    %163 = vmatprep.subr.mxu0 0.0
    %164 = vmatpush1.msra.mxu0 0.0
    %165 = vmatprep.subr.mxu0 0.0
    %166 = vmatpush1.msra.mxu0 0.0
    %167 = vmatprep.subr.mxu0 0.0
    %168 = vmatpush1.msra.mxu0 0.0
    %169 = vmatprep.subr.mxu0 0.0
    %170 = vmatpush1.msra.mxu0 0.0
    %171 = vmatprep.subr.mxu0 0.0
    %172 = vmatpush1.msra.mxu0 0.0
    %173 = vmatprep.subr.mxu0 0.0
    %174 = vmatpush1.msra.mxu0 0.0
    %175 = vmatprep.subr.mxu0 0.0
    %176 = vmatpush1.msra.mxu0 0.0
    %177 = vmatprep.subr.mxu0 0.0
    %178 = vmatpush1.msra.mxu0 0.0
    %179 = vmatprep.subr.mxu0 0.0
    %180 = vmatpush1.msra.mxu0 0.0
    %181 = vmatprep.subr.mxu0 0.0
    %182 = vmatpush1.msra.mxu0 0.0
    %183 = vmatprep.subr.mxu0 0.0
    %184 = vmatpush1.msra.mxu0 0.0
    %185 = vmatprep.subr.mxu0 0.0
    %186 = vmatpush1.msra.mxu0 0.0
    %187 = vmatprep.subr.mxu0 0.0
    %188 = vmatpush1.msra.mxu0 %v155
    %189 = vmatprep.subr.mxu0 0.0
    %190 = vmatpush2.msra.mxu0 0.0
    %191 = vmatprep.subr.mxu0 0.0
    %192 = vmatpush2.msra.mxu0 0.0
    %193 = vmatprep.subr.mxu0 0.0
    %194 = vmatpush2.msra.mxu0 0.0
    %195 = vmatprep.subr.mxu0 0.0
    %196 = vmatpush2.msra.mxu0 0.0
    %197 = vmatprep.subr.mxu0 0.0
    %198 = vmatpush2.msra.mxu0 0.0
    %199 = vmatprep.subr.mxu0 0.0
    %200 = vmatpush2.msra.mxu0 0.0
    %201 = vmatprep.subr.mxu0 0.0
    %202 = vmatpush2.msra.mxu0 0.0
    %203 = vmatprep.subr.mxu0 0.0
    %204 = vmatpush2.msra.mxu0 0.0
    %205 = vmatprep.subr.mxu0 0.0
    %206 = vmatpush2.msra.mxu0 0.0
    %207 = vmatprep.subr.mxu0 0.0
    %208 = vmatpush2.msra.mxu0 0.0
    %209 = vmatprep.subr.mxu0 0.0
    %210 = vmatpush2.msra.mxu0 0.0
    %211 = vmatprep.subr.mxu0 0.0
    %212 = vmatpush2.msra.mxu0 0.0
    %213 = vmatprep.subr.mxu0 0.0
    %214 = vmatpush2.msra.mxu0 0.0
    %215 = vmatprep.subr.mxu0 0.0
    %216 = vmatpush2.msra.mxu0 0.0
    %217 = vmatprep.subr.mxu0 0.0
    %218 = vmatpush2.msra.mxu0 0.0
    %219 = vmatprep.subr.mxu0 0.0
    %220 = vmatpush2.msra.mxu0 0.0
    %221 = vmatprep.mubr.f32.mxu0 0.0
    %222 = vmatmul.mubr.f32.gmra.mxu0 %v148
    %v223 = vpop.f32.mrf.mxu0
    %v224 = vadd.f32 0.0, %v223
    %v225 = vpop.f32.mrf.mxu0
    %226 = vmatprep.mubr.f32.mxu0 0.0
    %227 = vmatmul.mubr.f32.gmra.mxu0 %v151
    %v228 = vpop.f32.mrf.mxu0
    %v229 = vadd.f32 0.0, %v228
    %v230 = vpop.f32.mrf.mxu0
    %231 = vdwg.mxu0
    %v234 = vunpack.c.l.b16 %v117
    %v235 = vunpack.c.h.b16 %v117
    %v236 = vunpack.c.l.b16 %v118
    %v237 = vunpack.c.h.b16 %v118
    %v238 = vpack.c.b16 %v236, %v234
    %v239 = vpack.c.b16 %v237, %v235
    %v265 = vunpack.c.l.b16 %v119
    %v266 = vunpack.c.l.b16 %v120
    %v267 = vunpack.c.l.b16 %v121
    %v268 = vunpack.c.l.b16 %v122
    %v269 = vunpack.c.l.b16 %v123
    %v270 = vunpack.c.l.b16 %v124
    %v271 = vunpack.c.l.b16 %v125
    %v272 = vunpack.c.l.b16 %v126
    %v273 = vunpack.c.l.b16 %v127
    %v274 = vunpack.c.l.b16 %v128
    %v275 = vunpack.c.l.b16 %v129
    %v276 = vunpack.c.l.b16 %v130
    %v277 = vunpack.c.l.b16 %v131
    %v278 = vunpack.c.l.b16 %v132
    %v279 = vunpack.c.l.b16 %v133
    %v280 = vunpack.c.l.b16 %v134
    %v281 = vunpack.c.l.b16 %v135
    %v282 = vunpack.c.l.b16 %v136
    %v283 = vunpack.c.l.b16 %v137
    %v284 = vunpack.c.l.b16 %v138
    %v285 = vunpack.c.l.b16 %v139
    %v286 = vunpack.c.l.b16 %v140
    %v287 = vunpack.c.l.b16 %v141
    %v288 = vunpack.c.l.b16 %v142
    %v289 = vpack.c.b16 %v266, %v265
    %v290 = vpack.c.b16 %v268, %v267
    %v291 = vpack.c.b16 %v270, %v269
    %v292 = vpack.c.b16 %v272, %v271
    %v293 = vpack.c.b16 %v274, %v273
    %v294 = vpack.c.b16 %v276, %v275
    %v295 = vpack.c.b16 %v278, %v277
    %v296 = vpack.c.b16 %v280, %v279
    %v297 = vpack.c.b16 %v282, %v281
    %v298 = vpack.c.b16 %v284, %v283
    %v299 = vpack.c.b16 %v286, %v285
    %v300 = vpack.c.b16 %v288, %v287
    %vm313 = vcmask 523264
    %v315 = vsel %vm313, %v239, 0
    %317 = vmatprep.subr.bf16.mxu0 0
    %318 = vmatpush1.bf16.msra.mxu0 %v296
    %319 = vmatprep.subr.bf16.mxu0 0
    %320 = vmatpush1.bf16.msra.mxu0 %v295
    %321 = vmatprep.subr.bf16.mxu0 0
    %322 = vmatpush1.bf16.msra.mxu0 %v294
    %323 = vmatprep.subr.bf16.mxu0 0
    %324 = vmatpush1.bf16.msra.mxu0 %v293
    %325 = vmatprep.subr.bf16.mxu0 0
    %326 = vmatpush1.bf16.msra.mxu0 %v292
    %327 = vmatprep.subr.bf16.mxu0 0
    %328 = vmatpush1.bf16.msra.mxu0 %v291
    %329 = vmatprep.subr.bf16.mxu0 0
    %330 = vmatpush1.bf16.msra.mxu0 %v290
    %331 = vmatprep.subr.bf16.mxu0 0
    %332 = vmatpush1.bf16.msra.mxu0 %v289
    %333 = vmatprep.subr.bf16.mxu0 0
    %334 = vmatpush2.bf16.msra.mxu0 0
    %335 = vmatprep.subr.bf16.mxu0 0
    %336 = vmatpush2.bf16.msra.mxu0 0
    %337 = vmatprep.subr.bf16.mxu0 0
    %338 = vmatpush2.bf16.msra.mxu0 0
    %339 = vmatprep.subr.bf16.mxu0 0
    %340 = vmatpush2.bf16.msra.mxu0 0
    %341 = vmatprep.subr.bf16.mxu0 0
    %342 = vmatpush2.bf16.msra.mxu0 %v300
    %343 = vmatprep.subr.bf16.mxu0 0
    %344 = vmatpush2.bf16.msra.mxu0 %v299
    %345 = vmatprep.subr.bf16.mxu0 0
    %346 = vmatpush2.bf16.msra.mxu0 %v298
    %347 = vmatprep.subr.bf16.mxu0 0
    %348 = vmatpush2.bf16.msra.mxu0 %v297
    %349 = vmatprep.mubr.bf16.mxu0 %v315
    %350 = vmatmul.mubr.bf16.gmra.mxu0 %v238
    %v351 = vpop.f32.mrf.mxu0
    %v352 = vadd.f32 %v224, %v351
    %v353 = vpop.f32.mrf.mxu0
    %v354 = vpop.f32.mrf.mxu0
    %v355 = vadd.f32 %v229, %v354
    %v356 = vpop.f32.mrf.mxu0
    %357 = vdwg.mxu0
    %v358 = vld [vmem:[%s4] sm:$0x1]
    %v359 = vld [vmem:[%s5] sm:$0x1]
    %360 = vadd.xlane.f32.xlu0 %v352
    %v361 = vpop.xlane.xlu0 %360
    %vm362 = vcmask 1041408
    %v363 = vsel %vm362, %v355, 0.0
    %364 = vadd.xlane.f32.xlu0 %v363
    %v365 = vpop.xlane.xlu0 %364
    %v366 = vrcp.pop 128.0
    %v367 = vmul.f32 %v361, %v366
    %v368 = vmul.f32 %v365, %v366
    %v369 = vsub.f32 %v352, %v367
    %v370 = vsub.f32 %v355, %v368
    %v371 = vmul.f32 %v369, %v369
    %v372 = vmul.f32 %v370, %v370
    %373 = vadd.xlane.f32.xlu0 %v371
    %v374 = vpop.xlane.xlu0 %373
    %v375 = vsel %vm362, %v372, 0.0
    %376 = vadd.xlane.f32.xlu0 %v375
    %v377 = vpop.xlane.xlu0 %376
    %v378 = vmul.f32 %v374, %v366
    %v379 = vmul.f32 %v377, %v366
    %v380 = vadd.f32 %v378, 1e-05
    %v381 = vadd.f32 %v379, 1e-05
    %v382 = vrsqrt.pop %v380
    %v383 = vrsqrt.pop %v381
    %v384 = vmul.f32 %v369, %v382
    %v385 = vmul.f32 %v370, %v383
    %v387 = vlaneseq
    %v388 = vshrl.u32 %v387, 7
    %v389 = vsub.s32 0, %v388
    %v390 = vrot.slane %v358, %v389
    %v392 = vmul.f32 %v384, %v390
    %v393 = vmul.f32 %v385, %v390
    %v395 = vlaneseq
    %v396 = vshrl.u32 %v395, 7
    %v397 = vsub.s32 0, %v396
    %v398 = vrot.slane %v359, %v397
    %v400 = vadd.f32 %v392, %v398
    %v401 = vadd.f32 %v393, %v398
    %v402 = vld [vmem:[%s6] sm:$0x1]
    %v403 = vld [vmem:[%s7] sm:$0x1]
    %404 = vadd.xlane.f32.xlu0 %v400
    %v405 = vpop.xlane.xlu0 %404
    %v406 = vsel %vm362, %v401, 0.0
    %407 = vadd.xlane.f32.xlu0 %v406
    %v408 = vpop.xlane.xlu0 %407
    %v409 = vmul.f32 %v405, %v366
    %v410 = vmul.f32 %v408, %v366
    %v411 = vsub.f32 %v400, %v409
    %v412 = vsub.f32 %v401, %v410
    %v413 = vmul.f32 %v411, %v411
    %v414 = vmul.f32 %v412, %v412
    %415 = vadd.xlane.f32.xlu0 %v413
    %v416 = vpop.xlane.xlu0 %415
    %v417 = vsel %vm362, %v414, 0.0
    %418 = vadd.xlane.f32.xlu0 %v417
    %v419 = vpop.xlane.xlu0 %418
    %v420 = vmul.f32 %v416, %v366
    %v421 = vmul.f32 %v419, %v366
    %v422 = vadd.f32 %v420, 1e-05
    %v423 = vadd.f32 %v421, 1e-05
    %v424 = vrsqrt.pop %v422
    %v425 = vrsqrt.pop %v423
    %v426 = vmul.f32 %v411, %v424
    %v427 = vmul.f32 %v412, %v425
    %v429 = vlaneseq
    %v430 = vshrl.u32 %v429, 7
    %v431 = vsub.s32 0, %v430
    %v432 = vrot.slane %v402, %v431
    %v434 = vmul.f32 %v426, %v432
    %v435 = vmul.f32 %v427, %v432
    %v437 = vlaneseq
    %v438 = vshrl.u32 %v437, 7
    %v439 = vsub.s32 0, %v438
    %v440 = vrot.slane %v403, %v439
    %v442 = vadd.f32 %v434, %v440
    %v443 = vadd.f32 %v435, %v440
    %v444 = vpack.c.bf16 %v443, %v442
    %v445 = vld [vmem:[%s8] sm:$0xff]
    %v446 = vld [vmem:[%s8 + $0x8] sm:$0xf]
    %v447 = vld [vmem:[%s8 + $0xc] sm:$0xff]
    %v448 = vld [vmem:[%s8 + $0x14] sm:$0xf]
    %v449 = vld [vmem:[%s8 + $0x18] sm:$0xff]
    %v450 = vld [vmem:[%s8 + $0x20] sm:$0xf]
    %v451 = vld [vmem:[%s8 + $0x24] sm:$0xff]
    %v452 = vld [vmem:[%s8 + $0x2c] sm:$0xf]
    %v453 = vld [vmem:[%s8 + $0x30] sm:$0xff]
    %v454 = vld [vmem:[%s8 + $0x38] sm:$0xf]
    %v455 = vld [vmem:[%s8 + $0x3c] sm:$0xff]
    %v456 = vld [vmem:[%s8 + $0x44] sm:$0xf]
    %v457 = vld [vmem:[%s8 + $0x48] sm:$0xff]
    %v458 = vld [vmem:[%s8 + $0x50] sm:$0xf]
    %v459 = vld [vmem:[%s8 + $0x54] sm:$0xff]
    %v460 = vld [vmem:[%s8 + $0x5c] sm:$0xf]
    %v461 = vld [vmem:[%s8 + $0x60] sm:$0xff]
    %v462 = vld [vmem:[%s8 + $0x68] sm:$0xf]
    %v463 = vld [vmem:[%s8 + $0x6c] sm:$0xff]
    %v464 = vld [vmem:[%s8 + $0x74] sm:$0xf]
    %v465 = vld [vmem:[%s8 + $0x78] sm:$0xff]
    %v466 = vld [vmem:[%s8 + $0x80] sm:$0xf]
    %v467 = vld [vmem:[%s8 + $0x84] sm:$0xff]
    %v468 = vld [vmem:[%s8 + $0x8c] sm:$0xf]
    %v469 = vld [vmem:[%s8 + $0x90] sm:$0xff]
    %v470 = vld [vmem:[%s8 + $0x98] sm:$0xf]
    %v471 = vld [vmem:[%s8 + $0x9c] sm:$0xff]
    %v472 = vld [vmem:[%s8 + $0xa4] sm:$0xf]
    %v473 = vld [vmem:[%s8 + $0xa8] sm:$0xff]
    %v474 = vld [vmem:[%s8 + $0xb0] sm:$0xf]
    %v475 = vld [vmem:[%s8 + $0xb4] sm:$0xff]
    %v476 = vld [vmem:[%s8 + $0xbc] sm:$0xf]
    %v477 = vld [vmem:[%s9] sm:$0x7]
    %v479 = vlaneseq
    %v480 = vshrl.u32 %v479, 7
    %v481 = vsub.s32 0, %v480
    %v482 = vrot.slane %v477, %v481
    %v483 = vlaneseq
    %v484 = vshrl.u32 %v483, 7
    %v485 = vsub.s32 1, %v484
    %v486 = vrot.slane %v477, %v485
    %v487 = vlaneseq
    %v488 = vshrl.u32 %v487, 7
    %v489 = vsub.s32 2, %v488
    %v490 = vrot.slane %v477, %v489
    %v526 = vunpack.c.l.b16 %v445
    %v527 = vunpack.c.h.b16 %v445
    %v528 = vunpack.c.l.b16 %v446
    %v529 = vunpack.c.l.b16 %v447
    %v530 = vunpack.c.h.b16 %v447
    %v531 = vunpack.c.l.b16 %v448
    %v532 = vunpack.c.l.b16 %v449
    %v533 = vunpack.c.h.b16 %v449
    %v534 = vunpack.c.l.b16 %v450
    %v535 = vunpack.c.l.b16 %v451
    %v536 = vunpack.c.h.b16 %v451
    %v537 = vunpack.c.l.b16 %v452
    %v538 = vunpack.c.l.b16 %v453
    %v539 = vunpack.c.h.b16 %v453
    %v540 = vunpack.c.l.b16 %v454
    %v541 = vunpack.c.l.b16 %v455
    %v542 = vunpack.c.h.b16 %v455
    %v543 = vunpack.c.l.b16 %v456
    %v544 = vunpack.c.l.b16 %v457
    %v545 = vunpack.c.h.b16 %v457
    %v546 = vunpack.c.l.b16 %v458
    %v547 = vunpack.c.l.b16 %v459
    %v548 = vunpack.c.h.b16 %v459
    %v549 = vunpack.c.l.b16 %v460
    %v550 = vunpack.c.l.b16 %v461
    %v551 = vunpack.c.h.b16 %v461
    %v552 = vunpack.c.l.b16 %v462
    %v553 = vunpack.c.l.b16 %v463
    %v554 = vunpack.c.h.b16 %v463
    %v555 = vunpack.c.l.b16 %v464
    %v556 = vunpack.c.l.b16 %v465
    %v557 = vunpack.c.h.b16 %v465
    %v558 = vunpack.c.l.b16 %v466
    %v559 = vunpack.c.l.b16 %v467
    %v560 = vunpack.c.h.b16 %v467
    %v561 = vunpack.c.l.b16 %v468
    %v562 = vunpack.c.l.b16 %v469
    %v563 = vunpack.c.h.b16 %v469
    %v564 = vunpack.c.l.b16 %v470
    %v565 = vunpack.c.l.b16 %v471
    %v566 = vunpack.c.h.b16 %v471
    %v567 = vunpack.c.l.b16 %v472
    %v568 = vunpack.c.l.b16 %v473
    %v569 = vunpack.c.h.b16 %v473
    %v570 = vunpack.c.l.b16 %v474
    %v571 = vunpack.c.l.b16 %v475
    %v572 = vunpack.c.h.b16 %v475
    %v573 = vunpack.c.l.b16 %v476
    %v574 = vpack.c.b16 %v529, %v526
    %v575 = vpack.c.b16 %v530, %v527
    %v576 = vpack.c.b16 %v531, %v528
    %v577 = vpack.c.b16 %v535, %v532
    %v578 = vpack.c.b16 %v536, %v533
    %v579 = vpack.c.b16 %v537, %v534
    %v580 = vpack.c.b16 %v541, %v538
    %v581 = vpack.c.b16 %v542, %v539
    %v582 = vpack.c.b16 %v543, %v540
    %v583 = vpack.c.b16 %v547, %v544
    %v584 = vpack.c.b16 %v548, %v545
    %v585 = vpack.c.b16 %v549, %v546
    %v586 = vpack.c.b16 %v553, %v550
    %v587 = vpack.c.b16 %v554, %v551
    %v588 = vpack.c.b16 %v555, %v552
    %v589 = vpack.c.b16 %v559, %v556
    %v590 = vpack.c.b16 %v560, %v557
    %v591 = vpack.c.b16 %v561, %v558
    %v592 = vpack.c.b16 %v565, %v562
    %v593 = vpack.c.b16 %v566, %v563
    %v594 = vpack.c.b16 %v567, %v564
    %v595 = vpack.c.b16 %v571, %v568
    %v596 = vpack.c.b16 %v572, %v569
    %v597 = vpack.c.b16 %v573, %v570
    %622 = vmatprep.subr.bf16.mxu0 %v596
    %623 = vmatpush1.bf16.msra.mxu0 %v595
    %624 = vmatprep.subr.bf16.mxu0 %v593
    %625 = vmatpush1.bf16.msra.mxu0 %v592
    %626 = vmatprep.subr.bf16.mxu0 %v590
    %627 = vmatpush1.bf16.msra.mxu0 %v589
    %628 = vmatprep.subr.bf16.mxu0 %v587
    %629 = vmatpush1.bf16.msra.mxu0 %v586
    %630 = vmatprep.subr.bf16.mxu0 %v584
    %631 = vmatpush1.bf16.msra.mxu0 %v583
    %632 = vmatprep.subr.bf16.mxu0 %v581
    %633 = vmatpush1.bf16.msra.mxu0 %v580
    %634 = vmatprep.subr.bf16.mxu0 %v578
    %635 = vmatpush1.bf16.msra.mxu0 %v577
    %636 = vmatprep.subr.bf16.mxu0 %v575
    %637 = vmatpush1.bf16.msra.mxu0 %v574
    %638 = vmatprep.subr.bf16.mxu0 0
    %639 = vmatpush2.bf16.msra.mxu0 0
    %640 = vmatprep.subr.bf16.mxu0 0
    %641 = vmatpush2.bf16.msra.mxu0 0
    %642 = vmatprep.subr.bf16.mxu0 0
    %643 = vmatpush2.bf16.msra.mxu0 0
    %644 = vmatprep.subr.bf16.mxu0 0
    %645 = vmatpush2.bf16.msra.mxu0 0
    %646 = vmatprep.subr.bf16.mxu0 0
    %647 = vmatpush2.bf16.msra.mxu0 0
    %648 = vmatprep.subr.bf16.mxu0 0
    %649 = vmatpush2.bf16.msra.mxu0 0
    %650 = vmatprep.subr.bf16.mxu0 0
    %651 = vmatpush2.bf16.msra.mxu0 0
    %652 = vmatprep.subr.bf16.mxu0 0
    %653 = vmatpush2.bf16.msra.mxu0 0
    %654 = vmatprep.mubr.bf16.mxu0 0
    %655 = vmatmul.mubr.bf16.gmra.mxu0 %v444
    %v656 = vpop.f32.mrf.mxu0
    %v657 = vadd.f32 %v482, %v656
    %v658 = vpop.f32.mrf.mxu0
    %v659 = vadd.f32 %v486, %v658
    %v660 = vpop.f32.mrf.mxu0
    %v661 = vadd.f32 %v482, %v660
    %v662 = vpop.f32.mrf.mxu0
    %v663 = vadd.f32 %v486, %v662
    %664 = vdwg.mxu0
    %665 = vmatprep.subr.bf16.mxu0 0
    %666 = vmatpush1.bf16.msra.mxu0 %v597
    %667 = vmatprep.subr.bf16.mxu0 0
    %668 = vmatpush1.bf16.msra.mxu0 %v594
    %669 = vmatprep.subr.bf16.mxu0 0
    %670 = vmatpush1.bf16.msra.mxu0 %v591
    %671 = vmatprep.subr.bf16.mxu0 0
    %672 = vmatpush1.bf16.msra.mxu0 %v588
    %673 = vmatprep.subr.bf16.mxu0 0
    %674 = vmatpush1.bf16.msra.mxu0 %v585
    %675 = vmatprep.subr.bf16.mxu0 0
    %676 = vmatpush1.bf16.msra.mxu0 %v582
    %677 = vmatprep.subr.bf16.mxu0 0
    %678 = vmatpush1.bf16.msra.mxu0 %v579
    %679 = vmatprep.subr.bf16.mxu0 0
    %680 = vmatpush1.bf16.msra.mxu0 %v576
    %681 = vmatprep.subr.bf16.mxu0 0
    %682 = vmatpush2.bf16.msra.mxu0 0
    %683 = vmatprep.subr.bf16.mxu0 0
    %684 = vmatpush2.bf16.msra.mxu0 0
    %685 = vmatprep.subr.bf16.mxu0 0
    %686 = vmatpush2.bf16.msra.mxu0 0
    %687 = vmatprep.subr.bf16.mxu0 0
    %688 = vmatpush2.bf16.msra.mxu0 0
    %689 = vmatprep.subr.bf16.mxu0 0
    %690 = vmatpush2.bf16.msra.mxu0 0
    %691 = vmatprep.subr.bf16.mxu0 0
    %692 = vmatpush2.bf16.msra.mxu0 0
    %693 = vmatprep.subr.bf16.mxu0 0
    %694 = vmatpush2.bf16.msra.mxu0 0
    %695 = vmatprep.subr.bf16.mxu0 0
    %696 = vmatpush2.bf16.msra.mxu0 0
    %697 = vmatprep.mubr.bf16.mxu0 0
    %698 = vmatmul.mubr.bf16.gmra.mxu0 %v444
    %v699 = vpop.f32.mrf.mxu0
    %v700 = vadd.f32 %v490, %v699
    %v701 = vpop.f32.mrf.mxu0
    %v702 = vpop.f32.mrf.mxu0
    %v703 = vadd.f32 %v490, %v702
    %v704 = vpop.f32.mrf.mxu0
    %705 = vdwg.mxu0
    %v706 = vpack.c.bf16 %v661, %v657
    %v707 = vpack.c.bf16 %v663, %v659
    %v708 = vld [vmem:[%s22] sm:$0xff]
    %v709 = vld [vmem:[%s22 + $0x8] sm:$0x3]
    %710 = vmatprep.subr.bf16.mxu0 0
    %711 = vmatpush1.bf16.xpose.msra.mxu0 0
    %712 = vmatprep.subr.bf16.mxu0 0
    %713 = vmatpush1.bf16.xpose.msra.mxu0 0
    %714 = vmatprep.subr.bf16.mxu0 0
    %715 = vmatpush1.bf16.xpose.msra.mxu0 0
    %716 = vmatprep.subr.bf16.mxu0 0
    %717 = vmatpush1.bf16.xpose.msra.mxu0 0
    %718 = vmatprep.subr.bf16.mxu0 0
    %719 = vmatpush1.bf16.xpose.msra.mxu0 0
    %720 = vmatprep.subr.bf16.mxu0 0
    %721 = vmatpush1.bf16.xpose.msra.mxu0 0
    %722 = vmatprep.subr.bf16.mxu0 0
    %723 = vmatpush1.bf16.xpose.msra.mxu0 0
    %724 = vmatprep.subr.bf16.mxu0 0
    %725 = vmatpush1.bf16.xpose.msra.mxu0 %v707
    %726 = vmatprep.subr.bf16.mxu0 0
    %727 = vmatpush2.bf16.xpose.msra.mxu0 0
    %728 = vmatprep.subr.bf16.mxu0 0
    %729 = vmatpush2.bf16.xpose.msra.mxu0 0
    %730 = vmatprep.subr.bf16.mxu0 0
    %731 = vmatpush2.bf16.xpose.msra.mxu0 0
    %732 = vmatprep.subr.bf16.mxu0 0
    %733 = vmatpush2.bf16.xpose.msra.mxu0 0
    %734 = vmatprep.subr.bf16.mxu0 0
    %735 = vmatpush2.bf16.xpose.msra.mxu0 0
    %736 = vmatprep.subr.bf16.mxu0 0
    %737 = vmatpush2.bf16.xpose.msra.mxu0 0
    %738 = vmatprep.subr.bf16.mxu0 0
    %739 = vmatpush2.bf16.xpose.msra.mxu0 0
    %740 = vmatprep.subr.bf16.mxu0 0
    %741 = vmatpush2.bf16.xpose.msra.mxu0 0
    %742 = vmatprep.mubr.bf16.mxu0 0
    %743 = vmatmul.mubr.bf16.gmra.mxu0 %v706
    %v744 = vpop.f32.mrf.mxu0
    %v745 = vadd.f32 %v708, %v744
    %v746 = vpop.f32.mrf.mxu0
    %v747 = vpop.f32.mrf.mxu0
    %v748 = vadd.f32 %v709, %v747
    %v749 = vpop.f32.mrf.mxu0
    %750 = vdwg.mxu0
    %vm751 = vcmask 80896
    %v752 = vsel %vm751, %v745, -inf
    %753 = vmax.xlane.f32.xlu0 %v752
    %v754 = vpop.xlane.xlu0 %753
    %vm755 = vcmask 74752
    %v756 = vsel %vm755, %v748, -inf
    %757 = vmax.xlane.f32.xlu0 %v756
    %v758 = vpop.xlane.xlu0 %757
    %v759 = vsub.f32 %v745, %v754
    %v760 = vsub.f32 %v748, %v758
    %v761 = vmul.f32 %v759, 1.442695
    %v762 = vpow.pop %v761
    %v763 = vmul.f32 %v760, 1.442695
    %v764 = vpow.pop %v763
    %v765 = vsel %vm751, %v762, 0.0
    %766 = vadd.xlane.f32.xlu0 %v765
    %v767 = vpop.xlane.xlu0 %766
    %v768 = vsel %vm755, %v764, 0.0
    %769 = vadd.xlane.f32.xlu0 %v768
    %v770 = vpop.xlane.xlu0 %769
    %v771 = vrcp.pop %v767
    %v772 = vmul.f32 %v762, %v771
    %v773 = vrcp.pop %v770
    %v774 = vmul.f32 %v764, %v773
    %v775 = vpack.c.bf16 %v774, %v772
    %v776 = vpack.c.bf16 %v703, %v700
    %v778 = vsel %vm751, %v775, 0
    %v781 = vsel %vm153, %v776, 0
    %783 = vmatprep.subr.bf16.mxu0 0
    %784 = vmatpush1.bf16.msra.mxu0 0
    %785 = vmatprep.subr.bf16.mxu0 0
    %786 = vmatpush1.bf16.msra.mxu0 0
    %787 = vmatprep.subr.bf16.mxu0 0
    %788 = vmatpush1.bf16.msra.mxu0 0
    %789 = vmatprep.subr.bf16.mxu0 0
    %790 = vmatpush1.bf16.msra.mxu0 0
    %791 = vmatprep.subr.bf16.mxu0 0
    %792 = vmatpush1.bf16.msra.mxu0 0
    %793 = vmatprep.subr.bf16.mxu0 0
    %794 = vmatpush1.bf16.msra.mxu0 0
    %795 = vmatprep.subr.bf16.mxu0 0
    %796 = vmatpush1.bf16.msra.mxu0 0
    %797 = vmatprep.subr.bf16.mxu0 0
    %798 = vmatpush1.bf16.msra.mxu0 %v781
    %799 = vmatprep.subr.bf16.mxu0 0
    %800 = vmatpush2.bf16.msra.mxu0 0
    %801 = vmatprep.subr.bf16.mxu0 0
    %802 = vmatpush2.bf16.msra.mxu0 0
    %803 = vmatprep.subr.bf16.mxu0 0
    %804 = vmatpush2.bf16.msra.mxu0 0
    %805 = vmatprep.subr.bf16.mxu0 0
    %806 = vmatpush2.bf16.msra.mxu0 0
    %807 = vmatprep.subr.bf16.mxu0 0
    %808 = vmatpush2.bf16.msra.mxu0 0
    %809 = vmatprep.subr.bf16.mxu0 0
    %810 = vmatpush2.bf16.msra.mxu0 0
    %811 = vmatprep.subr.bf16.mxu0 0
    %812 = vmatpush2.bf16.msra.mxu0 0
    %813 = vmatprep.subr.bf16.mxu0 0
    %814 = vmatpush2.bf16.msra.mxu0 0
    %815 = vmatprep.mubr.bf16.mxu0 0
    %816 = vmatmul.mubr.bf16.gmra.mxu0 %v778
    %v817 = vpop.f32.mrf.mxu0
    %v818 = vadd.f32 0.0, %v817
    %v819 = vpop.f32.mrf.mxu0
    %v820 = vpop.f32.mrf.mxu0
    %v821 = vadd.f32 0.0, %v820
    %v822 = vpop.f32.mrf.mxu0
    %823 = vdwg.mxu0
    %v824 = vpack.c.bf16 %v821, %v818
    %v825 = vld [vmem:[#allocation5] sm:$0xf]
    %v826 = vld [vmem:[#allocation5 + $0x4] sm:$0xf]
    %v827 = vld [vmem:[#allocation5 + $0x8] sm:$0xf]
    %v828 = vld [vmem:[#allocation5 + $0xc] sm:$0xf]
    %v829 = vld [vmem:[#allocation5 + $0x10] sm:$0xf]
    %v830 = vld [vmem:[#allocation5 + $0x14] sm:$0xf]
    %v831 = vld [vmem:[#allocation5 + $0x18] sm:$0xf]
    %v832 = vld [vmem:[#allocation5 + $0x1c] sm:$0xf]
    %v833 = vld [vmem:[#allocation5 + $0x20] sm:$0xf]
    %v834 = vld [vmem:[#allocation5 + $0x24] sm:$0xf]
    %v835 = vld [vmem:[#allocation5 + $0x28] sm:$0xf]
    %v836 = vld [vmem:[#allocation5 + $0x2c] sm:$0xf]
    %v837 = vld [vmem:[#allocation5 + $0x30] sm:$0xf]
    %v838 = vld [vmem:[#allocation5 + $0x34] sm:$0xf]
    %v839 = vld [vmem:[#allocation5 + $0x38] sm:$0xf]
    %v840 = vld [vmem:[#allocation5 + $0x3c] sm:$0xf]
    %v841 = vld [vmem:[%s11] sm:$0x1]
    %v843 = vlaneseq
    %v844 = vshrl.u32 %v843, 7
    %v845 = vsub.s32 0, %v844
    %v846 = vrot.slane %v841, %v845
    %v864 = vunpack.c.l.b16 %v825
    %v865 = vunpack.c.l.b16 %v826
    %v866 = vunpack.c.l.b16 %v827
    %v867 = vunpack.c.l.b16 %v828
    %v868 = vunpack.c.l.b16 %v829
    %v869 = vunpack.c.l.b16 %v830
    %v870 = vunpack.c.l.b16 %v831
    %v871 = vunpack.c.l.b16 %v832
    %v872 = vunpack.c.l.b16 %v833
    %v873 = vunpack.c.l.b16 %v834
    %v874 = vunpack.c.l.b16 %v835
    %v875 = vunpack.c.l.b16 %v836
    %v876 = vunpack.c.l.b16 %v837
    %v877 = vunpack.c.l.b16 %v838
    %v878 = vunpack.c.l.b16 %v839
    %v879 = vunpack.c.l.b16 %v840
    %v880 = vpack.c.b16 %v865, %v864
    %v881 = vpack.c.b16 %v867, %v866
    %v882 = vpack.c.b16 %v869, %v868
    %v883 = vpack.c.b16 %v871, %v870
    %v884 = vpack.c.b16 %v873, %v872
    %v885 = vpack.c.b16 %v875, %v874
    %v886 = vpack.c.b16 %v877, %v876
    %v887 = vpack.c.b16 %v879, %v878
    %896 = vmatprep.subr.bf16.mxu0 0
    %897 = vmatpush1.bf16.msra.mxu0 %v887
    %898 = vmatprep.subr.bf16.mxu0 0
    %899 = vmatpush1.bf16.msra.mxu0 %v886
    %900 = vmatprep.subr.bf16.mxu0 0
    %901 = vmatpush1.bf16.msra.mxu0 %v885
    %902 = vmatprep.subr.bf16.mxu0 0
    %903 = vmatpush1.bf16.msra.mxu0 %v884
    %904 = vmatprep.subr.bf16.mxu0 0
    %905 = vmatpush1.bf16.msra.mxu0 %v883
    %906 = vmatprep.subr.bf16.mxu0 0
    %907 = vmatpush1.bf16.msra.mxu0 %v882
    %908 = vmatprep.subr.bf16.mxu0 0
    %909 = vmatpush1.bf16.msra.mxu0 %v881
    %910 = vmatprep.subr.bf16.mxu0 0
    %911 = vmatpush1.bf16.msra.mxu0 %v880
    %912 = vmatprep.subr.bf16.mxu0 0
    %913 = vmatpush2.bf16.msra.mxu0 0
    %914 = vmatprep.subr.bf16.mxu0 0
    %915 = vmatpush2.bf16.msra.mxu0 0
    %916 = vmatprep.subr.bf16.mxu0 0
    %917 = vmatpush2.bf16.msra.mxu0 0
    %918 = vmatprep.subr.bf16.mxu0 0
    %919 = vmatpush2.bf16.msra.mxu0 0
    %920 = vmatprep.subr.bf16.mxu0 0
    %921 = vmatpush2.bf16.msra.mxu0 0
    %922 = vmatprep.subr.bf16.mxu0 0
    %923 = vmatpush2.bf16.msra.mxu0 0
    %924 = vmatprep.subr.bf16.mxu0 0
    %925 = vmatpush2.bf16.msra.mxu0 0
    %926 = vmatprep.subr.bf16.mxu0 0
    %927 = vmatpush2.bf16.msra.mxu0 0
    %928 = vmatprep.mubr.bf16.mxu0 0
    %929 = vmatmul.mubr.bf16.gmra.mxu0 %v824
    %v930 = vpop.f32.mrf.mxu0
    %v931 = vadd.f32 %v846, %v930
    %v932 = vpop.f32.mrf.mxu0
    %v933 = vpop.f32.mrf.mxu0
    %v934 = vadd.f32 %v846, %v933
    %v935 = vpop.f32.mrf.mxu0
    %936 = vdwg.mxu0
    %v937 = vadd.f32 %v400, %v931
    %v938 = vadd.f32 %v401, %v934
    %v939 = vld [vmem:[%s12] sm:$0x1]
    %v940 = vld [vmem:[%s13] sm:$0x1]
    %941 = vadd.xlane.f32.xlu0 %v937
    %v942 = vpop.xlane.xlu0 %941
    %v943 = vsel %vm362, %v938, 0.0
    %944 = vadd.xlane.f32.xlu0 %v943
    %v945 = vpop.xlane.xlu0 %944
    %v946 = vmul.f32 %v942, %v366
    %v947 = vmul.f32 %v945, %v366
    %v948 = vsub.f32 %v937, %v946
    %v949 = vsub.f32 %v938, %v947
    %v950 = vmul.f32 %v948, %v948
    %v951 = vmul.f32 %v949, %v949
    %952 = vadd.xlane.f32.xlu0 %v950
    %v953 = vpop.xlane.xlu0 %952
    %v954 = vsel %vm362, %v951, 0.0
    %955 = vadd.xlane.f32.xlu0 %v954
    %v956 = vpop.xlane.xlu0 %955
    %v957 = vmul.f32 %v953, %v366
    %v958 = vmul.f32 %v956, %v366
    %v959 = vadd.f32 %v957, 1e-05
    %v960 = vadd.f32 %v958, 1e-05
    %v961 = vrsqrt.pop %v959
    %v962 = vrsqrt.pop %v960
    %v963 = vmul.f32 %v948, %v961
    %v964 = vmul.f32 %v949, %v962
    %v966 = vlaneseq
    %v967 = vshrl.u32 %v966, 7
    %v968 = vsub.s32 0, %v967
    %v969 = vrot.slane %v939, %v968
    %v971 = vmul.f32 %v963, %v969
    %v972 = vmul.f32 %v964, %v969
    %v974 = vlaneseq
    %v975 = vshrl.u32 %v974, 7
    %v976 = vsub.s32 0, %v975
    %v977 = vrot.slane %v940, %v976
    %v979 = vadd.f32 %v971, %v977
    %v980 = vadd.f32 %v972, %v977
    %v981 = vpack.c.bf16 %v980, %v979
    %v982 = vld [vmem:[%s14] sm:$0xff]
    %v983 = vld [vmem:[%s14 + $0x8] sm:$0xff]
    %v984 = vld [vmem:[%s14 + $0x10] sm:$0xff]
    %v985 = vld [vmem:[%s14 + $0x18] sm:$0xff]
    %v986 = vld [vmem:[%s14 + $0x20] sm:$0xff]
    %v987 = vld [vmem:[%s14 + $0x28] sm:$0xff]
    %v988 = vld [vmem:[%s14 + $0x30] sm:$0xff]
    %v989 = vld [vmem:[%s14 + $0x38] sm:$0xff]
    %v990 = vld [vmem:[%s14 + $0x40] sm:$0xff]
    %v991 = vld [vmem:[%s14 + $0x48] sm:$0xff]
    %v992 = vld [vmem:[%s14 + $0x50] sm:$0xff]
    %v993 = vld [vmem:[%s14 + $0x58] sm:$0xff]
    %v994 = vld [vmem:[%s14 + $0x60] sm:$0xff]
    %v995 = vld [vmem:[%s14 + $0x68] sm:$0xff]
    %v996 = vld [vmem:[%s14 + $0x70] sm:$0xff]
    %v997 = vld [vmem:[%s14 + $0x78] sm:$0xff]
    %v998 = vld [vmem:[%s14 + $0x80] sm:$0xff]
    %v999 = vld [vmem:[%s14 + $0x88] sm:$0xff]
    %v1000 = vld [vmem:[%s14 + $0x90] sm:$0xff]
    %v1001 = vld [vmem:[%s14 + $0x98] sm:$0xff]
    %v1002 = vld [vmem:[%s14 + $0xa0] sm:$0xff]
    %v1003 = vld [vmem:[%s14 + $0xa8] sm:$0xff]
    %v1004 = vld [vmem:[%s14 + $0xb0] sm:$0xff]
    %v1005 = vld [vmem:[%s14 + $0xb8] sm:$0xff]
    %v1006 = vld [vmem:[%s14 + $0xc0] sm:$0xff]
    %v1007 = vld [vmem:[%s14 + $0xc8] sm:$0xff]
    %v1008 = vld [vmem:[%s14 + $0xd0] sm:$0xff]
    %v1009 = vld [vmem:[%s14 + $0xd8] sm:$0xff]
    %v1010 = vld [vmem:[%s14 + $0xe0] sm:$0xff]
    %v1011 = vld [vmem:[%s14 + $0xe8] sm:$0xff]
    %v1012 = vld [vmem:[%s14 + $0xf0] sm:$0xff]
    %v1013 = vld [vmem:[%s14 + $0xf8] sm:$0xff]
    %v1014 = vld [vmem:[%s15] sm:$0xf]
    %v1016 = vlaneseq
    %v1017 = vshrl.u32 %v1016, 7
    %v1018 = vsub.s32 0, %v1017
    %v1019 = vrot.slane %v1014, %v1018
    %v1020 = vlaneseq
    %v1021 = vshrl.u32 %v1020, 7
    %v1022 = vsub.s32 1, %v1021
    %v1023 = vrot.slane %v1014, %v1022
    %v1024 = vlaneseq
    %v1025 = vshrl.u32 %v1024, 7
    %v1026 = vsub.s32 2, %v1025
    %v1027 = vrot.slane %v1014, %v1026
    %v1028 = vlaneseq
    %v1029 = vshrl.u32 %v1028, 7
    %v1030 = vsub.s32 3, %v1029
    %v1031 = vrot.slane %v1014, %v1030
    %v1068 = vunpack.c.l.b16 %v982
    %v1069 = vunpack.c.h.b16 %v982
    %v1070 = vunpack.c.l.b16 %v983
    %v1071 = vunpack.c.h.b16 %v983
    %v1072 = vunpack.c.l.b16 %v984
    %v1073 = vunpack.c.h.b16 %v984
    %v1074 = vunpack.c.l.b16 %v985
    %v1075 = vunpack.c.h.b16 %v985
    %v1076 = vunpack.c.l.b16 %v986
    %v1077 = vunpack.c.h.b16 %v986
    %v1078 = vunpack.c.l.b16 %v987
    %v1079 = vunpack.c.h.b16 %v987
    %v1080 = vunpack.c.l.b16 %v988
    %v1081 = vunpack.c.h.b16 %v988
    %v1082 = vunpack.c.l.b16 %v989
    %v1083 = vunpack.c.h.b16 %v989
    %v1084 = vunpack.c.l.b16 %v990
    %v1085 = vunpack.c.h.b16 %v990
    %v1086 = vunpack.c.l.b16 %v991
    %v1087 = vunpack.c.h.b16 %v991
    %v1088 = vunpack.c.l.b16 %v992
    %v1089 = vunpack.c.h.b16 %v992
    %v1090 = vunpack.c.l.b16 %v993
    %v1091 = vunpack.c.h.b16 %v993
    %v1092 = vunpack.c.l.b16 %v994
    %v1093 = vunpack.c.h.b16 %v994
    %v1094 = vunpack.c.l.b16 %v995
    %v1095 = vunpack.c.h.b16 %v995
    %v1096 = vunpack.c.l.b16 %v996
    %v1097 = vunpack.c.h.b16 %v996
    %v1098 = vunpack.c.l.b16 %v997
    %v1099 = vunpack.c.h.b16 %v997
    %v1100 = vunpack.c.l.b16 %v998
    %v1101 = vunpack.c.h.b16 %v998
    %v1102 = vunpack.c.l.b16 %v999
    %v1103 = vunpack.c.h.b16 %v999
    %v1104 = vunpack.c.l.b16 %v1000
    %v1105 = vunpack.c.h.b16 %v1000
    %v1106 = vunpack.c.l.b16 %v1001
    %v1107 = vunpack.c.h.b16 %v1001
    %v1108 = vunpack.c.l.b16 %v1002
    %v1109 = vunpack.c.h.b16 %v1002
    %v1110 = vunpack.c.l.b16 %v1003
    %v1111 = vunpack.c.h.b16 %v1003
    %v1112 = vunpack.c.l.b16 %v1004
    %v1113 = vunpack.c.h.b16 %v1004
    %v1114 = vunpack.c.l.b16 %v1005
    %v1115 = vunpack.c.h.b16 %v1005
    %v1116 = vunpack.c.l.b16 %v1006
    %v1117 = vunpack.c.h.b16 %v1006
    %v1118 = vunpack.c.l.b16 %v1007
    %v1119 = vunpack.c.h.b16 %v1007
    %v1120 = vunpack.c.l.b16 %v1008
    %v1121 = vunpack.c.h.b16 %v1008
    %v1122 = vunpack.c.l.b16 %v1009
    %v1123 = vunpack.c.h.b16 %v1009
    %v1124 = vunpack.c.l.b16 %v1010
    %v1125 = vunpack.c.h.b16 %v1010
    %v1126 = vunpack.c.l.b16 %v1011
    %v1127 = vunpack.c.h.b16 %v1011
    %v1128 = vunpack.c.l.b16 %v1012
    %v1129 = vunpack.c.h.b16 %v1012
    %v1130 = vunpack.c.l.b16 %v1013
    %v1131 = vunpack.c.h.b16 %v1013
    %v1132 = vpack.c.b16 %v1072, %v1068
    %v1133 = vpack.c.b16 %v1073, %v1069
    %v1134 = vpack.c.b16 %v1074, %v1070
    %v1135 = vpack.c.b16 %v1075, %v1071
    %v1136 = vpack.c.b16 %v1080, %v1076
    %v1137 = vpack.c.b16 %v1081, %v1077
    %v1138 = vpack.c.b16 %v1082, %v1078
    %v1139 = vpack.c.b16 %v1083, %v1079
    %v1140 = vpack.c.b16 %v1088, %v1084
    %v1141 = vpack.c.b16 %v1089, %v1085
    %v1142 = vpack.c.b16 %v1090, %v1086
    %v1143 = vpack.c.b16 %v1091, %v1087
    %v1144 = vpack.c.b16 %v1096, %v1092
    %v1145 = vpack.c.b16 %v1097, %v1093
    %v1146 = vpack.c.b16 %v1098, %v1094
    %v1147 = vpack.c.b16 %v1099, %v1095
    %v1148 = vpack.c.b16 %v1104, %v1100
    %v1149 = vpack.c.b16 %v1105, %v1101
    %v1150 = vpack.c.b16 %v1106, %v1102
    %v1151 = vpack.c.b16 %v1107, %v1103
    %v1152 = vpack.c.b16 %v1112, %v1108
    %v1153 = vpack.c.b16 %v1113, %v1109
    %v1154 = vpack.c.b16 %v1114, %v1110
    %v1155 = vpack.c.b16 %v1115, %v1111
    %v1156 = vpack.c.b16 %v1120, %v1116
    %v1157 = vpack.c.b16 %v1121, %v1117
    %v1158 = vpack.c.b16 %v1122, %v1118
    %v1159 = vpack.c.b16 %v1123, %v1119
    %v1160 = vpack.c.b16 %v1128, %v1124
    %v1161 = vpack.c.b16 %v1129, %v1125
    %v1162 = vpack.c.b16 %v1130, %v1126
    %v1163 = vpack.c.b16 %v1131, %v1127
    %1196 = vmatprep.subr.bf16.mxu0 %v1161
    %1197 = vmatpush1.bf16.msra.mxu0 %v1160
    %1198 = vmatprep.subr.bf16.mxu0 %v1157
    %1199 = vmatpush1.bf16.msra.mxu0 %v1156
    %1200 = vmatprep.subr.bf16.mxu0 %v1153
    %1201 = vmatpush1.bf16.msra.mxu0 %v1152
    %1202 = vmatprep.subr.bf16.mxu0 %v1149
    %1203 = vmatpush1.bf16.msra.mxu0 %v1148
    %1204 = vmatprep.subr.bf16.mxu0 %v1145
    %1205 = vmatpush1.bf16.msra.mxu0 %v1144
    %1206 = vmatprep.subr.bf16.mxu0 %v1141
    %1207 = vmatpush1.bf16.msra.mxu0 %v1140
    %1208 = vmatprep.subr.bf16.mxu0 %v1137
    %1209 = vmatpush1.bf16.msra.mxu0 %v1136
    %1210 = vmatprep.subr.bf16.mxu0 %v1133
    %1211 = vmatpush1.bf16.msra.mxu0 %v1132
    %1212 = vmatprep.subr.bf16.mxu0 0
    %1213 = vmatpush2.bf16.msra.mxu0 0
    %1214 = vmatprep.subr.bf16.mxu0 0
    %1215 = vmatpush2.bf16.msra.mxu0 0
    %1216 = vmatprep.subr.bf16.mxu0 0
    %1217 = vmatpush2.bf16.msra.mxu0 0
    %1218 = vmatprep.subr.bf16.mxu0 0
    %1219 = vmatpush2.bf16.msra.mxu0 0
    %1220 = vmatprep.subr.bf16.mxu0 0
    %1221 = vmatpush2.bf16.msra.mxu0 0
    %1222 = vmatprep.subr.bf16.mxu0 0
    %1223 = vmatpush2.bf16.msra.mxu0 0
    %1224 = vmatprep.subr.bf16.mxu0 0
    %1225 = vmatpush2.bf16.msra.mxu0 0
    %1226 = vmatprep.subr.bf16.mxu0 0
    %1227 = vmatpush2.bf16.msra.mxu0 0
    %1228 = vmatprep.mubr.bf16.mxu0 0
    %1229 = vmatmul.mubr.bf16.gmra.mxu0 %v981
    %v1230 = vpop.f32.mrf.mxu0
    %v1231 = vadd.f32 %v1019, %v1230
    %v1232 = vpop.f32.mrf.mxu0
    %v1233 = vadd.f32 %v1023, %v1232
    %v1234 = vpop.f32.mrf.mxu0
    %v1235 = vadd.f32 %v1019, %v1234
    %v1236 = vpop.f32.mrf.mxu0
    %v1237 = vadd.f32 %v1023, %v1236
    %1238 = vdwg.mxu0
    %1239 = vmatprep.subr.bf16.mxu0 %v1163
    %1240 = vmatpush1.bf16.msra.mxu0 %v1162
    %1241 = vmatprep.subr.bf16.mxu0 %v1159
    %1242 = vmatpush1.bf16.msra.mxu0 %v1158
    %1243 = vmatprep.subr.bf16.mxu0 %v1155
    %1244 = vmatpush1.bf16.msra.mxu0 %v1154
    %1245 = vmatprep.subr.bf16.mxu0 %v1151
    %1246 = vmatpush1.bf16.msra.mxu0 %v1150
    %1247 = vmatprep.subr.bf16.mxu0 %v1147
    %1248 = vmatpush1.bf16.msra.mxu0 %v1146
    %1249 = vmatprep.subr.bf16.mxu0 %v1143
    %1250 = vmatpush1.bf16.msra.mxu0 %v1142
    %1251 = vmatprep.subr.bf16.mxu0 %v1139
    %1252 = vmatpush1.bf16.msra.mxu0 %v1138
    %1253 = vmatprep.subr.bf16.mxu0 %v1135
    %1254 = vmatpush1.bf16.msra.mxu0 %v1134
    %1255 = vmatprep.subr.bf16.mxu0 0
    %1256 = vmatpush2.bf16.msra.mxu0 0
    %1257 = vmatprep.subr.bf16.mxu0 0
    %1258 = vmatpush2.bf16.msra.mxu0 0
    %1259 = vmatprep.subr.bf16.mxu0 0
    %1260 = vmatpush2.bf16.msra.mxu0 0
    %1261 = vmatprep.subr.bf16.mxu0 0
    %1262 = vmatpush2.bf16.msra.mxu0 0
    %1263 = vmatprep.subr.bf16.mxu0 0
    %1264 = vmatpush2.bf16.msra.mxu0 0
    %1265 = vmatprep.subr.bf16.mxu0 0
    %1266 = vmatpush2.bf16.msra.mxu0 0
    %1267 = vmatprep.subr.bf16.mxu0 0
    %1268 = vmatpush2.bf16.msra.mxu0 0
    %1269 = vmatprep.subr.bf16.mxu0 0
    %1270 = vmatpush2.bf16.msra.mxu0 0
    %1271 = vmatprep.mubr.bf16.mxu0 0
    %1272 = vmatmul.mubr.bf16.gmra.mxu0 %v981
    %v1273 = vpop.f32.mrf.mxu0
    %v1274 = vadd.f32 %v1027, %v1273
    %v1275 = vpop.f32.mrf.mxu0
    %v1276 = vadd.f32 %v1031, %v1275
    %v1277 = vpop.f32.mrf.mxu0
    %v1278 = vadd.f32 %v1027, %v1277
    %v1279 = vpop.f32.mrf.mxu0
    %v1280 = vadd.f32 %v1031, %v1279
    %1281 = vdwg.mxu0
    %v1282 = vmul.f32 %v1231, %v1231
    %v1283 = vmul.f32 %v1233, %v1233
    %v1284 = vmul.f32 %v1274, %v1274
    %v1285 = vmul.f32 %v1276, %v1276
    %v1286 = vmul.f32 %v1235, %v1235
    %v1287 = vmul.f32 %v1237, %v1237
    %v1288 = vmul.f32 %v1278, %v1278
    %v1289 = vmul.f32 %v1280, %v1280
    %v1290 = vmul.f32 %v1231, %v1282
    %v1291 = vmul.f32 %v1233, %v1283
    %v1292 = vmul.f32 %v1274, %v1284
    %v1293 = vmul.f32 %v1276, %v1285
    %v1294 = vmul.f32 %v1235, %v1286
    %v1295 = vmul.f32 %v1237, %v1287
    %v1296 = vmul.f32 %v1278, %v1288
    %v1297 = vmul.f32 %v1280, %v1289
    %v1298 = vmul.f32 %v1290, 0.044715
    %v1299 = vmul.f32 %v1291, 0.044715
    %v1300 = vmul.f32 %v1292, 0.044715
    %v1301 = vmul.f32 %v1293, 0.044715
    %v1302 = vmul.f32 %v1294, 0.044715
    %v1303 = vmul.f32 %v1295, 0.044715
    %v1304 = vmul.f32 %v1296, 0.044715
    %v1305 = vmul.f32 %v1297, 0.044715
    %v1306 = vadd.f32 %v1231, %v1298
    %v1307 = vadd.f32 %v1233, %v1299
    %v1308 = vadd.f32 %v1274, %v1300
    %v1309 = vadd.f32 %v1276, %v1301
    %v1310 = vadd.f32 %v1235, %v1302
    %v1311 = vadd.f32 %v1237, %v1303
    %v1312 = vadd.f32 %v1278, %v1304
    %v1313 = vadd.f32 %v1280, %v1305
    %v1314 = vmul.f32 %v1306, 0.7978846
    %v1315 = vmul.f32 %v1307, 0.7978846
    %v1316 = vmul.f32 %v1308, 0.7978846
    %v1317 = vmul.f32 %v1309, 0.7978846
    %v1318 = vmul.f32 %v1310, 0.7978846
    %v1319 = vmul.f32 %v1311, 0.7978846
    %v1320 = vmul.f32 %v1312, 0.7978846
    %v1321 = vmul.f32 %v1313, 0.7978846
    %v1322 = vtanh.pop %v1314
    %v1323 = vtanh.pop %v1315
    %v1324 = vtanh.pop %v1316
    %v1325 = vtanh.pop %v1317
    %v1326 = vtanh.pop %v1318
    %v1327 = vtanh.pop %v1319
    %v1328 = vtanh.pop %v1320
    %v1329 = vtanh.pop %v1321
    %v1330 = vadd.f32 %v1322, 1.0
    %v1331 = vadd.f32 %v1323, 1.0
    %v1332 = vadd.f32 %v1324, 1.0
    %v1333 = vadd.f32 %v1325, 1.0
    %v1334 = vadd.f32 %v1326, 1.0
    %v1335 = vadd.f32 %v1327, 1.0
    %v1336 = vadd.f32 %v1328, 1.0
    %v1337 = vadd.f32 %v1329, 1.0
    %v1338 = vmul.f32 %v1330, 0.5
    %v1339 = vmul.f32 %v1331, 0.5
    %v1340 = vmul.f32 %v1332, 0.5
    %v1341 = vmul.f32 %v1333, 0.5
    %v1342 = vmul.f32 %v1334, 0.5
    %v1343 = vmul.f32 %v1335, 0.5
    %v1344 = vmul.f32 %v1336, 0.5
    %v1345 = vmul.f32 %v1337, 0.5
    %v1346 = vmul.f32 %v1231, %v1338
    %v1347 = vmul.f32 %v1233, %v1339
    %v1348 = vmul.f32 %v1274, %v1340
    %v1349 = vmul.f32 %v1276, %v1341
    %v1350 = vmul.f32 %v1235, %v1342
    %v1351 = vmul.f32 %v1237, %v1343
    %v1352 = vmul.f32 %v1278, %v1344
    %v1353 = vmul.f32 %v1280, %v1345
    %v1354 = vpack.c.bf16 %v1350, %v1346
    %v1355 = vpack.c.bf16 %v1351, %v1347
    %v1356 = vpack.c.bf16 %v1352, %v1348
    %v1357 = vpack.c.bf16 %v1353, %v1349
    %v1358 = vld [vmem:[%s16] sm:$0xf]
    %v1359 = vld [vmem:[%s16 + $0x4] sm:$0xf]
    %v1360 = vld [vmem:[%s16 + $0x8] sm:$0xf]
    %v1361 = vld [vmem:[%s16 + $0xc] sm:$0xf]
    %v1362 = vld [vmem:[%s16 + $0x10] sm:$0xf]
    %v1363 = vld [vmem:[%s16 + $0x14] sm:$0xf]
    %v1364 = vld [vmem:[%s16 + $0x18] sm:$0xf]
    %v1365 = vld [vmem:[%s16 + $0x1c] sm:$0xf]
    %v1366 = vld [vmem:[%s16 + $0x20] sm:$0xf]
    %v1367 = vld [vmem:[%s16 + $0x24] sm:$0xf]
    %v1368 = vld [vmem:[%s16 + $0x28] sm:$0xf]
    %v1369 = vld [vmem:[%s16 + $0x2c] sm:$0xf]
    %v1370 = vld [vmem:[%s16 + $0x30] sm:$0xf]
    %v1371 = vld [vmem:[%s16 + $0x34] sm:$0xf]
    %v1372 = vld [vmem:[%s16 + $0x38] sm:$0xf]
    %v1373 = vld [vmem:[%s16 + $0x3c] sm:$0xf]
    %v1374 = vld [vmem:[%s16 + $0x40] sm:$0xf]
    %v1375 = vld [vmem:[%s16 + $0x44] sm:$0xf]
    %v1376 = vld [vmem:[%s16 + $0x48] sm:$0xf]
    %v1377 = vld [vmem:[%s16 + $0x4c] sm:$0xf]
    %v1378 = vld [vmem:[%s16 + $0x50] sm:$0xf]
    %v1379 = vld [vmem:[%s16 + $0x54] sm:$0xf]
    %v1380 = vld [vmem:[%s16 + $0x58] sm:$0xf]
    %v1381 = vld [vmem:[%s16 + $0x5c] sm:$0xf]
    %v1382 = vld [vmem:[%s16 + $0x60] sm:$0xf]
    %v1383 = vld [vmem:[%s16 + $0x64] sm:$0xf]
    %v1384 = vld [vmem:[%s16 + $0x68] sm:$0xf]
    %v1385 = vld [vmem:[%s16 + $0x6c] sm:$0xf]
    %v1386 = vld [vmem:[%s16 + $0x70] sm:$0xf]
    %v1387 = vld [vmem:[%s16 + $0x74] sm:$0xf]
    %v1388 = vld [vmem:[%s16 + $0x78] sm:$0xf]
    %v1389 = vld [vmem:[%s16 + $0x7c] sm:$0xf]
    %v1390 = vld [vmem:[%s16 + $0x80] sm:$0xf]
    %v1391 = vld [vmem:[%s16 + $0x84] sm:$0xf]
    %v1392 = vld [vmem:[%s16 + $0x88] sm:$0xf]
    %v1393 = vld [vmem:[%s16 + $0x8c] sm:$0xf]
    %v1394 = vld [vmem:[%s16 + $0x90] sm:$0xf]
    %v1395 = vld [vmem:[%s16 + $0x94] sm:$0xf]
    %v1396 = vld [vmem:[%s16 + $0x98] sm:$0xf]
    %v1397 = vld [vmem:[%s16 + $0x9c] sm:$0xf]
    %v1398 = vld [vmem:[%s16 + $0xa0] sm:$0xf]
    %v1399 = vld [vmem:[%s16 + $0xa4] sm:$0xf]
    %v1400 = vld [vmem:[%s16 + $0xa8] sm:$0xf]
    %v1401 = vld [vmem:[%s16 + $0xac] sm:$0xf]
    %v1402 = vld [vmem:[%s16 + $0xb0] sm:$0xf]
    %v1403 = vld [vmem:[%s16 + $0xb4] sm:$0xf]
    %v1404 = vld [vmem:[%s16 + $0xb8] sm:$0xf]
    %v1405 = vld [vmem:[%s16 + $0xbc] sm:$0xf]
    %v1406 = vld [vmem:[%s16 + $0xc0] sm:$0xf]
    %v1407 = vld [vmem:[%s16 + $0xc4] sm:$0xf]
    %v1408 = vld [vmem:[%s16 + $0xc8] sm:$0xf]
    %v1409 = vld [vmem:[%s16 + $0xcc] sm:$0xf]
    %v1410 = vld [vmem:[%s16 + $0xd0] sm:$0xf]
    %v1411 = vld [vmem:[%s16 + $0xd4] sm:$0xf]
    %v1412 = vld [vmem:[%s16 + $0xd8] sm:$0xf]
    %v1413 = vld [vmem:[%s16 + $0xdc] sm:$0xf]
    %v1414 = vld [vmem:[%s16 + $0xe0] sm:$0xf]
    %v1415 = vld [vmem:[%s16 + $0xe4] sm:$0xf]
    %v1416 = vld [vmem:[%s16 + $0xe8] sm:$0xf]
    %v1417 = vld [vmem:[%s16 + $0xec] sm:$0xf]
    %v1418 = vld [vmem:[%s16 + $0xf0] sm:$0xf]
    %v1419 = vld [vmem:[%s16 + $0xf4] sm:$0xf]
    %v1420 = vld [vmem:[%s16 + $0xf8] sm:$0xf]
    %v1421 = vld [vmem:[%s16 + $0xfc] sm:$0xf]
    %v1422 = vld [vmem:[%s17] sm:$0x1]
    %v1424 = vlaneseq
    %v1425 = vshrl.u32 %v1424, 7
    %v1426 = vsub.s32 0, %v1425
    %v1427 = vrot.slane %v1422, %v1426
    %v1493 = vunpack.c.l.b16 %v1358
    %v1494 = vunpack.c.l.b16 %v1359
    %v1495 = vunpack.c.l.b16 %v1360
    %v1496 = vunpack.c.l.b16 %v1361
    %v1497 = vunpack.c.l.b16 %v1362
    %v1498 = vunpack.c.l.b16 %v1363
    %v1499 = vunpack.c.l.b16 %v1364
    %v1500 = vunpack.c.l.b16 %v1365
    %v1501 = vunpack.c.l.b16 %v1366
    %v1502 = vunpack.c.l.b16 %v1367
    %v1503 = vunpack.c.l.b16 %v1368
    %v1504 = vunpack.c.l.b16 %v1369
    %v1505 = vunpack.c.l.b16 %v1370
    %v1506 = vunpack.c.l.b16 %v1371
    %v1507 = vunpack.c.l.b16 %v1372
    %v1508 = vunpack.c.l.b16 %v1373
    %v1509 = vunpack.c.l.b16 %v1374
    %v1510 = vunpack.c.l.b16 %v1375
    %v1511 = vunpack.c.l.b16 %v1376
    %v1512 = vunpack.c.l.b16 %v1377
    %v1513 = vunpack.c.l.b16 %v1378
    %v1514 = vunpack.c.l.b16 %v1379
    %v1515 = vunpack.c.l.b16 %v1380
    %v1516 = vunpack.c.l.b16 %v1381
    %v1517 = vunpack.c.l.b16 %v1382
    %v1518 = vunpack.c.l.b16 %v1383
    %v1519 = vunpack.c.l.b16 %v1384
    %v1520 = vunpack.c.l.b16 %v1385
    %v1521 = vunpack.c.l.b16 %v1386
    %v1522 = vunpack.c.l.b16 %v1387
    %v1523 = vunpack.c.l.b16 %v1388
    %v1524 = vunpack.c.l.b16 %v1389
    %v1525 = vunpack.c.l.b16 %v1390
    %v1526 = vunpack.c.l.b16 %v1391
    %v1527 = vunpack.c.l.b16 %v1392
    %v1528 = vunpack.c.l.b16 %v1393
    %v1529 = vunpack.c.l.b16 %v1394
    %v1530 = vunpack.c.l.b16 %v1395
    %v1531 = vunpack.c.l.b16 %v1396
    %v1532 = vunpack.c.l.b16 %v1397
    %v1533 = vunpack.c.l.b16 %v1398
    %v1534 = vunpack.c.l.b16 %v1399
    %v1535 = vunpack.c.l.b16 %v1400
    %v1536 = vunpack.c.l.b16 %v1401
    %v1537 = vunpack.c.l.b16 %v1402
    %v1538 = vunpack.c.l.b16 %v1403
    %v1539 = vunpack.c.l.b16 %v1404
    %v1540 = vunpack.c.l.b16 %v1405
    %v1541 = vunpack.c.l.b16 %v1406
    %v1542 = vunpack.c.l.b16 %v1407
    %v1543 = vunpack.c.l.b16 %v1408
    %v1544 = vunpack.c.l.b16 %v1409
    %v1545 = vunpack.c.l.b16 %v1410
    %v1546 = vunpack.c.l.b16 %v1411
    %v1547 = vunpack.c.l.b16 %v1412
    %v1548 = vunpack.c.l.b16 %v1413
    %v1549 = vunpack.c.l.b16 %v1414
    %v1550 = vunpack.c.l.b16 %v1415
    %v1551 = vunpack.c.l.b16 %v1416
    %v1552 = vunpack.c.l.b16 %v1417
    %v1553 = vunpack.c.l.b16 %v1418
    %v1554 = vunpack.c.l.b16 %v1419
    %v1555 = vunpack.c.l.b16 %v1420
    %v1556 = vunpack.c.l.b16 %v1421
    %v1557 = vpack.c.b16 %v1494, %v1493
    %v1558 = vpack.c.b16 %v1496, %v1495
    %v1559 = vpack.c.b16 %v1498, %v1497
    %v1560 = vpack.c.b16 %v1500, %v1499
    %v1561 = vpack.c.b16 %v1502, %v1501
    %v1562 = vpack.c.b16 %v1504, %v1503
    %v1563 = vpack.c.b16 %v1506, %v1505
    %v1564 = vpack.c.b16 %v1508, %v1507
    %v1565 = vpack.c.b16 %v1510, %v1509
    %v1566 = vpack.c.b16 %v1512, %v1511
    %v1567 = vpack.c.b16 %v1514, %v1513
    %v1568 = vpack.c.b16 %v1516, %v1515
    %v1569 = vpack.c.b16 %v1518, %v1517
    %v1570 = vpack.c.b16 %v1520, %v1519
    %v1571 = vpack.c.b16 %v1522, %v1521
    %v1572 = vpack.c.b16 %v1524, %v1523
    %v1573 = vpack.c.b16 %v1526, %v1525
    %v1574 = vpack.c.b16 %v1528, %v1527
    %v1575 = vpack.c.b16 %v1530, %v1529
    %v1576 = vpack.c.b16 %v1532, %v1531
    %v1577 = vpack.c.b16 %v1534, %v1533
    %v1578 = vpack.c.b16 %v1536, %v1535
    %v1579 = vpack.c.b16 %v1538, %v1537
    %v1580 = vpack.c.b16 %v1540, %v1539
    %v1581 = vpack.c.b16 %v1542, %v1541
    %v1582 = vpack.c.b16 %v1544, %v1543
    %v1583 = vpack.c.b16 %v1546, %v1545
    %v1584 = vpack.c.b16 %v1548, %v1547
    %v1585 = vpack.c.b16 %v1550, %v1549
    %v1586 = vpack.c.b16 %v1552, %v1551
    %v1587 = vpack.c.b16 %v1554, %v1553
    %v1588 = vpack.c.b16 %v1556, %v1555
    %1621 = vmatprep.subr.bf16.mxu0 0
    %1622 = vmatpush1.bf16.msra.mxu0 %v1564
    %1623 = vmatprep.subr.bf16.mxu0 0
    %1624 = vmatpush1.bf16.msra.mxu0 %v1563
    %1625 = vmatprep.subr.bf16.mxu0 0
    %1626 = vmatpush1.bf16.msra.mxu0 %v1562
    %1627 = vmatprep.subr.bf16.mxu0 0
    %1628 = vmatpush1.bf16.msra.mxu0 %v1561
    %1629 = vmatprep.subr.bf16.mxu0 0
    %1630 = vmatpush1.bf16.msra.mxu0 %v1560
    %1631 = vmatprep.subr.bf16.mxu0 0
    %1632 = vmatpush1.bf16.msra.mxu0 %v1559
    %1633 = vmatprep.subr.bf16.mxu0 0
    %1634 = vmatpush1.bf16.msra.mxu0 %v1558
    %1635 = vmatprep.subr.bf16.mxu0 0
    %1636 = vmatpush1.bf16.msra.mxu0 %v1557
    %1637 = vmatprep.subr.bf16.mxu0 0
    %1638 = vmatpush2.bf16.msra.mxu0 %v1572
    %1639 = vmatprep.subr.bf16.mxu0 0
    %1640 = vmatpush2.bf16.msra.mxu0 %v1571
    %1641 = vmatprep.subr.bf16.mxu0 0
    %1642 = vmatpush2.bf16.msra.mxu0 %v1570
    %1643 = vmatprep.subr.bf16.mxu0 0
    %1644 = vmatpush2.bf16.msra.mxu0 %v1569
    %1645 = vmatprep.subr.bf16.mxu0 0
    %1646 = vmatpush2.bf16.msra.mxu0 %v1568
    %1647 = vmatprep.subr.bf16.mxu0 0
    %1648 = vmatpush2.bf16.msra.mxu0 %v1567
    %1649 = vmatprep.subr.bf16.mxu0 0
    %1650 = vmatpush2.bf16.msra.mxu0 %v1566
    %1651 = vmatprep.subr.bf16.mxu0 0
    %1652 = vmatpush2.bf16.msra.mxu0 %v1565
    %1653 = vmatprep.mubr.bf16.mxu0 %v1355
    %1654 = vmatmul.mubr.bf16.gmra.mxu0 %v1354
    %v1655 = vpop.f32.mrf.mxu0
    %v1656 = vadd.f32 %v1427, %v1655
    %v1657 = vpop.f32.mrf.mxu0
    %v1658 = vpop.f32.mrf.mxu0
    %v1659 = vadd.f32 %v1427, %v1658
    %v1660 = vpop.f32.mrf.mxu0
    %1661 = vdwg.mxu0
    %1662 = vmatprep.subr.bf16.mxu0 0
    %1663 = vmatpush1.bf16.msra.mxu0 %v1580
    %1664 = vmatprep.subr.bf16.mxu0 0
    %1665 = vmatpush1.bf16.msra.mxu0 %v1579
    %1666 = vmatprep.subr.bf16.mxu0 0
    %1667 = vmatpush1.bf16.msra.mxu0 %v1578
    %1668 = vmatprep.subr.bf16.mxu0 0
    %1669 = vmatpush1.bf16.msra.mxu0 %v1577
    %1670 = vmatprep.subr.bf16.mxu0 0
    %1671 = vmatpush1.bf16.msra.mxu0 %v1576
    %1672 = vmatprep.subr.bf16.mxu0 0
    %1673 = vmatpush1.bf16.msra.mxu0 %v1575
    %1674 = vmatprep.subr.bf16.mxu0 0
    %1675 = vmatpush1.bf16.msra.mxu0 %v1574
    %1676 = vmatprep.subr.bf16.mxu0 0
    %1677 = vmatpush1.bf16.msra.mxu0 %v1573
    %1678 = vmatprep.subr.bf16.mxu0 0
    %1679 = vmatpush2.bf16.msra.mxu0 %v1588
    %1680 = vmatprep.subr.bf16.mxu0 0
    %1681 = vmatpush2.bf16.msra.mxu0 %v1587
    %1682 = vmatprep.subr.bf16.mxu0 0
    %1683 = vmatpush2.bf16.msra.mxu0 %v1586
    %1684 = vmatprep.subr.bf16.mxu0 0
    %1685 = vmatpush2.bf16.msra.mxu0 %v1585
    %1686 = vmatprep.subr.bf16.mxu0 0
    %1687 = vmatpush2.bf16.msra.mxu0 %v1584
    %1688 = vmatprep.subr.bf16.mxu0 0
    %1689 = vmatpush2.bf16.msra.mxu0 %v1583
    %1690 = vmatprep.subr.bf16.mxu0 0
    %1691 = vmatpush2.bf16.msra.mxu0 %v1582
    %1692 = vmatprep.subr.bf16.mxu0 0
    %1693 = vmatpush2.bf16.msra.mxu0 %v1581
    %1694 = vmatprep.mubr.bf16.mxu0 %v1357
    %1695 = vmatmul.mubr.bf16.gmra.mxu0 %v1356
    %v1696 = vpop.f32.mrf.mxu0
    %v1697 = vadd.f32 %v1656, %v1696
    %v1698 = vpop.f32.mrf.mxu0
    %v1699 = vpop.f32.mrf.mxu0
    %v1700 = vadd.f32 %v1659, %v1699
    %v1701 = vpop.f32.mrf.mxu0
    %1702 = vdwg.mxu0
    %v1703 = vadd.f32 %v937, %v1697
    %v1704 = vadd.f32 %v938, %v1700
    %v1705 = vld [vmem:[%s21] sm:$0x3]
    %v1707 = vsel %vm751, %v1705, 0
    %v1710 = vsel %vm362, %v1704, 0
    %1712 = vmatprep.subr.mxu0 0.0
    %1713 = vmatpush1.msra.mxu0 0.0
    %1714 = vmatprep.subr.mxu0 0.0
    %1715 = vmatpush1.msra.mxu0 0.0
    %1716 = vmatprep.subr.mxu0 0.0
    %1717 = vmatpush1.msra.mxu0 0.0
    %1718 = vmatprep.subr.mxu0 0.0
    %1719 = vmatpush1.msra.mxu0 0.0
    %1720 = vmatprep.subr.mxu0 0.0
    %1721 = vmatpush1.msra.mxu0 0.0
    %1722 = vmatprep.subr.mxu0 0.0
    %1723 = vmatpush1.msra.mxu0 0.0
    %1724 = vmatprep.subr.mxu0 0.0
    %1725 = vmatpush1.msra.mxu0 0.0
    %1726 = vmatprep.subr.mxu0 0.0
    %1727 = vmatpush1.msra.mxu0 0.0
    %1728 = vmatprep.subr.mxu0 0.0
    %1729 = vmatpush1.msra.mxu0 0.0
    %1730 = vmatprep.subr.mxu0 0.0
    %1731 = vmatpush1.msra.mxu0 0.0
    %1732 = vmatprep.subr.mxu0 0.0
    %1733 = vmatpush1.msra.mxu0 0.0
    %1734 = vmatprep.subr.mxu0 0.0
    %1735 = vmatpush1.msra.mxu0 0.0
    %1736 = vmatprep.subr.mxu0 0.0
    %1737 = vmatpush1.msra.mxu0 0.0
    %1738 = vmatprep.subr.mxu0 0.0
    %1739 = vmatpush1.msra.mxu0 0.0
    %1740 = vmatprep.subr.mxu0 0.0
    %1741 = vmatpush1.msra.mxu0 %v1710
    %1742 = vmatprep.subr.mxu0 0.0
    %1743 = vmatpush1.msra.mxu0 %v1703
    %1744 = vmatprep.subr.mxu0 0.0
    %1745 = vmatpush2.msra.mxu0 0.0
    %1746 = vmatprep.subr.mxu0 0.0
    %1747 = vmatpush2.msra.mxu0 0.0
    %1748 = vmatprep.subr.mxu0 0.0
    %1749 = vmatpush2.msra.mxu0 0.0
    %1750 = vmatprep.subr.mxu0 0.0
    %1751 = vmatpush2.msra.mxu0 0.0
    %1752 = vmatprep.subr.mxu0 0.0
    %1753 = vmatpush2.msra.mxu0 0.0
    %1754 = vmatprep.subr.mxu0 0.0
    %1755 = vmatpush2.msra.mxu0 0.0
    %1756 = vmatprep.subr.mxu0 0.0
    %1757 = vmatpush2.msra.mxu0 0.0
    %1758 = vmatprep.subr.mxu0 0.0
    %1759 = vmatpush2.msra.mxu0 0.0
    %1760 = vmatprep.subr.mxu0 0.0
    %1761 = vmatpush2.msra.mxu0 0.0
    %1762 = vmatprep.subr.mxu0 0.0
    %1763 = vmatpush2.msra.mxu0 0.0
    %1764 = vmatprep.subr.mxu0 0.0
    %1765 = vmatpush2.msra.mxu0 0.0
    %1766 = vmatprep.subr.mxu0 0.0
    %1767 = vmatpush2.msra.mxu0 0.0
    %1768 = vmatprep.subr.mxu0 0.0
    %1769 = vmatpush2.msra.mxu0 0.0
    %1770 = vmatprep.subr.mxu0 0.0
    %1771 = vmatpush2.msra.mxu0 0.0
    %1772 = vmatprep.subr.mxu0 0.0
    %1773 = vmatpush2.msra.mxu0 0.0
    %1774 = vmatprep.subr.mxu0 0.0
    %1775 = vmatpush2.msra.mxu0 0.0
    %1776 = vmatprep.mubr.f32.mxu0 0.0
    %1777 = vmatmul.mubr.f32.gmra.mxu0 %v1707
    %v1778 = vpop.f32.mrf.mxu0
    %v1779 = vadd.f32 0.0, %v1778
    %v1780 = vpop.f32.mrf.mxu0
    %1781 = vdwg.mxu0
    %v1782 = vld [vmem:[%s18] sm:$0x1]
    %v1783 = vld [vmem:[%s19] sm:$0x1]
    %v1784 = vld [vmem:[#allocation7] sm:$0xf]
    %v1785 = vld [vmem:[#allocation7 + $0x4] sm:$0xf]
    %v1786 = vld [vmem:[#allocation7 + $0x8] sm:$0xf]
    %v1787 = vld [vmem:[#allocation7 + $0xc] sm:$0xf]
    %v1788 = vld [vmem:[#allocation7 + $0x10] sm:$0xf]
    %v1789 = vld [vmem:[#allocation7 + $0x14] sm:$0xf]
    %v1790 = vld [vmem:[#allocation7 + $0x18] sm:$0xf]
    %v1791 = vld [vmem:[#allocation7 + $0x1c] sm:$0xf]
    %v1792 = vld [vmem:[#allocation7 + $0x20] sm:$0xf]
    %v1793 = vld [vmem:[#allocation7 + $0x24] sm:$0xf]
    %v1794 = vld [vmem:[#allocation7 + $0x28] sm:$0xf]
    %v1795 = vld [vmem:[#allocation7 + $0x2c] sm:$0xf]
    %v1796 = vld [vmem:[#allocation7 + $0x30] sm:$0xf]
    %v1797 = vld [vmem:[#allocation7 + $0x34] sm:$0xf]
    %v1798 = vld [vmem:[#allocation7 + $0x38] sm:$0xf]
    %v1799 = vld [vmem:[#allocation7 + $0x3c] sm:$0xf]
    %v1800 = vsel %vm362, %v1779, 0.0
    %1801 = vadd.xlane.f32.xlu0 %v1800
    %v1802 = vpop.xlane.xlu0 %1801
    %v1803 = vmul.f32 %v1802, %v366
    %v1804 = vsub.f32 %v1779, %v1803
    %v1805 = vmul.f32 %v1804, %v1804
    %v1806 = vsel %vm362, %v1805, 0.0
    %1807 = vadd.xlane.f32.xlu0 %v1806
    %v1808 = vpop.xlane.xlu0 %1807
    %v1809 = vmul.f32 %v1808, %v366
    %v1810 = vadd.f32 %v1809, 1e-05
    %v1811 = vrsqrt.pop %v1810
    %v1812 = vmul.f32 %v1804, %v1811
    %v1814 = vlaneseq
    %v1815 = vshrl.u32 %v1814, 7
    %v1816 = vsub.s32 0, %v1815
    %v1817 = vrot.slane %v1782, %v1816
    %v1819 = vmul.f32 %v1812, %v1817
    %v1821 = vlaneseq
    %v1822 = vshrl.u32 %v1821, 7
    %v1823 = vsub.s32 0, %v1822
    %v1824 = vrot.slane %v1783, %v1823
    %v1826 = vadd.f32 %v1819, %v1824
    %v1827 = vpack.c.bf16 %v1826, %v1826
    %v1844 = vunpack.c.l.b16 %v1784
    %v1845 = vunpack.c.l.b16 %v1785
    %v1846 = vunpack.c.l.b16 %v1786
    %v1847 = vunpack.c.l.b16 %v1787
    %v1848 = vunpack.c.l.b16 %v1788
    %v1849 = vunpack.c.l.b16 %v1789
    %v1850 = vunpack.c.l.b16 %v1790
    %v1851 = vunpack.c.l.b16 %v1791
    %v1852 = vunpack.c.l.b16 %v1792
    %v1853 = vunpack.c.l.b16 %v1793
    %v1854 = vunpack.c.l.b16 %v1794
    %v1855 = vunpack.c.l.b16 %v1795
    %v1856 = vunpack.c.l.b16 %v1796
    %v1857 = vunpack.c.l.b16 %v1797
    %v1858 = vunpack.c.l.b16 %v1798
    %v1859 = vunpack.c.l.b16 %v1799
    %v1860 = vpack.c.b16 %v1845, %v1844
    %v1861 = vpack.c.b16 %v1847, %v1846
    %v1862 = vpack.c.b16 %v1849, %v1848
    %v1863 = vpack.c.b16 %v1851, %v1850
    %v1864 = vpack.c.b16 %v1853, %v1852
    %v1865 = vpack.c.b16 %v1855, %v1854
    %v1866 = vpack.c.b16 %v1857, %v1856
    %v1867 = vpack.c.b16 %v1859, %v1858
    %1876 = vmatprep.subr.bf16.mxu0 0
    %1877 = vmatpush1.bf16.msra.mxu0 %v1867
    %1878 = vmatprep.subr.bf16.mxu0 0
    %1879 = vmatpush1.bf16.msra.mxu0 %v1866
    %1880 = vmatprep.subr.bf16.mxu0 0
    %1881 = vmatpush1.bf16.msra.mxu0 %v1865
    %1882 = vmatprep.subr.bf16.mxu0 0
    %1883 = vmatpush1.bf16.msra.mxu0 %v1864
    %1884 = vmatprep.subr.bf16.mxu0 0
    %1885 = vmatpush1.bf16.msra.mxu0 %v1863
    %1886 = vmatprep.subr.bf16.mxu0 0
    %1887 = vmatpush1.bf16.msra.mxu0 %v1862
    %1888 = vmatprep.subr.bf16.mxu0 0
    %1889 = vmatpush1.bf16.msra.mxu0 %v1861
    %1890 = vmatprep.subr.bf16.mxu0 0
    %1891 = vmatpush1.bf16.msra.mxu0 %v1860
    %1892 = vmatprep.subr.bf16.mxu0 0
    %1893 = vmatpush2.bf16.msra.mxu0 0
    %1894 = vmatprep.subr.bf16.mxu0 0
    %1895 = vmatpush2.bf16.msra.mxu0 0
    %1896 = vmatprep.subr.bf16.mxu0 0
    %1897 = vmatpush2.bf16.msra.mxu0 0
    %1898 = vmatprep.subr.bf16.mxu0 0
    %1899 = vmatpush2.bf16.msra.mxu0 0
    %1900 = vmatprep.subr.bf16.mxu0 0
    %1901 = vmatpush2.bf16.msra.mxu0 0
    %1902 = vmatprep.subr.bf16.mxu0 0
    %1903 = vmatpush2.bf16.msra.mxu0 0
    %1904 = vmatprep.subr.bf16.mxu0 0
    %1905 = vmatpush2.bf16.msra.mxu0 0
    %1906 = vmatprep.subr.bf16.mxu0 0
    %1907 = vmatpush2.bf16.msra.mxu0 0
    %1908 = vmatprep.mubr.bf16.mxu0 0
    %1909 = vmatmul.mubr.bf16.gmra.mxu0 %v1827
    %v1910 = vpop.f32.mrf.mxu0
    %v1911 = vadd.f32 0.0, %v1910
    %v1912 = vpop.f32.mrf.mxu0
    %v1913 = vpop.f32.mrf.mxu0
    %v1914 = vpop.f32.mrf.mxu0
    %1915 = vdwg.mxu0
    %v1916 = vmul.f32 %v1911, %v1911
    %v1917 = vsel %vm362, %v1916, 0.0
    %1918 = vadd.xlane.f32.xlu0 %v1917
    %v1919 = vpop.xlane.xlu0 %1918
    %v1920 = vmax.f32 %v1919, 1e-24
    %v1921 = vrsqrt.pop %v1920
    %v1922 = vmul.f32 %v1911, %v1921
    %v1923 = vpack.c.bf16 %v1922, %v1922
    %1924 = vst [vmem:[#allocation8] sm:$0x1] %v1923
    // Predicated region
    $region106: #{_lambda_.2} parent=1 // pred_check
      _
    $region107: #{_lambda_.2} parent=1 // pred_check_branch
      %1926 = sbr.rel (0) target = $region109
    $region108: #{_lambda_.2} parent=1 // pred_region
      %s1928 = ssub.s32 16, 16
      %1929 = vsyncadd [#allocation4], %s1928
      %s1931 = sshll.u32 [#allocation8], 4
      %s1932 = int_to_ptr.vmem [resolvable:$true] %s1931
      %1934 = dma.vmem_to_hbm [thread:$0]  %s1932, 16, %s23, [#allocation4]
    $region109: #{_lambda_.2} parent=1 // pred_fallthru
      _
    // Predicated region
    $region110: #{_lambda_.2} parent=1 // pred_check
      _
    $region111: #{_lambda_.2} parent=1 // pred_check_branch
      %1936 = sbr.rel (0) target = $region113
    $region112: #{_lambda_.2} parent=1 // pred_region
      %1937 = dma.done [#allocation4], 16
    $region113: #{_lambda_.2} parent=1 // pred_fallthru
      _
    %1938 = vsyncpa [#allocation3], 1
    %1939 = vsyncpa [#allocation6], 1
    %1940 = vsyncpa [#allocation4], 1

</llo_original>
